<compile_context>
chip_gen: v6e
topology: v6e:2x2x1
jax: 0.10.0
libtpu: 0.0.40
codegen_flags: <defaults>
</compile_context>

<pallas_src>
import functools
import math

import jax
import jax.numpy as jnp
from jax import lax
from jax.experimental import pallas as pl
from jax.experimental.pallas import tpu as pltpu

NEG_SLOPE = 0.01        # F.leaky_relu default
EXACT_SOFTMAX = False   # set True for bit-closer parity with the f32 reference


def _leaky_relu(v):
    return jnp.where(v >= 0, v, NEG_SLOPE * v)


# ---------------------------------------------------------------------------
# Fully fused forward kernel: all layers for one batch slice per grid step.
# refs = 13 params per layer * (num_layers + 1), then the output ref.
# ---------------------------------------------------------------------------
def _gnn_forward_kernel(x_ref, *refs, num_layers):
    out_ref = refs[-1]
    prefs = refs[:-1]

    x = x_ref[...]                         # (bb, N, F0) float32
    bb, N, _ = x.shape
    M = bb * N                             # flattened node count of this slice

    # Masks shared by every layer (block-diagonal batching + diagonal).
    row = lax.broadcasted_iota(jnp.int32, (M, M), 0)
    col = lax.broadcasted_iota(jnp.int32, (M, M), 1)
    diag = row == col
    same_batch = (row // N) == (col // N) if bb > 1 else None

    x_flat = x.reshape(M, x.shape[-1])     # running node features, f32

    for li in range(num_layers + 1):
        (w1, b1, w2, b2, w3, b3, w4, b4, wl, bl, fwx, fwa, fb) = \
            prefs[13 * li: 13 * (li + 1)]
        F = x_flat.shape[-1]
        is_last = li == num_layers

        # ---- Wcompute: pairwise |xi - xj| -> 1x1-conv MLP (bf16 MXU, f32 acc)
        xb = x_flat.reshape(bb, N, F).astype(jnp.bfloat16)
        d = jnp.abs(xb[:, :, None, :] - xb[:, None, :, :]).reshape(bb * N * N, F)

        def _mlp(h, w, b):
            z = jnp.dot(h, w[...], preferred_element_type=jnp.float32) + b[...]
            return _leaky_relu(z).astype(jnp.bfloat16)   # carry chain in bf16

        h = _mlp(d, w1, b1)
        # TODO(synk): nn.Dropout(0.3) is identity in eval mode; training-mode
        # dropout is not implemented.
        h = _mlp(h, w2, b2)
        h = _mlp(h, w3, b3)
        h = _mlp(h, w4, b4)

        # conv2d_last: nf -> 1 (elementwise mul + lane reduce) => logits[b,i,j]
        logits = (jnp.sum(h.astype(jnp.float32) * wl[...], axis=-1, keepdims=True)
                  + bl[...]).reshape(M, N)

        # Block-diagonal masked softmax over j (f32 math; -1e8 on the diagonal
        # as in the reference; cross-batch pairs excluded entirely).
        if bb > 1:
            lg = jnp.tile(logits, (1, bb))          # (M, M): [r, c] -> logits[r, c % N]
            lg = jnp.where(diag, lg - 1e8, lg)
            lg = jnp.where(same_batch, lg, -1e30)
        else:
            lg = jnp.where(diag, logits - 1e8, logits)
        mrow = jnp.max(lg, axis=-1, keepdims=True)
        e = jnp.exp(lg - mrow)
        denom = jnp.sum(e, axis=-1, keepdims=True)
        if EXACT_SOFTMAX:
            A = e / denom
        else:
            A = e * pl.reciprocal(denom, approx=True)   # EUP slot, nearly free

        # ---- gmul + Gconv fc: y = x @ Wx + (A @ x) @ Wa + b  (no concat built)
        xbf = x_flat.astype(jnp.bfloat16)
        ax = jnp.dot(A.astype(jnp.bfloat16), xbf,
                     preferred_element_type=jnp.float32)          # (M, F)
        y = (jnp.dot(xbf, fwx[...], preferred_element_type=jnp.float32)
             + jnp.dot(ax.astype(jnp.bfloat16), fwa[...],
                       preferred_element_type=jnp.float32)
             + fb[...])

        if is_last:
            # Only HBM write of the whole forward.
            # TODO(synk): pad the last dim to 128 in HBM (strip in the wrapper)
            # for lane-dense stores once B*N grows.
            out_ref[...] = y.reshape(bb, N, y.shape[-1]).astype(out_ref.dtype)
        else:
            x_flat = jnp.concatenate([x_flat, _leaky_relu(y)], axis=-1)


# ---------------------------------------------------------------------------
# Tiling / VMEM budgeting helpers
# ---------------------------------------------------------------------------
def _vmem_budget_bytes():
    try:
        cap = int(pltpu.get_tpu_info().vmem_capacity_bytes)
    except Exception:                         # pragma: no cover - conservative fallback
        cap = 64 << 20                        # v7x per-TC VMEM
    return max(16 << 20, int(cap * 0.7))


def _workset_bytes(bb, N, f_max, nf):
    """Rough per-grid-step VMEM working set for the widest layer."""
    m_pair = bb * N * N
    m_node = bb * N
    return (m_pair * (2 * f_max + 8 * nf + 8)   # bf16 d + bf16 h chain + logits
            + m_node * m_node * 8               # block-diag logits + A (f32)
            + m_node * 8 * f_max)               # x / ax / y copies


def _pick_bb(B, N, f_max, nf):
    """Batch items per grid step: aim for M = bb*N*N ~ 512 MXU rows, stay inside
    the per-generation VMEM budget, and keep grid length >= 2 when B allows so
    both v7x TensorCores get work."""
    target_rows = 512
    budget = _vmem_budget_bytes()
    divisors = [d for d in range(1, B + 1) if B % d == 0]
    bb = 1
    for d in divisors:
        if 3 * _workset_bytes(d, N, f_max, nf) > budget:
            break
        bb = d
        if d * N * N >= target_rows:
            break
    # Megacore: prefer a grid of length >= 2 over marginal M gains.
    if B // bb < 2:
        alts = [d for d in divisors if d < bb and B // d >= 2]
        if alts:
            alt = max(alts)
            if alt * N * N >= 128 or bb * N * N < 2 * target_rows:
                bb = alt
    return bb


# ---------------------------------------------------------------------------
# Wrapper: one pallas_call for the whole GNN_nl forward
# ---------------------------------------------------------------------------
def gnn_nl_fused(x, layer_params):
    """layer_params: list of 13-tuples (one per layer, last layer included)."""
    B, N, F0 = x.shape
    num_layers = len(layer_params) - 1
    flat = [p for lp in layer_params for p in lp]
    out_dim = layer_params[-1][10].shape[1]         # fwx of the last layer
    nf = layer_params[0][0].shape[1] // 2           # w1: (F0, 2*nf)
    f_max = layer_params[-1][0].shape[0]            # widest feature dim

    bb = _pick_bb(B, N, f_max, nf)
    grid = (B // bb,)

    param_bytes = sum(int(p.size) * p.dtype.itemsize for p in flat)
    io_bytes = 2 * (bb * N * F0 * 4 + bb * N * out_dim * 4)
    est = 3 * _workset_bytes(bb, N, f_max, nf) + 2 * param_bytes + io_bytes
    vmem_limit = int(min(_vmem_budget_bytes(), max(32 << 20, est)))

    def const_spec(arr):
        nd = arr.ndim
        return pl.BlockSpec(arr.shape, lambda g, _nd=nd: (0,) * _nd)
    # TODO(synk): give the constant weight/bias inputs pipeline_mode=pl.Buffered(1)
    # (single-buffered) once the weight footprint matters; negligible at nf=16.

    return pl.pallas_call(
        functools.partial(_gnn_forward_kernel, num_layers=num_layers),
        out_shape=jax.ShapeDtypeStruct((B, N, out_dim), jnp.float32),
        grid=grid,
        in_specs=[pl.BlockSpec((bb, N, F0), lambda g: (g, 0, 0))]
        + [const_spec(p) for p in flat],
        out_specs=pl.BlockSpec((bb, N, out_dim), lambda g: (g, 0, 0)),
        compiler_params=pltpu.CompilerParams(
            dimension_semantics=("parallel",),
            vmem_limit_bytes=vmem_limit),
    )(x, *flat)


# ---------------------------------------------------------------------------
# Deterministic parameter init (PyTorch-default-style uniform fan-in bounds)
# ---------------------------------------------------------------------------
def init_linear(key, fan_in, fan_out):
    kw, kb = jax.random.split(key)
    bound = 1.0 / math.sqrt(float(fan_in))
    w = jax.random.uniform(kw, (fan_in, fan_out), jnp.float32, -bound, bound)
    b = jax.random.uniform(kb, (1, fan_out), jnp.float32, -bound, bound)
    return w, b


def init_wcompute(key, f_in, nf):
    ks = jax.random.split(key, 5)
    w1, b1 = init_linear(ks[0], f_in, 2 * nf)       # conv2d_1
    w2, b2 = init_linear(ks[1], 2 * nf, 2 * nf)     # conv2d_2
    w3, b3 = init_linear(ks[2], 2 * nf, nf)         # conv2d_3
    w4, b4 = init_linear(ks[3], nf, nf)             # conv2d_4
    kw, kb = jax.random.split(ks[4])                 # conv2d_last: nf -> 1
    bound = 1.0 / math.sqrt(float(nf))
    wl = jax.random.uniform(kw, (1, nf), jnp.float32, -bound, bound)
    bl = jax.random.uniform(kb, (1, 1), jnp.float32, -bound, bound)
    return (w1, b1, w2, b2, w3, b3, w4, b4, wl, bl)


def _prep_layer(wcomp, gconv_wb, f_in):
    """Split the Gconv fc weight for the concat-free matmul and pre-cast all
    MXU weight operands to bf16 (biases and the 1x1 'last' conv stay f32)."""
    (w1, b1, w2, b2, w3, b3, w4, b4, wl, bl) = wcomp
    fw, fb = gconv_wb
    bf = jnp.bfloat16
    fwx = fw[:f_in].astype(bf)      # acts on x
    fwa = fw[f_in:].astype(bf)      # acts on A @ x
    return (w1.astype(bf), b1, w2.astype(bf), b2, w3.astype(bf), b3,
            w4.astype(bf), b4, wl, bl, fwx, fwa, fb)


def init_gnn_params(key, input_features, output_dim, gcn_layer, nf):
    layers = []
    f = input_features
    for _ in range(gcn_layer):
        key, kw, kl = jax.random.split(key, 3)
        layers.append(_prep_layer(init_wcompute(kw, f, nf),
                                  init_linear(kl, 2 * f, nf // 2), f))
        f += nf // 2
    key, kw, kl = jax.random.split(key, 3)
    last = _prep_layer(init_wcompute(kw, f, nf),
                       init_linear(kl, 2 * f, output_dim), f)
    return layers, last


# ---------------------------------------------------------------------------
# GNN_nl forward: one pallas_call total
# ---------------------------------------------------------------------------
@jax.jit
def gnn_nl_forward(x, layers, last):
    return gnn_nl_fused(x, list(layers) + [last])


if __name__ == "__main__":
    B, N = 2, 8                 # batch, number of graph nodes
    input_features = 16
    nf = 16
    gcn_layer = 2
    output_dim = 16

    key = jax.random.PRNGKey(0)
    kx, kp = jax.random.split(key)
    x = jax.random.normal(kx, (B, N, input_features), dtype=jnp.float32)
    layers, last = init_gnn_params(kp, input_features, output_dim, gcn_layer, nf)

    out = gnn_nl_forward(x, layers, last)
    out = jax.block_until_ready(out)
    assert out.shape == (B, N, output_dim)
    assert bool(jnp.all(jnp.isfinite(out)))
    print("KERNEL_OK")
</pallas_src>

<mosaic_0001>
module attributes {stable_mosaic.version = 11 : i64} {
  func.func @_gnn_forward_kernel(%arg0: i32, %arg1: memref<1x8x16xf32, #tpu.memory_space<vmem>>, %arg2: memref<16x32xbf16, #tpu.memory_space<vmem>>, %arg3: memref<1x32xf32, #tpu.memory_space<vmem>>, %arg4: memref<32x32xbf16, #tpu.memory_space<vmem>>, %arg5: memref<1x32xf32, #tpu.memory_space<vmem>>, %arg6: memref<32x16xbf16, #tpu.memory_space<vmem>>, %arg7: memref<1x16xf32, #tpu.memory_space<vmem>>, %arg8: memref<16x16xbf16, #tpu.memory_space<vmem>>, %arg9: memref<1x16xf32, #tpu.memory_space<vmem>>, %arg10: memref<1x16xf32, #tpu.memory_space<vmem>>, %arg11: memref<1x1xf32, #tpu.memory_space<vmem>>, %arg12: memref<16x8xbf16, #tpu.memory_space<vmem>>, %arg13: memref<16x8xbf16, #tpu.memory_space<vmem>>, %arg14: memref<1x8xf32, #tpu.memory_space<vmem>>, %arg15: memref<24x32xbf16, #tpu.memory_space<vmem>>, %arg16: memref<1x32xf32, #tpu.memory_space<vmem>>, %arg17: memref<32x32xbf16, #tpu.memory_space<vmem>>, %arg18: memref<1x32xf32, #tpu.memory_space<vmem>>, %arg19: memref<32x16xbf16, #tpu.memory_space<vmem>>, %arg20: memref<1x16xf32, #tpu.memory_space<vmem>>, %arg21: memref<16x16xbf16, #tpu.memory_space<vmem>>, %arg22: memref<1x16xf32, #tpu.memory_space<vmem>>, %arg23: memref<1x16xf32, #tpu.memory_space<vmem>>, %arg24: memref<1x1xf32, #tpu.memory_space<vmem>>, %arg25: memref<24x8xbf16, #tpu.memory_space<vmem>>, %arg26: memref<24x8xbf16, #tpu.memory_space<vmem>>, %arg27: memref<1x8xf32, #tpu.memory_space<vmem>>, %arg28: memref<32x32xbf16, #tpu.memory_space<vmem>>, %arg29: memref<1x32xf32, #tpu.memory_space<vmem>>, %arg30: memref<32x32xbf16, #tpu.memory_space<vmem>>, %arg31: memref<1x32xf32, #tpu.memory_space<vmem>>, %arg32: memref<32x16xbf16, #tpu.memory_space<vmem>>, %arg33: memref<1x16xf32, #tpu.memory_space<vmem>>, %arg34: memref<16x16xbf16, #tpu.memory_space<vmem>>, %arg35: memref<1x16xf32, #tpu.memory_space<vmem>>, %arg36: memref<1x16xf32, #tpu.memory_space<vmem>>, %arg37: memref<1x1xf32, #tpu.memory_space<vmem>>, %arg38: memref<32x16xbf16, #tpu.memory_space<vmem>>, %arg39: memref<32x16xbf16, #tpu.memory_space<vmem>>, %arg40: memref<1x16xf32, #tpu.memory_space<vmem>>, %arg41: memref<1x8x16xf32, #tpu.memory_space<vmem>>) attributes {dimension_semantics = [#tpu.dimension_semantics<parallel>], iteration_bounds = array<i64: 2>, scalar_prefetch = 0 : i64, scratch_operands = 0 : i64, tpu.core_type = #tpu.core_type<tc>, window_params = [{transform_indices = @transform_0, window_bounds = array<i64: 1, 8, 16>}, {pipeline_mode = #tpu.pipeline_mode<synchronous>, transform_indices = @transform_1, window_bounds = array<i64: 16, 32>}, {pipeline_mode = #tpu.pipeline_mode<synchronous>, transform_indices = @transform_2, window_bounds = array<i64: 1, 32>}, {pipeline_mode = #tpu.pipeline_mode<synchronous>, transform_indices = @transform_3, window_bounds = array<i64: 32, 32>}, {pipeline_mode = #tpu.pipeline_mode<synchronous>, transform_indices = @transform_4, window_bounds = array<i64: 1, 32>}, {pipeline_mode = #tpu.pipeline_mode<synchronous>, transform_indices = @transform_5, window_bounds = array<i64: 32, 16>}, {pipeline_mode = #tpu.pipeline_mode<synchronous>, transform_indices = @transform_6, window_bounds = array<i64: 1, 16>}, {pipeline_mode = #tpu.pipeline_mode<synchronous>, transform_indices = @transform_7, window_bounds = array<i64: 16, 16>}, {pipeline_mode = #tpu.pipeline_mode<synchronous>, transform_indices = @transform_8, window_bounds = array<i64: 1, 16>}, {pipeline_mode = #tpu.pipeline_mode<synchronous>, transform_indices = @transform_9, window_bounds = array<i64: 1, 16>}, {pipeline_mode = #tpu.pipeline_mode<synchronous>, transform_indices = @transform_10, window_bounds = array<i64: 1, 1>}, {pipeline_mode = #tpu.pipeline_mode<synchronous>, transform_indices = @transform_11, window_bounds = array<i64: 16, 8>}, {pipeline_mode = #tpu.pipeline_mode<synchronous>, transform_indices = @transform_12, window_bounds = array<i64: 16, 8>}, {pipeline_mode = #tpu.pipeline_mode<synchronous>, transform_indices = @transform_13, window_bounds = array<i64: 1, 8>}, {pipeline_mode = #tpu.pipeline_mode<synchronous>, transform_indices = @transform_14, window_bounds = array<i64: 24, 32>}, {pipeline_mode = #tpu.pipeline_mode<synchronous>, transform_indices = @transform_15, window_bounds = array<i64: 1, 32>}, {pipeline_mode = #tpu.pipeline_mode<synchronous>, transform_indices = @transform_16, window_bounds = array<i64: 32, 32>}, {pipeline_mode = #tpu.pipeline_mode<synchronous>, transform_indices = @transform_17, window_bounds = array<i64: 1, 32>}, {pipeline_mode = #tpu.pipeline_mode<synchronous>, transform_indices = @transform_18, window_bounds = array<i64: 32, 16>}, {pipeline_mode = #tpu.pipeline_mode<synchronous>, transform_indices = @transform_19, window_bounds = array<i64: 1, 16>}, {pipeline_mode = #tpu.pipeline_mode<synchronous>, transform_indices = @transform_20, window_bounds = array<i64: 16, 16>}, {pipeline_mode = #tpu.pipeline_mode<synchronous>, transform_indices = @transform_21, window_bounds = array<i64: 1, 16>}, {pipeline_mode = #tpu.pipeline_mode<synchronous>, transform_indices = @transform_22, window_bounds = array<i64: 1, 16>}, {pipeline_mode = #tpu.pipeline_mode<synchronous>, transform_indices = @transform_23, window_bounds = array<i64: 1, 1>}, {pipeline_mode = #tpu.pipeline_mode<synchronous>, transform_indices = @transform_24, window_bounds = array<i64: 24, 8>}, {pipeline_mode = #tpu.pipeline_mode<synchronous>, transform_indices = @transform_25, window_bounds = array<i64: 24, 8>}, {pipeline_mode = #tpu.pipeline_mode<synchronous>, transform_indices = @transform_26, window_bounds = array<i64: 1, 8>}, {pipeline_mode = #tpu.pipeline_mode<synchronous>, transform_indices = @transform_27, window_bounds = array<i64: 32, 32>}, {pipeline_mode = #tpu.pipeline_mode<synchronous>, transform_indices = @transform_28, window_bounds = array<i64: 1, 32>}, {pipeline_mode = #tpu.pipeline_mode<synchronous>, transform_indices = @transform_29, window_bounds = array<i64: 32, 32>}, {pipeline_mode = #tpu.pipeline_mode<synchronous>, transform_indices = @transform_30, window_bounds = array<i64: 1, 32>}, {pipeline_mode = #tpu.pipeline_mode<synchronous>, transform_indices = @transform_31, window_bounds = array<i64: 32, 16>}, {pipeline_mode = #tpu.pipeline_mode<synchronous>, transform_indices = @transform_32, window_bounds = array<i64: 1, 16>}, {pipeline_mode = #tpu.pipeline_mode<synchronous>, transform_indices = @transform_33, window_bounds = array<i64: 16, 16>}, {pipeline_mode = #tpu.pipeline_mode<synchronous>, transform_indices = @transform_34, window_bounds = array<i64: 1, 16>}, {pipeline_mode = #tpu.pipeline_mode<synchronous>, transform_indices = @transform_35, window_bounds = array<i64: 1, 16>}, {pipeline_mode = #tpu.pipeline_mode<synchronous>, transform_indices = @transform_36, window_bounds = array<i64: 1, 1>}, {pipeline_mode = #tpu.pipeline_mode<synchronous>, transform_indices = @transform_37, window_bounds = array<i64: 32, 16>}, {pipeline_mode = #tpu.pipeline_mode<synchronous>, transform_indices = @transform_38, window_bounds = array<i64: 32, 16>}, {pipeline_mode = #tpu.pipeline_mode<synchronous>, transform_indices = @transform_39, window_bounds = array<i64: 1, 16>}, {transform_indices = @transform_40, window_bounds = array<i64: 1, 8, 16>}]} {
    %c0 = arith.constant 0 : index
    %c0_0 = arith.constant 0 : index
    %c0_1 = arith.constant 0 : index
    %0 = vector.load %arg1[%c0, %c0_0, %c0_1] : memref<1x8x16xf32, #tpu.memory_space<vmem>>, vector<1x8x16xf32>
    %1 = tpu.iota {dimensions = array<i32: 0>} : vector<8x8xi32>
    %2 = tpu.iota {dimensions = array<i32: 1>} : vector<8x8xi32>
    %3 = arith.cmpi eq, %1, %2 : vector<8x8xi32>
    %4 = vector.shape_cast %0 : vector<1x8x16xf32> to vector<8x16xf32>
    %5 = vector.shape_cast %4 : vector<8x16xf32> to vector<1x8x16xf32>
    %6 = arith.truncf %5 : vector<1x8x16xf32> to vector<1x8x16xbf16>
    %7 = vector.shape_cast %6 : vector<1x8x16xbf16> to vector<1x8x1x16xbf16>
    %8 = vector.shape_cast %6 : vector<1x8x16xbf16> to vector<1x1x8x16xbf16>
    %9 = vector.broadcast %7 : vector<1x8x1x16xbf16> to vector<1x8x8x16xbf16>
    %10 = vector.broadcast %8 : vector<1x1x8x16xbf16> to vector<1x8x8x16xbf16>
    %11 = arith.subf %9, %10 : vector<1x8x8x16xbf16>
    %12 = math.absf %11 : vector<1x8x8x16xbf16>
    %13 = vector.shape_cast %12 : vector<1x8x8x16xbf16> to vector<64x16xbf16>
    %c0_2 = arith.constant 0 : index
    %c0_3 = arith.constant 0 : index
    %14 = vector.load %arg2[%c0_2, %c0_3] : memref<16x32xbf16, #tpu.memory_space<vmem>>, vector<16x32xbf16>
    %cst = arith.constant dense<0.000000e+00> : vector<64x32xf32>
    %15 = tpu.matmul %13, %14, %cst {dimension_numbers = #tpu.dot_dimension_numbers<[1], [0], [0], [1], [0, 0, 1, 1], [], []>} : vector<64x16xbf16>, vector<16x32xbf16>, vector<64x32xf32> -> vector<64x32xf32>
    %c0_4 = arith.constant 0 : index
    %c0_5 = arith.constant 0 : index
    %16 = vector.load %arg3[%c0_4, %c0_5] : memref<1x32xf32, #tpu.memory_space<vmem>>, vector<1x32xf32>
    %17 = vector.broadcast %16 : vector<1x32xf32> to vector<64x32xf32>
    %18 = arith.addf %15, %17 : vector<64x32xf32>
    %cst_6 = arith.constant 0.000000e+00 : f32
    %19 = vector.broadcast %cst_6 : f32 to vector<64x32xf32>
    %20 = arith.cmpf oge, %18, %19 : vector<64x32xf32>
    %cst_7 = arith.constant 0.00999999977 : f32
    %21 = vector.broadcast %cst_7 : f32 to vector<64x32xf32>
    %22 = arith.mulf %21, %18 : vector<64x32xf32>
    %23 = arith.select %20, %18, %22 : vector<64x32xi1>, vector<64x32xf32>
    %24 = arith.truncf %23 : vector<64x32xf32> to vector<64x32xbf16>
    %c0_8 = arith.constant 0 : index
    %c0_9 = arith.constant 0 : index
    %25 = vector.load %arg4[%c0_8, %c0_9] : memref<32x32xbf16, #tpu.memory_space<vmem>>, vector<32x32xbf16>
    %cst_10 = arith.constant dense<0.000000e+00> : vector<64x32xf32>
    %26 = tpu.matmul %24, %25, %cst_10 {dimension_numbers = #tpu.dot_dimension_numbers<[1], [0], [0], [1], [0, 0, 1, 1], [], []>} : vector<64x32xbf16>, vector<32x32xbf16>, vector<64x32xf32> -> vector<64x32xf32>
    %c0_11 = arith.constant 0 : index
    %c0_12 = arith.constant 0 : index
    %27 = vector.load %arg5[%c0_11, %c0_12] : memref<1x32xf32, #tpu.memory_space<vmem>>, vector<1x32xf32>
    %28 = vector.broadcast %27 : vector<1x32xf32> to vector<64x32xf32>
    %29 = arith.addf %26, %28 : vector<64x32xf32>
    %cst_13 = arith.constant 0.000000e+00 : f32
    %30 = vector.broadcast %cst_13 : f32 to vector<64x32xf32>
    %31 = arith.cmpf oge, %29, %30 : vector<64x32xf32>
    %cst_14 = arith.constant 0.00999999977 : f32
    %32 = vector.broadcast %cst_14 : f32 to vector<64x32xf32>
    %33 = arith.mulf %32, %29 : vector<64x32xf32>
    %34 = arith.select %31, %29, %33 : vector<64x32xi1>, vector<64x32xf32>
    %35 = arith.truncf %34 : vector<64x32xf32> to vector<64x32xbf16>
    %c0_15 = arith.constant 0 : index
    %c0_16 = arith.constant 0 : index
    %36 = vector.load %arg6[%c0_15, %c0_16] : memref<32x16xbf16, #tpu.memory_space<vmem>>, vector<32x16xbf16>
    %cst_17 = arith.constant dense<0.000000e+00> : vector<64x16xf32>
    %37 = tpu.matmul %35, %36, %cst_17 {dimension_numbers = #tpu.dot_dimension_numbers<[1], [0], [0], [1], [0, 0, 1, 1], [], []>} : vector<64x32xbf16>, vector<32x16xbf16>, vector<64x16xf32> -> vector<64x16xf32>
    %c0_18 = arith.constant 0 : index
    %c0_19 = arith.constant 0 : index
    %38 = vector.load %arg7[%c0_18, %c0_19] : memref<1x16xf32, #tpu.memory_space<vmem>>, vector<1x16xf32>
    %39 = vector.broadcast %38 : vector<1x16xf32> to vector<64x16xf32>
    %40 = arith.addf %37, %39 : vector<64x16xf32>
    %cst_20 = arith.constant 0.000000e+00 : f32
    %41 = vector.broadcast %cst_20 : f32 to vector<64x16xf32>
    %42 = arith.cmpf oge, %40, %41 : vector<64x16xf32>
    %cst_21 = arith.constant 0.00999999977 : f32
    %43 = vector.broadcast %cst_21 : f32 to vector<64x16xf32>
    %44 = arith.mulf %43, %40 : vector<64x16xf32>
    %45 = arith.select %42, %40, %44 : vector<64x16xi1>, vector<64x16xf32>
    %46 = arith.truncf %45 : vector<64x16xf32> to vector<64x16xbf16>
    %c0_22 = arith.constant 0 : index
    %c0_23 = arith.constant 0 : index
    %47 = vector.load %arg8[%c0_22, %c0_23] : memref<16x16xbf16, #tpu.memory_space<vmem>>, vector<16x16xbf16>
    %cst_24 = arith.constant dense<0.000000e+00> : vector<64x16xf32>
    %48 = tpu.matmul %46, %47, %cst_24 {dimension_numbers = #tpu.dot_dimension_numbers<[1], [0], [0], [1], [0, 0, 1, 1], [], []>} : vector<64x16xbf16>, vector<16x16xbf16>, vector<64x16xf32> -> vector<64x16xf32>
    %c0_25 = arith.constant 0 : index
    %c0_26 = arith.constant 0 : index
    %49 = vector.load %arg9[%c0_25, %c0_26] : memref<1x16xf32, #tpu.memory_space<vmem>>, vector<1x16xf32>
    %50 = vector.broadcast %49 : vector<1x16xf32> to vector<64x16xf32>
    %51 = arith.addf %48, %50 : vector<64x16xf32>
    %cst_27 = arith.constant 0.000000e+00 : f32
    %52 = vector.broadcast %cst_27 : f32 to vector<64x16xf32>
    %53 = arith.cmpf oge, %51, %52 : vector<64x16xf32>
    %cst_28 = arith.constant 0.00999999977 : f32
    %54 = vector.broadcast %cst_28 : f32 to vector<64x16xf32>
    %55 = arith.mulf %54, %51 : vector<64x16xf32>
    %56 = arith.select %53, %51, %55 : vector<64x16xi1>, vector<64x16xf32>
    %57 = arith.truncf %56 : vector<64x16xf32> to vector<64x16xbf16>
    %58 = arith.extf %57 : vector<64x16xbf16> to vector<64x16xf32>
    %c0_29 = arith.constant 0 : index
    %c0_30 = arith.constant 0 : index
    %59 = vector.load %arg10[%c0_29, %c0_30] : memref<1x16xf32, #tpu.memory_space<vmem>>, vector<1x16xf32>
    %60 = vector.broadcast %59 : vector<1x16xf32> to vector<64x16xf32>
    %61 = arith.mulf %58, %60 : vector<64x16xf32>
    %cst_31 = arith.constant dense<0.000000e+00> : vector<64xf32>
    %62 = vector.multi_reduction <add>, %61, %cst_31 [1] : vector<64x16xf32> to vector<64xf32>
    %63 = vector.shape_cast %62 : vector<64xf32> to vector<64x1xf32>
    %c0_32 = arith.constant 0 : index
    %c0_33 = arith.constant 0 : index
    %64 = vector.load %arg11[%c0_32, %c0_33] : memref<1x1xf32, #tpu.memory_space<vmem>>, vector<1x1xf32>
    %65 = vector.broadcast %64 : vector<1x1xf32> to vector<64x1xf32>
    %66 = arith.addf %63, %65 : vector<64x1xf32>
    %67 = vector.shape_cast %66 : vector<64x1xf32> to vector<8x8xf32>
    %cst_34 = arith.constant 1.000000e+08 : f32
    %68 = vector.broadcast %cst_34 : f32 to vector<8x8xf32>
    %69 = arith.subf %67, %68 : vector<8x8xf32>
    %70 = arith.select %3, %69, %67 : vector<8x8xi1>, vector<8x8xf32>
    %cst_35 = arith.constant dense<0xFF800000> : vector<8xf32>
    %71 = vector.multi_reduction <maximumf>, %70, %cst_35 [1] : vector<8x8xf32> to vector<8xf32>
    %72 = vector.shape_cast %71 : vector<8xf32> to vector<8x1xf32>
    %73 = vector.broadcast %72 : vector<8x1xf32> to vector<8x8xf32>
    %74 = arith.subf %70, %73 : vector<8x8xf32>
    %75 = math.exp %74 : vector<8x8xf32>
    %cst_36 = arith.constant dense<0.000000e+00> : vector<8xf32>
    %76 = vector.multi_reduction <add>, %75, %cst_36 [1] : vector<8x8xf32> to vector<8xf32>
    %77 = vector.shape_cast %76 : vector<8xf32> to vector<8x1xf32>
    %78 = tpu.reciprocal %77 {approx = true} : vector<8x1xf32> -> vector<8x1xf32>
    %79 = vector.broadcast %78 : vector<8x1xf32> to vector<8x8xf32>
    %80 = arith.mulf %75, %79 : vector<8x8xf32>
    %81 = arith.truncf %4 : vector<8x16xf32> to vector<8x16xbf16>
    %82 = arith.truncf %80 : vector<8x8xf32> to vector<8x8xbf16>
    %cst_37 = arith.constant dense<0.000000e+00> : vector<8x16xf32>
    %83 = tpu.matmul %82, %81, %cst_37 {dimension_numbers = #tpu.dot_dimension_numbers<[1], [0], [0], [1], [0, 0, 1, 1], [], []>} : vector<8x8xbf16>, vector<8x16xbf16>, vector<8x16xf32> -> vector<8x16xf32>
    %c0_38 = arith.constant 0 : index
    %c0_39 = arith.constant 0 : index
    %84 = vector.load %arg12[%c0_38, %c0_39] : memref<16x8xbf16, #tpu.memory_space<vmem>>, vector<16x8xbf16>
    %cst_40 = arith.constant dense<0.000000e+00> : vector<8x8xf32>
    %85 = tpu.matmul %81, %84, %cst_40 {dimension_numbers = #tpu.dot_dimension_numbers<[1], [0], [0], [1], [0, 0, 1, 1], [], []>} : vector<8x16xbf16>, vector<16x8xbf16>, vector<8x8xf32> -> vector<8x8xf32>
    %86 = arith.truncf %83 : vector<8x16xf32> to vector<8x16xbf16>
    %c0_41 = arith.constant 0 : index
    %c0_42 = arith.constant 0 : index
    %87 = vector.load %arg13[%c0_41, %c0_42] : memref<16x8xbf16, #tpu.memory_space<vmem>>, vector<16x8xbf16>
    %cst_43 = arith.constant dense<0.000000e+00> : vector<8x8xf32>
    %88 = tpu.matmul %86, %87, %cst_43 {dimension_numbers = #tpu.dot_dimension_numbers<[1], [0], [0], [1], [0, 0, 1, 1], [], []>} : vector<8x16xbf16>, vector<16x8xbf16>, vector<8x8xf32> -> vector<8x8xf32>
    %89 = arith.addf %85, %88 : vector<8x8xf32>
    %c0_44 = arith.constant 0 : index
    %c0_45 = arith.constant 0 : index
    %90 = vector.load %arg14[%c0_44, %c0_45] : memref<1x8xf32, #tpu.memory_space<vmem>>, vector<1x8xf32>
    %91 = vector.broadcast %90 : vector<1x8xf32> to vector<8x8xf32>
    %92 = arith.addf %89, %91 : vector<8x8xf32>
    %cst_46 = arith.constant 0.000000e+00 : f32
    %93 = vector.broadcast %cst_46 : f32 to vector<8x8xf32>
    %94 = arith.cmpf oge, %92, %93 : vector<8x8xf32>
    %cst_47 = arith.constant 0.00999999977 : f32
    %95 = vector.broadcast %cst_47 : f32 to vector<8x8xf32>
    %96 = arith.mulf %95, %92 : vector<8x8xf32>
    %97 = arith.select %94, %92, %96 : vector<8x8xi1>, vector<8x8xf32>
    %98 = tpu.concatenate %4, %97 in 1 : vector<8x16xf32>, vector<8x8xf32> -> vector<8x24xf32>
    %99 = vector.shape_cast %98 : vector<8x24xf32> to vector<1x8x24xf32>
    %100 = arith.truncf %99 : vector<1x8x24xf32> to vector<1x8x24xbf16>
    %101 = vector.shape_cast %100 : vector<1x8x24xbf16> to vector<1x8x1x24xbf16>
    %102 = vector.shape_cast %100 : vector<1x8x24xbf16> to vector<1x1x8x24xbf16>
    %103 = vector.broadcast %101 : vector<1x8x1x24xbf16> to vector<1x8x8x24xbf16>
    %104 = vector.broadcast %102 : vector<1x1x8x24xbf16> to vector<1x8x8x24xbf16>
    %105 = arith.subf %103, %104 : vector<1x8x8x24xbf16>
    %106 = math.absf %105 : vector<1x8x8x24xbf16>
    %107 = vector.shape_cast %106 : vector<1x8x8x24xbf16> to vector<64x24xbf16>
    %c0_48 = arith.constant 0 : index
    %c0_49 = arith.constant 0 : index
    %108 = vector.load %arg15[%c0_48, %c0_49] : memref<24x32xbf16, #tpu.memory_space<vmem>>, vector<24x32xbf16>
    %cst_50 = arith.constant dense<0.000000e+00> : vector<64x32xf32>
    %109 = tpu.matmul %107, %108, %cst_50 {dimension_numbers = #tpu.dot_dimension_numbers<[1], [0], [0], [1], [0, 0, 1, 1], [], []>} : vector<64x24xbf16>, vector<24x32xbf16>, vector<64x32xf32> -> vector<64x32xf32>
    %c0_51 = arith.constant 0 : index
    %c0_52 = arith.constant 0 : index
    %110 = vector.load %arg16[%c0_51, %c0_52] : memref<1x32xf32, #tpu.memory_space<vmem>>, vector<1x32xf32>
    %111 = vector.broadcast %110 : vector<1x32xf32> to vector<64x32xf32>
    %112 = arith.addf %109, %111 : vector<64x32xf32>
    %cst_53 = arith.constant 0.000000e+00 : f32
    %113 = vector.broadcast %cst_53 : f32 to vector<64x32xf32>
    %114 = arith.cmpf oge, %112, %113 : vector<64x32xf32>
    %cst_54 = arith.constant 0.00999999977 : f32
    %115 = vector.broadcast %cst_54 : f32 to vector<64x32xf32>
    %116 = arith.mulf %115, %112 : vector<64x32xf32>
    %117 = arith.select %114, %112, %116 : vector<64x32xi1>, vector<64x32xf32>
    %118 = arith.truncf %117 : vector<64x32xf32> to vector<64x32xbf16>
    %c0_55 = arith.constant 0 : index
    %c0_56 = arith.constant 0 : index
    %119 = vector.load %arg17[%c0_55, %c0_56] : memref<32x32xbf16, #tpu.memory_space<vmem>>, vector<32x32xbf16>
    %cst_57 = arith.constant dense<0.000000e+00> : vector<64x32xf32>
    %120 = tpu.matmul %118, %119, %cst_57 {dimension_numbers = #tpu.dot_dimension_numbers<[1], [0], [0], [1], [0, 0, 1, 1], [], []>} : vector<64x32xbf16>, vector<32x32xbf16>, vector<64x32xf32> -> vector<64x32xf32>
    %c0_58 = arith.constant 0 : index
    %c0_59 = arith.constant 0 : index
    %121 = vector.load %arg18[%c0_58, %c0_59] : memref<1x32xf32, #tpu.memory_space<vmem>>, vector<1x32xf32>
    %122 = vector.broadcast %121 : vector<1x32xf32> to vector<64x32xf32>
    %123 = arith.addf %120, %122 : vector<64x32xf32>
    %cst_60 = arith.constant 0.000000e+00 : f32
    %124 = vector.broadcast %cst_60 : f32 to vector<64x32xf32>
    %125 = arith.cmpf oge, %123, %124 : vector<64x32xf32>
    %cst_61 = arith.constant 0.00999999977 : f32
    %126 = vector.broadcast %cst_61 : f32 to vector<64x32xf32>
    %127 = arith.mulf %126, %123 : vector<64x32xf32>
    %128 = arith.select %125, %123, %127 : vector<64x32xi1>, vector<64x32xf32>
    %129 = arith.truncf %128 : vector<64x32xf32> to vector<64x32xbf16>
    %c0_62 = arith.constant 0 : index
    %c0_63 = arith.constant 0 : index
    %130 = vector.load %arg19[%c0_62, %c0_63] : memref<32x16xbf16, #tpu.memory_space<vmem>>, vector<32x16xbf16>
    %cst_64 = arith.constant dense<0.000000e+00> : vector<64x16xf32>
    %131 = tpu.matmul %129, %130, %cst_64 {dimension_numbers = #tpu.dot_dimension_numbers<[1], [0], [0], [1], [0, 0, 1, 1], [], []>} : vector<64x32xbf16>, vector<32x16xbf16>, vector<64x16xf32> -> vector<64x16xf32>
    %c0_65 = arith.constant 0 : index
    %c0_66 = arith.constant 0 : index
    %132 = vector.load %arg20[%c0_65, %c0_66] : memref<1x16xf32, #tpu.memory_space<vmem>>, vector<1x16xf32>
    %133 = vector.broadcast %132 : vector<1x16xf32> to vector<64x16xf32>
    %134 = arith.addf %131, %133 : vector<64x16xf32>
    %cst_67 = arith.constant 0.000000e+00 : f32
    %135 = vector.broadcast %cst_67 : f32 to vector<64x16xf32>
    %136 = arith.cmpf oge, %134, %135 : vector<64x16xf32>
    %cst_68 = arith.constant 0.00999999977 : f32
    %137 = vector.broadcast %cst_68 : f32 to vector<64x16xf32>
    %138 = arith.mulf %137, %134 : vector<64x16xf32>
    %139 = arith.select %136, %134, %138 : vector<64x16xi1>, vector<64x16xf32>
    %140 = arith.truncf %139 : vector<64x16xf32> to vector<64x16xbf16>
    %c0_69 = arith.constant 0 : index
    %c0_70 = arith.constant 0 : index
    %141 = vector.load %arg21[%c0_69, %c0_70] : memref<16x16xbf16, #tpu.memory_space<vmem>>, vector<16x16xbf16>
    %cst_71 = arith.constant dense<0.000000e+00> : vector<64x16xf32>
    %142 = tpu.matmul %140, %141, %cst_71 {dimension_numbers = #tpu.dot_dimension_numbers<[1], [0], [0], [1], [0, 0, 1, 1], [], []>} : vector<64x16xbf16>, vector<16x16xbf16>, vector<64x16xf32> -> vector<64x16xf32>
    %c0_72 = arith.constant 0 : index
    %c0_73 = arith.constant 0 : index
    %143 = vector.load %arg22[%c0_72, %c0_73] : memref<1x16xf32, #tpu.memory_space<vmem>>, vector<1x16xf32>
    %144 = vector.broadcast %143 : vector<1x16xf32> to vector<64x16xf32>
    %145 = arith.addf %142, %144 : vector<64x16xf32>
    %cst_74 = arith.constant 0.000000e+00 : f32
    %146 = vector.broadcast %cst_74 : f32 to vector<64x16xf32>
    %147 = arith.cmpf oge, %145, %146 : vector<64x16xf32>
    %cst_75 = arith.constant 0.00999999977 : f32
    %148 = vector.broadcast %cst_75 : f32 to vector<64x16xf32>
    %149 = arith.mulf %148, %145 : vector<64x16xf32>
    %150 = arith.select %147, %145, %149 : vector<64x16xi1>, vector<64x16xf32>
    %151 = arith.truncf %150 : vector<64x16xf32> to vector<64x16xbf16>
    %152 = arith.extf %151 : vector<64x16xbf16> to vector<64x16xf32>
    %c0_76 = arith.constant 0 : index
    %c0_77 = arith.constant 0 : index
    %153 = vector.load %arg23[%c0_76, %c0_77] : memref<1x16xf32, #tpu.memory_space<vmem>>, vector<1x16xf32>
    %154 = vector.broadcast %153 : vector<1x16xf32> to vector<64x16xf32>
    %155 = arith.mulf %152, %154 : vector<64x16xf32>
    %cst_78 = arith.constant dense<0.000000e+00> : vector<64xf32>
    %156 = vector.multi_reduction <add>, %155, %cst_78 [1] : vector<64x16xf32> to vector<64xf32>
    %157 = vector.shape_cast %156 : vector<64xf32> to vector<64x1xf32>
    %c0_79 = arith.constant 0 : index
    %c0_80 = arith.constant 0 : index
    %158 = vector.load %arg24[%c0_79, %c0_80] : memref<1x1xf32, #tpu.memory_space<vmem>>, vector<1x1xf32>
    %159 = vector.broadcast %158 : vector<1x1xf32> to vector<64x1xf32>
    %160 = arith.addf %157, %159 : vector<64x1xf32>
    %161 = vector.shape_cast %160 : vector<64x1xf32> to vector<8x8xf32>
    %cst_81 = arith.constant 1.000000e+08 : f32
    %162 = vector.broadcast %cst_81 : f32 to vector<8x8xf32>
    %163 = arith.subf %161, %162 : vector<8x8xf32>
    %164 = arith.select %3, %163, %161 : vector<8x8xi1>, vector<8x8xf32>
    %cst_82 = arith.constant dense<0xFF800000> : vector<8xf32>
    %165 = vector.multi_reduction <maximumf>, %164, %cst_82 [1] : vector<8x8xf32> to vector<8xf32>
    %166 = vector.shape_cast %165 : vector<8xf32> to vector<8x1xf32>
    %167 = vector.broadcast %166 : vector<8x1xf32> to vector<8x8xf32>
    %168 = arith.subf %164, %167 : vector<8x8xf32>
    %169 = math.exp %168 : vector<8x8xf32>
    %cst_83 = arith.constant dense<0.000000e+00> : vector<8xf32>
    %170 = vector.multi_reduction <add>, %169, %cst_83 [1] : vector<8x8xf32> to vector<8xf32>
    %171 = vector.shape_cast %170 : vector<8xf32> to vector<8x1xf32>
    %172 = tpu.reciprocal %171 {approx = true} : vector<8x1xf32> -> vector<8x1xf32>
    %173 = vector.broadcast %172 : vector<8x1xf32> to vector<8x8xf32>
    %174 = arith.mulf %169, %173 : vector<8x8xf32>
    %175 = arith.truncf %98 : vector<8x24xf32> to vector<8x24xbf16>
    %176 = arith.truncf %174 : vector<8x8xf32> to vector<8x8xbf16>
    %cst_84 = arith.constant dense<0.000000e+00> : vector<8x24xf32>
    %177 = tpu.matmul %176, %175, %cst_84 {dimension_numbers = #tpu.dot_dimension_numbers<[1], [0], [0], [1], [0, 0, 1, 1], [], []>} : vector<8x8xbf16>, vector<8x24xbf16>, vector<8x24xf32> -> vector<8x24xf32>
    %c0_85 = arith.constant 0 : index
    %c0_86 = arith.constant 0 : index
    %178 = vector.load %arg25[%c0_85, %c0_86] : memref<24x8xbf16, #tpu.memory_space<vmem>>, vector<24x8xbf16>
    %cst_87 = arith.constant dense<0.000000e+00> : vector<8x8xf32>
    %179 = tpu.matmul %175, %178, %cst_87 {dimension_numbers = #tpu.dot_dimension_numbers<[1], [0], [0], [1], [0, 0, 1, 1], [], []>} : vector<8x24xbf16>, vector<24x8xbf16>, vector<8x8xf32> -> vector<8x8xf32>
    %180 = arith.truncf %177 : vector<8x24xf32> to vector<8x24xbf16>
    %c0_88 = arith.constant 0 : index
    %c0_89 = arith.constant 0 : index
    %181 = vector.load %arg26[%c0_88, %c0_89] : memref<24x8xbf16, #tpu.memory_space<vmem>>, vector<24x8xbf16>
    %cst_90 = arith.constant dense<0.000000e+00> : vector<8x8xf32>
    %182 = tpu.matmul %180, %181, %cst_90 {dimension_numbers = #tpu.dot_dimension_numbers<[1], [0], [0], [1], [0, 0, 1, 1], [], []>} : vector<8x24xbf16>, vector<24x8xbf16>, vector<8x8xf32> -> vector<8x8xf32>
    %183 = arith.addf %179, %182 : vector<8x8xf32>
    %c0_91 = arith.constant 0 : index
    %c0_92 = arith.constant 0 : index
    %184 = vector.load %arg27[%c0_91, %c0_92] : memref<1x8xf32, #tpu.memory_space<vmem>>, vector<1x8xf32>
    %185 = vector.broadcast %184 : vector<1x8xf32> to vector<8x8xf32>
    %186 = arith.addf %183, %185 : vector<8x8xf32>
    %cst_93 = arith.constant 0.000000e+00 : f32
    %187 = vector.broadcast %cst_93 : f32 to vector<8x8xf32>
    %188 = arith.cmpf oge, %186, %187 : vector<8x8xf32>
    %cst_94 = arith.constant 0.00999999977 : f32
    %189 = vector.broadcast %cst_94 : f32 to vector<8x8xf32>
    %190 = arith.mulf %189, %186 : vector<8x8xf32>
    %191 = arith.select %188, %186, %190 : vector<8x8xi1>, vector<8x8xf32>
    %192 = tpu.concatenate %98, %191 in 1 : vector<8x24xf32>, vector<8x8xf32> -> vector<8x32xf32>
    %193 = vector.shape_cast %192 : vector<8x32xf32> to vector<1x8x32xf32>
    %194 = arith.truncf %193 : vector<1x8x32xf32> to vector<1x8x32xbf16>
    %195 = vector.shape_cast %194 : vector<1x8x32xbf16> to vector<1x8x1x32xbf16>
    %196 = vector.shape_cast %194 : vector<1x8x32xbf16> to vector<1x1x8x32xbf16>
    %197 = vector.broadcast %195 : vector<1x8x1x32xbf16> to vector<1x8x8x32xbf16>
    %198 = vector.broadcast %196 : vector<1x1x8x32xbf16> to vector<1x8x8x32xbf16>
    %199 = arith.subf %197, %198 : vector<1x8x8x32xbf16>
    %200 = math.absf %199 : vector<1x8x8x32xbf16>
    %201 = vector.shape_cast %200 : vector<1x8x8x32xbf16> to vector<64x32xbf16>
    %c0_95 = arith.constant 0 : index
    %c0_96 = arith.constant 0 : index
    %202 = vector.load %arg28[%c0_95, %c0_96] : memref<32x32xbf16, #tpu.memory_space<vmem>>, vector<32x32xbf16>
    %cst_97 = arith.constant dense<0.000000e+00> : vector<64x32xf32>
    %203 = tpu.matmul %201, %202, %cst_97 {dimension_numbers = #tpu.dot_dimension_numbers<[1], [0], [0], [1], [0, 0, 1, 1], [], []>} : vector<64x32xbf16>, vector<32x32xbf16>, vector<64x32xf32> -> vector<64x32xf32>
    %c0_98 = arith.constant 0 : index
    %c0_99 = arith.constant 0 : index
    %204 = vector.load %arg29[%c0_98, %c0_99] : memref<1x32xf32, #tpu.memory_space<vmem>>, vector<1x32xf32>
    %205 = vector.broadcast %204 : vector<1x32xf32> to vector<64x32xf32>
    %206 = arith.addf %203, %205 : vector<64x32xf32>
    %cst_100 = arith.constant 0.000000e+00 : f32
    %207 = vector.broadcast %cst_100 : f32 to vector<64x32xf32>
    %208 = arith.cmpf oge, %206, %207 : vector<64x32xf32>
    %cst_101 = arith.constant 0.00999999977 : f32
    %209 = vector.broadcast %cst_101 : f32 to vector<64x32xf32>
    %210 = arith.mulf %209, %206 : vector<64x32xf32>
    %211 = arith.select %208, %206, %210 : vector<64x32xi1>, vector<64x32xf32>
    %212 = arith.truncf %211 : vector<64x32xf32> to vector<64x32xbf16>
    %c0_102 = arith.constant 0 : index
    %c0_103 = arith.constant 0 : index
    %213 = vector.load %arg30[%c0_102, %c0_103] : memref<32x32xbf16, #tpu.memory_space<vmem>>, vector<32x32xbf16>
    %cst_104 = arith.constant dense<0.000000e+00> : vector<64x32xf32>
    %214 = tpu.matmul %212, %213, %cst_104 {dimension_numbers = #tpu.dot_dimension_numbers<[1], [0], [0], [1], [0, 0, 1, 1], [], []>} : vector<64x32xbf16>, vector<32x32xbf16>, vector<64x32xf32> -> vector<64x32xf32>
    %c0_105 = arith.constant 0 : index
    %c0_106 = arith.constant 0 : index
    %215 = vector.load %arg31[%c0_105, %c0_106] : memref<1x32xf32, #tpu.memory_space<vmem>>, vector<1x32xf32>
    %216 = vector.broadcast %215 : vector<1x32xf32> to vector<64x32xf32>
    %217 = arith.addf %214, %216 : vector<64x32xf32>
    %cst_107 = arith.constant 0.000000e+00 : f32
    %218 = vector.broadcast %cst_107 : f32 to vector<64x32xf32>
    %219 = arith.cmpf oge, %217, %218 : vector<64x32xf32>
    %cst_108 = arith.constant 0.00999999977 : f32
    %220 = vector.broadcast %cst_108 : f32 to vector<64x32xf32>
    %221 = arith.mulf %220, %217 : vector<64x32xf32>
    %222 = arith.select %219, %217, %221 : vector<64x32xi1>, vector<64x32xf32>
    %223 = arith.truncf %222 : vector<64x32xf32> to vector<64x32xbf16>
    %c0_109 = arith.constant 0 : index
    %c0_110 = arith.constant 0 : index
    %224 = vector.load %arg32[%c0_109, %c0_110] : memref<32x16xbf16, #tpu.memory_space<vmem>>, vector<32x16xbf16>
    %cst_111 = arith.constant dense<0.000000e+00> : vector<64x16xf32>
    %225 = tpu.matmul %223, %224, %cst_111 {dimension_numbers = #tpu.dot_dimension_numbers<[1], [0], [0], [1], [0, 0, 1, 1], [], []>} : vector<64x32xbf16>, vector<32x16xbf16>, vector<64x16xf32> -> vector<64x16xf32>
    %c0_112 = arith.constant 0 : index
    %c0_113 = arith.constant 0 : index
    %226 = vector.load %arg33[%c0_112, %c0_113] : memref<1x16xf32, #tpu.memory_space<vmem>>, vector<1x16xf32>
    %227 = vector.broadcast %226 : vector<1x16xf32> to vector<64x16xf32>
    %228 = arith.addf %225, %227 : vector<64x16xf32>
    %cst_114 = arith.constant 0.000000e+00 : f32
    %229 = vector.broadcast %cst_114 : f32 to vector<64x16xf32>
    %230 = arith.cmpf oge, %228, %229 : vector<64x16xf32>
    %cst_115 = arith.constant 0.00999999977 : f32
    %231 = vector.broadcast %cst_115 : f32 to vector<64x16xf32>
    %232 = arith.mulf %231, %228 : vector<64x16xf32>
    %233 = arith.select %230, %228, %232 : vector<64x16xi1>, vector<64x16xf32>
    %234 = arith.truncf %233 : vector<64x16xf32> to vector<64x16xbf16>
    %c0_116 = arith.constant 0 : index
    %c0_117 = arith.constant 0 : index
    %235 = vector.load %arg34[%c0_116, %c0_117] : memref<16x16xbf16, #tpu.memory_space<vmem>>, vector<16x16xbf16>
    %cst_118 = arith.constant dense<0.000000e+00> : vector<64x16xf32>
    %236 = tpu.matmul %234, %235, %cst_118 {dimension_numbers = #tpu.dot_dimension_numbers<[1], [0], [0], [1], [0, 0, 1, 1], [], []>} : vector<64x16xbf16>, vector<16x16xbf16>, vector<64x16xf32> -> vector<64x16xf32>
    %c0_119 = arith.constant 0 : index
    %c0_120 = arith.constant 0 : index
    %237 = vector.load %arg35[%c0_119, %c0_120] : memref<1x16xf32, #tpu.memory_space<vmem>>, vector<1x16xf32>
    %238 = vector.broadcast %237 : vector<1x16xf32> to vector<64x16xf32>
    %239 = arith.addf %236, %238 : vector<64x16xf32>
    %cst_121 = arith.constant 0.000000e+00 : f32
    %240 = vector.broadcast %cst_121 : f32 to vector<64x16xf32>
    %241 = arith.cmpf oge, %239, %240 : vector<64x16xf32>
    %cst_122 = arith.constant 0.00999999977 : f32
    %242 = vector.broadcast %cst_122 : f32 to vector<64x16xf32>
    %243 = arith.mulf %242, %239 : vector<64x16xf32>
    %244 = arith.select %241, %239, %243 : vector<64x16xi1>, vector<64x16xf32>
    %245 = arith.truncf %244 : vector<64x16xf32> to vector<64x16xbf16>
    %246 = arith.extf %245 : vector<64x16xbf16> to vector<64x16xf32>
    %c0_123 = arith.constant 0 : index
    %c0_124 = arith.constant 0 : index
    %247 = vector.load %arg36[%c0_123, %c0_124] : memref<1x16xf32, #tpu.memory_space<vmem>>, vector<1x16xf32>
    %248 = vector.broadcast %247 : vector<1x16xf32> to vector<64x16xf32>
    %249 = arith.mulf %246, %248 : vector<64x16xf32>
    %cst_125 = arith.constant dense<0.000000e+00> : vector<64xf32>
    %250 = vector.multi_reduction <add>, %249, %cst_125 [1] : vector<64x16xf32> to vector<64xf32>
    %251 = vector.shape_cast %250 : vector<64xf32> to vector<64x1xf32>
    %c0_126 = arith.constant 0 : index
    %c0_127 = arith.constant 0 : index
    %252 = vector.load %arg37[%c0_126, %c0_127] : memref<1x1xf32, #tpu.memory_space<vmem>>, vector<1x1xf32>
    %253 = vector.broadcast %252 : vector<1x1xf32> to vector<64x1xf32>
    %254 = arith.addf %251, %253 : vector<64x1xf32>
    %255 = vector.shape_cast %254 : vector<64x1xf32> to vector<8x8xf32>
    %cst_128 = arith.constant 1.000000e+08 : f32
    %256 = vector.broadcast %cst_128 : f32 to vector<8x8xf32>
    %257 = arith.subf %255, %256 : vector<8x8xf32>
    %258 = arith.select %3, %257, %255 : vector<8x8xi1>, vector<8x8xf32>
    %cst_129 = arith.constant dense<0xFF800000> : vector<8xf32>
    %259 = vector.multi_reduction <maximumf>, %258, %cst_129 [1] : vector<8x8xf32> to vector<8xf32>
    %260 = vector.shape_cast %259 : vector<8xf32> to vector<8x1xf32>
    %261 = vector.broadcast %260 : vector<8x1xf32> to vector<8x8xf32>
    %262 = arith.subf %258, %261 : vector<8x8xf32>
    %263 = math.exp %262 : vector<8x8xf32>
    %cst_130 = arith.constant dense<0.000000e+00> : vector<8xf32>
    %264 = vector.multi_reduction <add>, %263, %cst_130 [1] : vector<8x8xf32> to vector<8xf32>
    %265 = vector.shape_cast %264 : vector<8xf32> to vector<8x1xf32>
    %266 = tpu.reciprocal %265 {approx = true} : vector<8x1xf32> -> vector<8x1xf32>
    %267 = vector.broadcast %266 : vector<8x1xf32> to vector<8x8xf32>
    %268 = arith.mulf %263, %267 : vector<8x8xf32>
    %269 = arith.truncf %192 : vector<8x32xf32> to vector<8x32xbf16>
    %270 = arith.truncf %268 : vector<8x8xf32> to vector<8x8xbf16>
    %cst_131 = arith.constant dense<0.000000e+00> : vector<8x32xf32>
    %271 = tpu.matmul %270, %269, %cst_131 {dimension_numbers = #tpu.dot_dimension_numbers<[1], [0], [0], [1], [0, 0, 1, 1], [], []>} : vector<8x8xbf16>, vector<8x32xbf16>, vector<8x32xf32> -> vector<8x32xf32>
    %c0_132 = arith.constant 0 : index
    %c0_133 = arith.constant 0 : index
    %272 = vector.load %arg38[%c0_132, %c0_133] : memref<32x16xbf16, #tpu.memory_space<vmem>>, vector<32x16xbf16>
    %cst_134 = arith.constant dense<0.000000e+00> : vector<8x16xf32>
    %273 = tpu.matmul %269, %272, %cst_134 {dimension_numbers = #tpu.dot_dimension_numbers<[1], [0], [0], [1], [0, 0, 1, 1], [], []>} : vector<8x32xbf16>, vector<32x16xbf16>, vector<8x16xf32> -> vector<8x16xf32>
    %274 = arith.truncf %271 : vector<8x32xf32> to vector<8x32xbf16>
    %c0_135 = arith.constant 0 : index
    %c0_136 = arith.constant 0 : index
    %275 = vector.load %arg39[%c0_135, %c0_136] : memref<32x16xbf16, #tpu.memory_space<vmem>>, vector<32x16xbf16>
    %cst_137 = arith.constant dense<0.000000e+00> : vector<8x16xf32>
    %276 = tpu.matmul %274, %275, %cst_137 {dimension_numbers = #tpu.dot_dimension_numbers<[1], [0], [0], [1], [0, 0, 1, 1], [], []>} : vector<8x32xbf16>, vector<32x16xbf16>, vector<8x16xf32> -> vector<8x16xf32>
    %277 = arith.addf %273, %276 : vector<8x16xf32>
    %c0_138 = arith.constant 0 : index
    %c0_139 = arith.constant 0 : index
    %278 = vector.load %arg40[%c0_138, %c0_139] : memref<1x16xf32, #tpu.memory_space<vmem>>, vector<1x16xf32>
    %279 = vector.broadcast %278 : vector<1x16xf32> to vector<8x16xf32>
    %280 = arith.addf %277, %279 : vector<8x16xf32>
    %281 = vector.shape_cast %280 : vector<8x16xf32> to vector<1x8x16xf32>
    %c0_140 = arith.constant 0 : index
    %c0_141 = arith.constant 0 : index
    %c0_142 = arith.constant 0 : index
    %282 = vector.load %arg41[%c0_140, %c0_141, %c0_142] : memref<1x8x16xf32, #tpu.memory_space<vmem>>, vector<1x8x16xf32>
    tpu.vector_store %arg41[%c0_140, %c0_141, %c0_142], %281 {strides = array<i32>} : memref<1x8x16xf32, #tpu.memory_space<vmem>>, vector<1x8x16xf32>,
    return
  }
  func.func @transform_0(%arg0: i32) -> (i32, i32, i32) {
    %c0_i32 = arith.constant 0 : i32
    %c0_i32_0 = arith.constant 0 : i32
    %c0_i32_1 = arith.constant 0 : i32
    return %arg0, %c0_i32, %c0_i32_0 : i32, i32, i32
  }
  func.func @transform_1(%arg0: i32) -> (i32, i32) {
    %c0_i32 = arith.constant 0 : i32
    %c0_i32_0 = arith.constant 0 : i32
    %c0_i32_1 = arith.constant 0 : i32
    return %c0_i32, %c0_i32_0 : i32, i32
  }
  func.func @transform_2(%arg0: i32) -> (i32, i32) {
    %c0_i32 = arith.constant 0 : i32
    %c0_i32_0 = arith.constant 0 : i32
    %c0_i32_1 = arith.constant 0 : i32
    return %c0_i32, %c0_i32_0 : i32, i32
  }
  func.func @transform_3(%arg0: i32) -> (i32, i32) {
    %c0_i32 = arith.constant 0 : i32
    %c0_i32_0 = arith.constant 0 : i32
    %c0_i32_1 = arith.constant 0 : i32
    return %c0_i32, %c0_i32_0 : i32, i32
  }
  func.func @transform_4(%arg0: i32) -> (i32, i32) {
    %c0_i32 = arith.constant 0 : i32
    %c0_i32_0 = arith.constant 0 : i32
    %c0_i32_1 = arith.constant 0 : i32
    return %c0_i32, %c0_i32_0 : i32, i32
  }
  func.func @transform_5(%arg0: i32) -> (i32, i32) {
    %c0_i32 = arith.constant 0 : i32
    %c0_i32_0 = arith.constant 0 : i32
    %c0_i32_1 = arith.constant 0 : i32
    return %c0_i32, %c0_i32_0 : i32, i32
  }
  func.func @transform_6(%arg0: i32) -> (i32, i32) {
    %c0_i32 = arith.constant 0 : i32
    %c0_i32_0 = arith.constant 0 : i32
    %c0_i32_1 = arith.constant 0 : i32
    return %c0_i32, %c0_i32_0 : i32, i32
  }
  func.func @transform_7(%arg0: i32) -> (i32, i32) {
    %c0_i32 = arith.constant 0 : i32
    %c0_i32_0 = arith.constant 0 : i32
    %c0_i32_1 = arith.constant 0 : i32
    return %c0_i32, %c0_i32_0 : i32, i32
  }
  func.func @transform_8(%arg0: i32) -> (i32, i32) {
    %c0_i32 = arith.constant 0 : i32
    %c0_i32_0 = arith.constant 0 : i32
    %c0_i32_1 = arith.constant 0 : i32
    return %c0_i32, %c0_i32_0 : i32, i32
  }
  func.func @transform_9(%arg0: i32) -> (i32, i32) {
    %c0_i32 = arith.constant 0 : i32
    %c0_i32_0 = arith.constant 0 : i32
    %c0_i32_1 = arith.constant 0 : i32
    return %c0_i32, %c0_i32_0 : i32, i32
  }
  func.func @transform_10(%arg0: i32) -> (i32, i32) {
    %c0_i32 = arith.constant 0 : i32
    %c0_i32_0 = arith.constant 0 : i32
    %c0_i32_1 = arith.constant 0 : i32
    return %c0_i32, %c0_i32_0 : i32, i32
  }
  func.func @transform_11(%arg0: i32) -> (i32, i32) {
    %c0_i32 = arith.constant 0 : i32
    %c0_i32_0 = arith.constant 0 : i32
    %c0_i32_1 = arith.constant 0 : i32
    return %c0_i32, %c0_i32_0 : i32, i32
  }
  func.func @transform_12(%arg0: i32) -> (i32, i32) {
    %c0_i32 = arith.constant 0 : i32
    %c0_i32_0 = arith.constant 0 : i32
    %c0_i32_1 = arith.constant 0 : i32
    return %c0_i32, %c0_i32_0 : i32, i32
  }
  func.func @transform_13(%arg0: i32) -> (i32, i32) {
    %c0_i32 = arith.constant 0 : i32
    %c0_i32_0 = arith.constant 0 : i32
    %c0_i32_1 = arith.constant 0 : i32
    return %c0_i32, %c0_i32_0 : i32, i32
  }
  func.func @transform_14(%arg0: i32) -> (i32, i32) {
    %c0_i32 = arith.constant 0 : i32
    %c0_i32_0 = arith.constant 0 : i32
    %c0_i32_1 = arith.constant 0 : i32
    return %c0_i32, %c0_i32_0 : i32, i32
  }
  func.func @transform_15(%arg0: i32) -> (i32, i32) {
    %c0_i32 = arith.constant 0 : i32
    %c0_i32_0 = arith.constant 0 : i32
    %c0_i32_1 = arith.constant 0 : i32
    return %c0_i32, %c0_i32_0 : i32, i32
  }
  func.func @transform_16(%arg0: i32) -> (i32, i32) {
    %c0_i32 = arith.constant 0 : i32
    %c0_i32_0 = arith.constant 0 : i32
    %c0_i32_1 = arith.constant 0 : i32
    return %c0_i32, %c0_i32_0 : i32, i32
  }
  func.func @transform_17(%arg0: i32) -> (i32, i32) {
    %c0_i32 = arith.constant 0 : i32
    %c0_i32_0 = arith.constant 0 : i32
    %c0_i32_1 = arith.constant 0 : i32
    return %c0_i32, %c0_i32_0 : i32, i32
  }
  func.func @transform_18(%arg0: i32) -> (i32, i32) {
    %c0_i32 = arith.constant 0 : i32
    %c0_i32_0 = arith.constant 0 : i32
    %c0_i32_1 = arith.constant 0 : i32
    return %c0_i32, %c0_i32_0 : i32, i32
  }
  func.func @transform_19(%arg0: i32) -> (i32, i32) {
    %c0_i32 = arith.constant 0 : i32
    %c0_i32_0 = arith.constant 0 : i32
    %c0_i32_1 = arith.constant 0 : i32
    return %c0_i32, %c0_i32_0 : i32, i32
  }
  func.func @transform_20(%arg0: i32) -> (i32, i32) {
    %c0_i32 = arith.constant 0 : i32
    %c0_i32_0 = arith.constant 0 : i32
    %c0_i32_1 = arith.constant 0 : i32
    return %c0_i32, %c0_i32_0 : i32, i32
  }
  func.func @transform_21(%arg0: i32) -> (i32, i32) {
    %c0_i32 = arith.constant 0 : i32
    %c0_i32_0 = arith.constant 0 : i32
    %c0_i32_1 = arith.constant 0 : i32
    return %c0_i32, %c0_i32_0 : i32, i32
  }
  func.func @transform_22(%arg0: i32) -> (i32, i32) {
    %c0_i32 = arith.constant 0 : i32
    %c0_i32_0 = arith.constant 0 : i32
    %c0_i32_1 = arith.constant 0 : i32
    return %c0_i32, %c0_i32_0 : i32, i32
  }
  func.func @transform_23(%arg0: i32) -> (i32, i32) {
    %c0_i32 = arith.constant 0 : i32
    %c0_i32_0 = arith.constant 0 : i32
    %c0_i32_1 = arith.constant 0 : i32
    return %c0_i32, %c0_i32_0 : i32, i32
  }
  func.func @transform_24(%arg0: i32) -> (i32, i32) {
    %c0_i32 = arith.constant 0 : i32
    %c0_i32_0 = arith.constant 0 : i32
    %c0_i32_1 = arith.constant 0 : i32
    return %c0_i32, %c0_i32_0 : i32, i32
  }
  func.func @transform_25(%arg0: i32) -> (i32, i32) {
    %c0_i32 = arith.constant 0 : i32
    %c0_i32_0 = arith.constant 0 : i32
    %c0_i32_1 = arith.constant 0 : i32
    return %c0_i32, %c0_i32_0 : i32, i32
  }
  func.func @transform_26(%arg0: i32) -> (i32, i32) {
    %c0_i32 = arith.constant 0 : i32
    %c0_i32_0 = arith.constant 0 : i32
    %c0_i32_1 = arith.constant 0 : i32
    return %c0_i32, %c0_i32_0 : i32, i32
  }
  func.func @transform_27(%arg0: i32) -> (i32, i32) {
    %c0_i32 = arith.constant 0 : i32
    %c0_i32_0 = arith.constant 0 : i32
    %c0_i32_1 = arith.constant 0 : i32
    return %c0_i32, %c0_i32_0 : i32, i32
  }
  func.func @transform_28(%arg0: i32) -> (i32, i32) {
    %c0_i32 = arith.constant 0 : i32
    %c0_i32_0 = arith.constant 0 : i32
    %c0_i32_1 = arith.constant 0 : i32
    return %c0_i32, %c0_i32_0 : i32, i32
  }
  func.func @transform_29(%arg0: i32) -> (i32, i32) {
    %c0_i32 = arith.constant 0 : i32
    %c0_i32_0 = arith.constant 0 : i32
    %c0_i32_1 = arith.constant 0 : i32
    return %c0_i32, %c0_i32_0 : i32, i32
  }
  func.func @transform_30(%arg0: i32) -> (i32, i32) {
    %c0_i32 = arith.constant 0 : i32
    %c0_i32_0 = arith.constant 0 : i32
    %c0_i32_1 = arith.constant 0 : i32
    return %c0_i32, %c0_i32_0 : i32, i32
  }
  func.func @transform_31(%arg0: i32) -> (i32, i32) {
    %c0_i32 = arith.constant 0 : i32
    %c0_i32_0 = arith.constant 0 : i32
    %c0_i32_1 = arith.constant 0 : i32
    return %c0_i32, %c0_i32_0 : i32, i32
  }
  func.func @transform_32(%arg0: i32) -> (i32, i32) {
    %c0_i32 = arith.constant 0 : i32
    %c0_i32_0 = arith.constant 0 : i32
    %c0_i32_1 = arith.constant 0 : i32
    return %c0_i32, %c0_i32_0 : i32, i32
  }
  func.func @transform_33(%arg0: i32) -> (i32, i32) {
    %c0_i32 = arith.constant 0 : i32
    %c0_i32_0 = arith.constant 0 : i32
    %c0_i32_1 = arith.constant 0 : i32
    return %c0_i32, %c0_i32_0 : i32, i32
  }
  func.func @transform_34(%arg0: i32) -> (i32, i32) {
    %c0_i32 = arith.constant 0 : i32
    %c0_i32_0 = arith.constant 0 : i32
    %c0_i32_1 = arith.constant 0 : i32
    return %c0_i32, %c0_i32_0 : i32, i32
  }
  func.func @transform_35(%arg0: i32) -> (i32, i32) {
    %c0_i32 = arith.constant 0 : i32
    %c0_i32_0 = arith.constant 0 : i32
    %c0_i32_1 = arith.constant 0 : i32
    return %c0_i32, %c0_i32_0 : i32, i32
  }
  func.func @transform_36(%arg0: i32) -> (i32, i32) {
    %c0_i32 = arith.constant 0 : i32
    %c0_i32_0 = arith.constant 0 : i32
    %c0_i32_1 = arith.constant 0 : i32
    return %c0_i32, %c0_i32_0 : i32, i32
  }
  func.func @transform_37(%arg0: i32) -> (i32, i32) {
    %c0_i32 = arith.constant 0 : i32
    %c0_i32_0 = arith.constant 0 : i32
    %c0_i32_1 = arith.constant 0 : i32
    return %c0_i32, %c0_i32_0 : i32, i32
  }
  func.func @transform_38(%arg0: i32) -> (i32, i32) {
    %c0_i32 = arith.constant 0 : i32
    %c0_i32_0 = arith.constant 0 : i32
    %c0_i32_1 = arith.constant 0 : i32
    return %c0_i32, %c0_i32_0 : i32, i32
  }
  func.func @transform_39(%arg0: i32) -> (i32, i32) {
    %c0_i32 = arith.constant 0 : i32
    %c0_i32_0 = arith.constant 0 : i32
    %c0_i32_1 = arith.constant 0 : i32
    return %c0_i32, %c0_i32_0 : i32, i32
  }
  func.func @transform_40(%arg0: i32) -> (i32, i32, i32) {
    %c0_i32 = arith.constant 0 : i32
    %c0_i32_0 = arith.constant 0 : i32
    %c0_i32_1 = arith.constant 0 : i32
    return %arg0, %c0_i32, %c0_i32_0 : i32, i32, i32
  }
}

</mosaic_0001>

<llo_original>
// kernel: gnn_nl_forward.1
$region0: #{gnn_nl_forward.1}
  #allocation0 [shape = 'u32[]', space=smem, size = 0x4, offset = 0x4, fixed_abs, tag = 'smem constant byte address 0x4 - core index']
  #allocation1 [shape = 'u32[144,128]{1,0:T(1,128)}', space=vmem, size = 0x12000, scoped, tag = 'internal scratch']
  #allocation2 [shape = 'f32[1,1]{1,0:T(1,128)S(1)}', space=vmem, size = 0x200, scoped, tag = 'scoped memory for gnn_nl_forward.1']
  #allocation3 [shape = 'f32[1,1]{1,0:T(1,128)S(1)}', space=vmem, size = 0x200, scoped, tag = 'scoped memory for gnn_nl_forward.1']
  #allocation4 [shape = 'f32[1,1]{1,0:T(1,128)S(1)}', space=vmem, size = 0x200, scoped, tag = 'scoped memory for gnn_nl_forward.1']
  %s0 = inlined_call_operand.smem [shape: u32[41], index: -1, kind: input, shape index: {}]
  %s1 = sld [smem:[%s0]]
  %s2 = scalar_lea.smem %s0, 1
  %s3 = sld [smem:[%s2]]
  %s4 = scalar_lea.smem %s0, 2
  %s5 = sld [smem:[%s4]]
  %s6 = scalar_lea.smem %s0, 3
  %s7 = sld [smem:[%s6]]
  %s8 = scalar_lea.smem %s0, 4
  %s9 = sld [smem:[%s8]]
  %s10 = scalar_lea.smem %s0, 5
  %s11 = sld [smem:[%s10]]
  %s12 = scalar_lea.smem %s0, 6
  %s13 = sld [smem:[%s12]]
  %s14 = scalar_lea.smem %s0, 7
  %s15 = sld [smem:[%s14]]
  %s16 = scalar_lea.smem %s0, 8
  %s17 = sld [smem:[%s16]]
  %s18 = scalar_lea.smem %s0, 9
  %s19 = sld [smem:[%s18]]
  %s20 = scalar_lea.smem %s0, 10
  %s21 = sld [smem:[%s20]]
  %s22 = scalar_lea.smem %s0, 11
  %s23 = sld [smem:[%s22]]
  %s24 = scalar_lea.smem %s0, 12
  %s25 = sld [smem:[%s24]]
  %s26 = scalar_lea.smem %s0, 13
  %s27 = sld [smem:[%s26]]
  %s28 = scalar_lea.smem %s0, 14
  %s29 = sld [smem:[%s28]]
  %s30 = scalar_lea.smem %s0, 15
  %s31 = sld [smem:[%s30]]
  %s32 = scalar_lea.smem %s0, 16
  %s33 = sld [smem:[%s32]]
  %s34 = scalar_lea.smem %s0, 17
  %s35 = sld [smem:[%s34]]
  %s36 = scalar_lea.smem %s0, 18
  %s37 = sld [smem:[%s36]]
  %s38 = scalar_lea.smem %s0, 19
  %s39 = sld [smem:[%s38]]
  %s40 = scalar_lea.smem %s0, 20
  %s41 = sld [smem:[%s40]]
  %s42 = scalar_lea.smem %s0, 21
  %s43 = sld [smem:[%s42]]
  %s44 = scalar_lea.smem %s0, 22
  %s45 = sld [smem:[%s44]]
  %s46 = scalar_lea.smem %s0, 23
  %s47 = sld [smem:[%s46]]
  %s48 = scalar_lea.smem %s0, 24
  %s49 = sld [smem:[%s48]]
  %s50 = scalar_lea.smem %s0, 25
  %s51 = sld [smem:[%s50]]
  %s52 = scalar_lea.smem %s0, 26
  %s53 = sld [smem:[%s52]]
  %s54 = scalar_lea.smem %s0, 27
  %s55 = sld [smem:[%s54]]
  %s56 = scalar_lea.smem %s0, 28
  %s57 = sld [smem:[%s56]]
  %s58 = scalar_lea.smem %s0, 29
  %s59 = sld [smem:[%s58]]
  %s60 = scalar_lea.smem %s0, 30
  %s61 = sld [smem:[%s60]]
  %s62 = scalar_lea.smem %s0, 31
  %s63 = sld [smem:[%s62]]
  %s64 = scalar_lea.smem %s0, 32
  %s65 = sld [smem:[%s64]]
  %s66 = scalar_lea.smem %s0, 33
  %s67 = sld [smem:[%s66]]
  %s68 = scalar_lea.smem %s0, 34
  %s69 = sld [smem:[%s68]]
  %s70 = scalar_lea.smem %s0, 35
  %s71 = sld [smem:[%s70]]
  %s72 = scalar_lea.smem %s0, 36
  %s73 = sld [smem:[%s72]]
  %s74 = scalar_lea.smem %s0, 37
  %s75 = sld [smem:[%s74]]
  %s76 = scalar_lea.smem %s0, 38
  %s77 = sld [smem:[%s76]]
  %s78 = scalar_lea.smem %s0, 39
  %s79 = sld [smem:[%s78]]
  %s80 = scalar_lea.smem %s0, 40
  %s81 = sld [smem:[%s80]]
  %s82 = sld [smem:[#allocation0]]
  $region193: #{gnn_nl_forward.1} parent=0
    _
  %s84 = ssub.s32 1, %s82
  %s85 = scalar_select 0, %s84, %s82
  %v86 = vstv %s21
  %87 = vst [vmem:[#allocation2] sm:$0x1] %v86
  %v88 = vstv %s47
  %89 = vst [vmem:[#allocation3] sm:$0x1] %v88
  %v90 = vstv %s73
  %91 = vst [vmem:[#allocation4] sm:$0x1] %v90
  $region1: #{gnn_nl_forward.1} parent=0
    #allocation5 [shape = 'u8[8192]{0}', space=vmem, size = 0x2000, scoped, tag = 'output window, operand 0']
    #allocation6 [shape = 's32[2]{0}', space=sflag, size = 0x8, scoped, tag = 'scoped memory for gnn_nl_forward.1']
    %92 = vsyncpa [#allocation6], 0
    %s93 = scalar_lea.sflag [#allocation6], 1
    %94 = vsyncpa %s93, 0
    loop: start=0, step=1, limit=4
    $region2: #{gnn_nl_forward.1} parent=1 // loop_pre_header
      _
    $region3: #{gnn_nl_forward.1} parent=1 // loop_header
      %s96 = sphi 0, %s100
      %p97 = scmp.ge.s32.totalorder %s96, 4
      %s106 = sphi 0, %s108
      %s109 = sphi 0, %s106
      %s110 = sphi 0, %s109
      %s126 = sphi 0, %s110
      %s130 = sphi 0, %s130
      %s132 = sphi 0, %s130
      %s133 = sphi 0, %s132
      %s147 = sphi 0, %s133
      %s151 = sphi 0, %s151
      %s153 = sphi 0, %s151
      %s154 = sphi 0, %s153
      %s168 = sphi 0, %s154
      %s172 = sphi 0, %s172
      %s174 = sphi 0, %s172
      %s175 = sphi 0, %s174
      %s189 = sphi 0, %s175
      %s193 = sphi 0, %s193
      %s195 = sphi 0, %s193
      %s196 = sphi 0, %s195
      %s210 = sphi 0, %s196
      %s214 = sphi 0, %s214
      %s216 = sphi 0, %s214
      %s217 = sphi 0, %s216
      %s231 = sphi 0, %s217
      %s235 = sphi 0, %s235
      %s237 = sphi 0, %s235
      %s238 = sphi 0, %s237
      %s252 = sphi 0, %s238
      %s256 = sphi 0, %s256
      %s258 = sphi 0, %s256
      %s259 = sphi 0, %s258
      %s273 = sphi 0, %s259
      %s277 = sphi 0, %s277
      %s279 = sphi 0, %s277
      %s280 = sphi 0, %s279
      %s294 = sphi 0, %s280
      %s298 = sphi 0, %s298
      %s300 = sphi 0, %s298
      %s301 = sphi 0, %s300
      %s315 = sphi 0, %s301
      %s319 = sphi 0, %s319
      %s321 = sphi 0, %s319
      %s322 = sphi 0, %s321
      %s336 = sphi 0, %s322
      %s340 = sphi 0, %s340
      %s342 = sphi 0, %s340
      %s343 = sphi 0, %s342
      %s357 = sphi 0, %s343
      %s361 = sphi 0, %s361
      %s363 = sphi 0, %s361
      %s364 = sphi 0, %s363
      %s378 = sphi 0, %s364
      %s382 = sphi 0, %s382
      %s384 = sphi 0, %s382
      %s385 = sphi 0, %s384
      %s399 = sphi 0, %s385
      %s403 = sphi 0, %s403
      %s405 = sphi 0, %s403
      %s406 = sphi 0, %s405
      %s420 = sphi 0, %s406
      %s424 = sphi 0, %s424
      %s426 = sphi 0, %s424
      %s427 = sphi 0, %s426
      %s441 = sphi 0, %s427
      %s445 = sphi 0, %s445
      %s447 = sphi 0, %s445
      %s448 = sphi 0, %s447
      %s462 = sphi 0, %s448
      %s466 = sphi 0, %s466
      %s468 = sphi 0, %s466
      %s469 = sphi 0, %s468
      %s483 = sphi 0, %s469
      %s487 = sphi 0, %s487
      %s489 = sphi 0, %s487
      %s490 = sphi 0, %s489
      %s504 = sphi 0, %s490
      %s508 = sphi 0, %s508
      %s510 = sphi 0, %s508
      %s511 = sphi 0, %s510
      %s525 = sphi 0, %s511
      %s529 = sphi 0, %s529
      %s531 = sphi 0, %s529
      %s532 = sphi 0, %s531
      %s546 = sphi 0, %s532
      %s550 = sphi 0, %s550
      %s552 = sphi 0, %s550
      %s553 = sphi 0, %s552
      %s567 = sphi 0, %s553
      %s571 = sphi 0, %s571
      %s573 = sphi 0, %s571
      %s574 = sphi 0, %s573
      %s588 = sphi 0, %s574
      %s592 = sphi 0, %s592
      %s594 = sphi 0, %s592
      %s595 = sphi 0, %s594
      %s609 = sphi 0, %s595
      %s613 = sphi 0, %s613
      %s615 = sphi 0, %s613
      %s616 = sphi 0, %s615
      %s630 = sphi 0, %s616
      %s634 = sphi 0, %s634
      %s636 = sphi 0, %s634
      %s637 = sphi 0, %s636
      %s651 = sphi 0, %s637
      %s655 = sphi 0, %s655
      %s657 = sphi 0, %s655
      %s658 = sphi 0, %s657
      %s672 = sphi 0, %s658
      %s676 = sphi 0, %s676
      %s678 = sphi 0, %s676
      %s679 = sphi 0, %s678
      %s693 = sphi 0, %s679
      %s697 = sphi 0, %s697
      %s699 = sphi 0, %s697
      %s700 = sphi 0, %s699
      %s714 = sphi 0, %s700
      %s718 = sphi 0, %s718
      %s720 = sphi 0, %s718
      %s721 = sphi 0, %s720
      %s735 = sphi 0, %s721
      %s739 = sphi 0, %s739
      %s741 = sphi 0, %s739
      %s742 = sphi 0, %s741
      %s756 = sphi 0, %s742
      %s760 = sphi 0, %s760
      %s762 = sphi 0, %s760
      %s763 = sphi 0, %s762
      %s777 = sphi 0, %s763
      %s781 = sphi 0, %s781
      %s783 = sphi 0, %s781
      %s784 = sphi 0, %s783
      %s798 = sphi 0, %s784
      %s802 = sphi 0, %s802
      %s804 = sphi 0, %s802
      %s805 = sphi 0, %s804
      %s819 = sphi 0, %s805
      %s823 = sphi 0, %s823
      %s825 = sphi 0, %s823
      %s826 = sphi 0, %s825
      %s840 = sphi 0, %s826
      %s844 = sphi 0, %s844
      %s846 = sphi 0, %s844
      %s847 = sphi 0, %s846
      %s861 = sphi 0, %s847
      %s865 = sphi 0, %s865
      %s867 = sphi 0, %s865
      %s868 = sphi 0, %s867
      %s882 = sphi 0, %s868
      %s886 = sphi 0, %s886
      %s888 = sphi 0, %s886
      %s889 = sphi 0, %s888
      %s903 = sphi 0, %s889
      %s907 = sphi 0, %s907
      %s909 = sphi 0, %s907
      %s910 = sphi 0, %s909
      %s924 = sphi 0, %s910
      %s928 = sphi 0, %s928
      %s930 = sphi 0, %s928
      %s931 = sphi 0, %s930
      %s945 = sphi 0, %s931
      %s951 = sphi 0, %s953
      %s954 = sphi 0, %s951
      %s955 = sphi 0, %s954
      %s971 = sphi 0, %s955
    $region4: #{gnn_nl_forward.1} parent=1 // loop_header_branch
      %99 = sbr.rel (%p97) target = $region8
    $region5: #{gnn_nl_forward.1} parent=1 // loop_body
      %s101 = ssub.s32 %s96, 1
      %s102 = ssub.s32 %s96, 2
      %s103 = sadd.s32 %s96, 1
      %s104 = ssub.s32 %s96, %s103
      %p105 = scmp.eq.s32.totalorder %s104, 0
      %s107 = sadd.s32 %s106, 1
      %s108 = scalar_select %p105, %s106, %s107
      %p111 = pneg %p105
      %p112 = scmp.eq.s32.totalorder %s96, 1
      %p113 = por %p111, %p112
      %p114 = scmp.ne.s32.totalorder %s106, %s109
      %p115 = scmp.eq.s32.totalorder %s96, 0
      %p116 = por %p114, %p115
      %p117 = scmp.ne.s32.totalorder %s106, %s109
      %p118 = scmp.eq.s32.totalorder %s101, 1
      %p119 = por %p117, %p118
      %p120 = scmp.ne.s32.totalorder %s109, %s110
      %p121 = scmp.eq.s32.totalorder %s101, 0
      %p122 = por %p120, %p121
      %p123 = scmp.ne.s32.totalorder %s109, %s110
      %p124 = scmp.eq.s32.totalorder %s102, 1
      %p125 = por %p123, %p124
      %p127 = scmp.ne.s32.totalorder %s110, %s126
      %p128 = scmp.eq.s32.totalorder %s102, 0
      %p129 = por %p127, %p128
      %s131 = sadd.s32 %s130, 1
      %p134 = scmp.eq.s32.totalorder %s96, 1
      %p135 = scmp.ne.s32.totalorder %s130, %s132
      %p136 = scmp.eq.s32.totalorder %s96, 0
      %p137 = por %p135, %p136
      %p138 = scmp.ne.s32.totalorder %s130, %s132
      %p139 = scmp.eq.s32.totalorder %s101, 1
      %p140 = por %p138, %p139
      %p141 = scmp.ne.s32.totalorder %s132, %s133
      %p142 = scmp.eq.s32.totalorder %s101, 0
      %p143 = por %p141, %p142
      %p144 = scmp.ne.s32.totalorder %s132, %s133
      %p145 = scmp.eq.s32.totalorder %s102, 1
      %p146 = por %p144, %p145
      %p148 = scmp.ne.s32.totalorder %s133, %s147
      %p149 = scmp.eq.s32.totalorder %s102, 0
      %p150 = por %p148, %p149
      %s152 = sadd.s32 %s151, 1
      %p155 = scmp.eq.s32.totalorder %s96, 1
      %p156 = scmp.ne.s32.totalorder %s151, %s153
      %p157 = scmp.eq.s32.totalorder %s96, 0
      %p158 = por %p156, %p157
      %p159 = scmp.ne.s32.totalorder %s151, %s153
      %p160 = scmp.eq.s32.totalorder %s101, 1
      %p161 = por %p159, %p160
      %p162 = scmp.ne.s32.totalorder %s153, %s154
      %p163 = scmp.eq.s32.totalorder %s101, 0
      %p164 = por %p162, %p163
      %p165 = scmp.ne.s32.totalorder %s153, %s154
      %p166 = scmp.eq.s32.totalorder %s102, 1
      %p167 = por %p165, %p166
      %p169 = scmp.ne.s32.totalorder %s154, %s168
      %p170 = scmp.eq.s32.totalorder %s102, 0
      %p171 = por %p169, %p170
      %s173 = sadd.s32 %s172, 1
      %p176 = scmp.eq.s32.totalorder %s96, 1
      %p177 = scmp.ne.s32.totalorder %s172, %s174
      %p178 = scmp.eq.s32.totalorder %s96, 0
      %p179 = por %p177, %p178
      %p180 = scmp.ne.s32.totalorder %s172, %s174
      %p181 = scmp.eq.s32.totalorder %s101, 1
      %p182 = por %p180, %p181
      %p183 = scmp.ne.s32.totalorder %s174, %s175
      %p184 = scmp.eq.s32.totalorder %s101, 0
      %p185 = por %p183, %p184
      %p186 = scmp.ne.s32.totalorder %s174, %s175
      %p187 = scmp.eq.s32.totalorder %s102, 1
      %p188 = por %p186, %p187
      %p190 = scmp.ne.s32.totalorder %s175, %s189
      %p191 = scmp.eq.s32.totalorder %s102, 0
      %p192 = por %p190, %p191
      %s194 = sadd.s32 %s193, 1
      %p197 = scmp.eq.s32.totalorder %s96, 1
      %p198 = scmp.ne.s32.totalorder %s193, %s195
      %p199 = scmp.eq.s32.totalorder %s96, 0
      %p200 = por %p198, %p199
      %p201 = scmp.ne.s32.totalorder %s193, %s195
      %p202 = scmp.eq.s32.totalorder %s101, 1
      %p203 = por %p201, %p202
      %p204 = scmp.ne.s32.totalorder %s195, %s196
      %p205 = scmp.eq.s32.totalorder %s101, 0
      %p206 = por %p204, %p205
      %p207 = scmp.ne.s32.totalorder %s195, %s196
      %p208 = scmp.eq.s32.totalorder %s102, 1
      %p209 = por %p207, %p208
      %p211 = scmp.ne.s32.totalorder %s196, %s210
      %p212 = scmp.eq.s32.totalorder %s102, 0
      %p213 = por %p211, %p212
      %s215 = sadd.s32 %s214, 1
      %p218 = scmp.eq.s32.totalorder %s96, 1
      %p219 = scmp.ne.s32.totalorder %s214, %s216
      %p220 = scmp.eq.s32.totalorder %s96, 0
      %p221 = por %p219, %p220
      %p222 = scmp.ne.s32.totalorder %s214, %s216
      %p223 = scmp.eq.s32.totalorder %s101, 1
      %p224 = por %p222, %p223
      %p225 = scmp.ne.s32.totalorder %s216, %s217
      %p226 = scmp.eq.s32.totalorder %s101, 0
      %p227 = por %p225, %p226
      %p228 = scmp.ne.s32.totalorder %s216, %s217
      %p229 = scmp.eq.s32.totalorder %s102, 1
      %p230 = por %p228, %p229
      %p232 = scmp.ne.s32.totalorder %s217, %s231
      %p233 = scmp.eq.s32.totalorder %s102, 0
      %p234 = por %p232, %p233
      %s236 = sadd.s32 %s235, 1
      %p239 = scmp.eq.s32.totalorder %s96, 1
      %p240 = scmp.ne.s32.totalorder %s235, %s237
      %p241 = scmp.eq.s32.totalorder %s96, 0
      %p242 = por %p240, %p241
      %p243 = scmp.ne.s32.totalorder %s235, %s237
      %p244 = scmp.eq.s32.totalorder %s101, 1
      %p245 = por %p243, %p244
      %p246 = scmp.ne.s32.totalorder %s237, %s238
      %p247 = scmp.eq.s32.totalorder %s101, 0
      %p248 = por %p246, %p247
      %p249 = scmp.ne.s32.totalorder %s237, %s238
      %p250 = scmp.eq.s32.totalorder %s102, 1
      %p251 = por %p249, %p250
      %p253 = scmp.ne.s32.totalorder %s238, %s252
      %p254 = scmp.eq.s32.totalorder %s102, 0
      %p255 = por %p253, %p254
      %s257 = sadd.s32 %s256, 1
      %p260 = scmp.eq.s32.totalorder %s96, 1
      %p261 = scmp.ne.s32.totalorder %s256, %s258
      %p262 = scmp.eq.s32.totalorder %s96, 0
      %p263 = por %p261, %p262
      %p264 = scmp.ne.s32.totalorder %s256, %s258
      %p265 = scmp.eq.s32.totalorder %s101, 1
      %p266 = por %p264, %p265
      %p267 = scmp.ne.s32.totalorder %s258, %s259
      %p268 = scmp.eq.s32.totalorder %s101, 0
      %p269 = por %p267, %p268
      %p270 = scmp.ne.s32.totalorder %s258, %s259
      %p271 = scmp.eq.s32.totalorder %s102, 1
      %p272 = por %p270, %p271
      %p274 = scmp.ne.s32.totalorder %s259, %s273
      %p275 = scmp.eq.s32.totalorder %s102, 0
      %p276 = por %p274, %p275
      %s278 = sadd.s32 %s277, 1
      %p281 = scmp.eq.s32.totalorder %s96, 1
      %p282 = scmp.ne.s32.totalorder %s277, %s279
      %p283 = scmp.eq.s32.totalorder %s96, 0
      %p284 = por %p282, %p283
      %p285 = scmp.ne.s32.totalorder %s277, %s279
      %p286 = scmp.eq.s32.totalorder %s101, 1
      %p287 = por %p285, %p286
      %p288 = scmp.ne.s32.totalorder %s279, %s280
      %p289 = scmp.eq.s32.totalorder %s101, 0
      %p290 = por %p288, %p289
      %p291 = scmp.ne.s32.totalorder %s279, %s280
      %p292 = scmp.eq.s32.totalorder %s102, 1
      %p293 = por %p291, %p292
      %p295 = scmp.ne.s32.totalorder %s280, %s294
      %p296 = scmp.eq.s32.totalorder %s102, 0
      %p297 = por %p295, %p296
      %s299 = sadd.s32 %s298, 1
      %p302 = scmp.eq.s32.totalorder %s96, 1
      %p303 = scmp.ne.s32.totalorder %s298, %s300
      %p304 = scmp.eq.s32.totalorder %s96, 0
      %p305 = por %p303, %p304
      %p306 = scmp.ne.s32.totalorder %s298, %s300
      %p307 = scmp.eq.s32.totalorder %s101, 1
      %p308 = por %p306, %p307
      %p309 = scmp.ne.s32.totalorder %s300, %s301
      %p310 = scmp.eq.s32.totalorder %s101, 0
      %p311 = por %p309, %p310
      %p312 = scmp.ne.s32.totalorder %s300, %s301
      %p313 = scmp.eq.s32.totalorder %s102, 1
      %p314 = por %p312, %p313
      %p316 = scmp.ne.s32.totalorder %s301, %s315
      %p317 = scmp.eq.s32.totalorder %s102, 0
      %p318 = por %p316, %p317
      %s320 = sadd.s32 %s319, 1
      %p323 = scmp.eq.s32.totalorder %s96, 1
      %p324 = scmp.ne.s32.totalorder %s319, %s321
      %p325 = scmp.eq.s32.totalorder %s96, 0
      %p326 = por %p324, %p325
      %p327 = scmp.ne.s32.totalorder %s319, %s321
      %p328 = scmp.eq.s32.totalorder %s101, 1
      %p329 = por %p327, %p328
      %p330 = scmp.ne.s32.totalorder %s321, %s322
      %p331 = scmp.eq.s32.totalorder %s101, 0
      %p332 = por %p330, %p331
      %p333 = scmp.ne.s32.totalorder %s321, %s322
      %p334 = scmp.eq.s32.totalorder %s102, 1
      %p335 = por %p333, %p334
      %p337 = scmp.ne.s32.totalorder %s322, %s336
      %p338 = scmp.eq.s32.totalorder %s102, 0
      %p339 = por %p337, %p338
      %s341 = sadd.s32 %s340, 1
      %p344 = scmp.eq.s32.totalorder %s96, 1
      %p345 = scmp.ne.s32.totalorder %s340, %s342
      %p346 = scmp.eq.s32.totalorder %s96, 0
      %p347 = por %p345, %p346
      %p348 = scmp.ne.s32.totalorder %s340, %s342
      %p349 = scmp.eq.s32.totalorder %s101, 1
      %p350 = por %p348, %p349
      %p351 = scmp.ne.s32.totalorder %s342, %s343
      %p352 = scmp.eq.s32.totalorder %s101, 0
      %p353 = por %p351, %p352
      %p354 = scmp.ne.s32.totalorder %s342, %s343
      %p355 = scmp.eq.s32.totalorder %s102, 1
      %p356 = por %p354, %p355
      %p358 = scmp.ne.s32.totalorder %s343, %s357
      %p359 = scmp.eq.s32.totalorder %s102, 0
      %p360 = por %p358, %p359
      %s362 = sadd.s32 %s361, 1
      %p365 = scmp.eq.s32.totalorder %s96, 1
      %p366 = scmp.ne.s32.totalorder %s361, %s363
      %p367 = scmp.eq.s32.totalorder %s96, 0
      %p368 = por %p366, %p367
      %p369 = scmp.ne.s32.totalorder %s361, %s363
      %p370 = scmp.eq.s32.totalorder %s101, 1
      %p371 = por %p369, %p370
      %p372 = scmp.ne.s32.totalorder %s363, %s364
      %p373 = scmp.eq.s32.totalorder %s101, 0
      %p374 = por %p372, %p373
      %p375 = scmp.ne.s32.totalorder %s363, %s364
      %p376 = scmp.eq.s32.totalorder %s102, 1
      %p377 = por %p375, %p376
      %p379 = scmp.ne.s32.totalorder %s364, %s378
      %p380 = scmp.eq.s32.totalorder %s102, 0
      %p381 = por %p379, %p380
      %s383 = sadd.s32 %s382, 1
      %p386 = scmp.eq.s32.totalorder %s96, 1
      %p387 = scmp.ne.s32.totalorder %s382, %s384
      %p388 = scmp.eq.s32.totalorder %s96, 0
      %p389 = por %p387, %p388
      %p390 = scmp.ne.s32.totalorder %s382, %s384
      %p391 = scmp.eq.s32.totalorder %s101, 1
      %p392 = por %p390, %p391
      %p393 = scmp.ne.s32.totalorder %s384, %s385
      %p394 = scmp.eq.s32.totalorder %s101, 0
      %p395 = por %p393, %p394
      %p396 = scmp.ne.s32.totalorder %s384, %s385
      %p397 = scmp.eq.s32.totalorder %s102, 1
      %p398 = por %p396, %p397
      %p400 = scmp.ne.s32.totalorder %s385, %s399
      %p401 = scmp.eq.s32.totalorder %s102, 0
      %p402 = por %p400, %p401
      %s404 = sadd.s32 %s403, 1
      %p407 = scmp.eq.s32.totalorder %s96, 1
      %p408 = scmp.ne.s32.totalorder %s403, %s405
      %p409 = scmp.eq.s32.totalorder %s96, 0
      %p410 = por %p408, %p409
      %p411 = scmp.ne.s32.totalorder %s403, %s405
      %p412 = scmp.eq.s32.totalorder %s101, 1
      %p413 = por %p411, %p412
      %p414 = scmp.ne.s32.totalorder %s405, %s406
      %p415 = scmp.eq.s32.totalorder %s101, 0
      %p416 = por %p414, %p415
      %p417 = scmp.ne.s32.totalorder %s405, %s406
      %p418 = scmp.eq.s32.totalorder %s102, 1
      %p419 = por %p417, %p418
      %p421 = scmp.ne.s32.totalorder %s406, %s420
      %p422 = scmp.eq.s32.totalorder %s102, 0
      %p423 = por %p421, %p422
      %s425 = sadd.s32 %s424, 1
      %p428 = scmp.eq.s32.totalorder %s96, 1
      %p429 = scmp.ne.s32.totalorder %s424, %s426
      %p430 = scmp.eq.s32.totalorder %s96, 0
      %p431 = por %p429, %p430
      %p432 = scmp.ne.s32.totalorder %s424, %s426
      %p433 = scmp.eq.s32.totalorder %s101, 1
      %p434 = por %p432, %p433
      %p435 = scmp.ne.s32.totalorder %s426, %s427
      %p436 = scmp.eq.s32.totalorder %s101, 0
      %p437 = por %p435, %p436
      %p438 = scmp.ne.s32.totalorder %s426, %s427
      %p439 = scmp.eq.s32.totalorder %s102, 1
      %p440 = por %p438, %p439
      %p442 = scmp.ne.s32.totalorder %s427, %s441
      %p443 = scmp.eq.s32.totalorder %s102, 0
      %p444 = por %p442, %p443
      %s446 = sadd.s32 %s445, 1
      %p449 = scmp.eq.s32.totalorder %s96, 1
      %p450 = scmp.ne.s32.totalorder %s445, %s447
      %p451 = scmp.eq.s32.totalorder %s96, 0
      %p452 = por %p450, %p451
      %p453 = scmp.ne.s32.totalorder %s445, %s447
      %p454 = scmp.eq.s32.totalorder %s101, 1
      %p455 = por %p453, %p454
      %p456 = scmp.ne.s32.totalorder %s447, %s448
      %p457 = scmp.eq.s32.totalorder %s101, 0
      %p458 = por %p456, %p457
      %p459 = scmp.ne.s32.totalorder %s447, %s448
      %p460 = scmp.eq.s32.totalorder %s102, 1
      %p461 = por %p459, %p460
      %p463 = scmp.ne.s32.totalorder %s448, %s462
      %p464 = scmp.eq.s32.totalorder %s102, 0
      %p465 = por %p463, %p464
      %s467 = sadd.s32 %s466, 1
      %p470 = scmp.eq.s32.totalorder %s96, 1
      %p471 = scmp.ne.s32.totalorder %s466, %s468
      %p472 = scmp.eq.s32.totalorder %s96, 0
      %p473 = por %p471, %p472
      %p474 = scmp.ne.s32.totalorder %s466, %s468
      %p475 = scmp.eq.s32.totalorder %s101, 1
      %p476 = por %p474, %p475
      %p477 = scmp.ne.s32.totalorder %s468, %s469
      %p478 = scmp.eq.s32.totalorder %s101, 0
      %p479 = por %p477, %p478
      %p480 = scmp.ne.s32.totalorder %s468, %s469
      %p481 = scmp.eq.s32.totalorder %s102, 1
      %p482 = por %p480, %p481
      %p484 = scmp.ne.s32.totalorder %s469, %s483
      %p485 = scmp.eq.s32.totalorder %s102, 0
      %p486 = por %p484, %p485
      %s488 = sadd.s32 %s487, 1
      %p491 = scmp.eq.s32.totalorder %s96, 1
      %p492 = scmp.ne.s32.totalorder %s487, %s489
      %p493 = scmp.eq.s32.totalorder %s96, 0
      %p494 = por %p492, %p493
      %p495 = scmp.ne.s32.totalorder %s487, %s489
      %p496 = scmp.eq.s32.totalorder %s101, 1
      %p497 = por %p495, %p496
      %p498 = scmp.ne.s32.totalorder %s489, %s490
      %p499 = scmp.eq.s32.totalorder %s101, 0
      %p500 = por %p498, %p499
      %p501 = scmp.ne.s32.totalorder %s489, %s490
      %p502 = scmp.eq.s32.totalorder %s102, 1
      %p503 = por %p501, %p502
      %p505 = scmp.ne.s32.totalorder %s490, %s504
      %p506 = scmp.eq.s32.totalorder %s102, 0
      %p507 = por %p505, %p506
      %s509 = sadd.s32 %s508, 1
      %p512 = scmp.eq.s32.totalorder %s96, 1
      %p513 = scmp.ne.s32.totalorder %s508, %s510
      %p514 = scmp.eq.s32.totalorder %s96, 0
      %p515 = por %p513, %p514
      %p516 = scmp.ne.s32.totalorder %s508, %s510
      %p517 = scmp.eq.s32.totalorder %s101, 1
      %p518 = por %p516, %p517
      %p519 = scmp.ne.s32.totalorder %s510, %s511
      %p520 = scmp.eq.s32.totalorder %s101, 0
      %p521 = por %p519, %p520
      %p522 = scmp.ne.s32.totalorder %s510, %s511
      %p523 = scmp.eq.s32.totalorder %s102, 1
      %p524 = por %p522, %p523
      %p526 = scmp.ne.s32.totalorder %s511, %s525
      %p527 = scmp.eq.s32.totalorder %s102, 0
      %p528 = por %p526, %p527
      %s530 = sadd.s32 %s529, 1
      %p533 = scmp.eq.s32.totalorder %s96, 1
      %p534 = scmp.ne.s32.totalorder %s529, %s531
      %p535 = scmp.eq.s32.totalorder %s96, 0
      %p536 = por %p534, %p535
      %p537 = scmp.ne.s32.totalorder %s529, %s531
      %p538 = scmp.eq.s32.totalorder %s101, 1
      %p539 = por %p537, %p538
      %p540 = scmp.ne.s32.totalorder %s531, %s532
      %p541 = scmp.eq.s32.totalorder %s101, 0
      %p542 = por %p540, %p541
      %p543 = scmp.ne.s32.totalorder %s531, %s532
      %p544 = scmp.eq.s32.totalorder %s102, 1
      %p545 = por %p543, %p544
      %p547 = scmp.ne.s32.totalorder %s532, %s546
      %p548 = scmp.eq.s32.totalorder %s102, 0
      %p549 = por %p547, %p548
      %s551 = sadd.s32 %s550, 1
      %p554 = scmp.eq.s32.totalorder %s96, 1
      %p555 = scmp.ne.s32.totalorder %s550, %s552
      %p556 = scmp.eq.s32.totalorder %s96, 0
      %p557 = por %p555, %p556
      %p558 = scmp.ne.s32.totalorder %s550, %s552
      %p559 = scmp.eq.s32.totalorder %s101, 1
      %p560 = por %p558, %p559
      %p561 = scmp.ne.s32.totalorder %s552, %s553
      %p562 = scmp.eq.s32.totalorder %s101, 0
      %p563 = por %p561, %p562
      %p564 = scmp.ne.s32.totalorder %s552, %s553
      %p565 = scmp.eq.s32.totalorder %s102, 1
      %p566 = por %p564, %p565
      %p568 = scmp.ne.s32.totalorder %s553, %s567
      %p569 = scmp.eq.s32.totalorder %s102, 0
      %p570 = por %p568, %p569
      %s572 = sadd.s32 %s571, 1
      %p575 = scmp.eq.s32.totalorder %s96, 1
      %p576 = scmp.ne.s32.totalorder %s571, %s573
      %p577 = scmp.eq.s32.totalorder %s96, 0
      %p578 = por %p576, %p577
      %p579 = scmp.ne.s32.totalorder %s571, %s573
      %p580 = scmp.eq.s32.totalorder %s101, 1
      %p581 = por %p579, %p580
      %p582 = scmp.ne.s32.totalorder %s573, %s574
      %p583 = scmp.eq.s32.totalorder %s101, 0
      %p584 = por %p582, %p583
      %p585 = scmp.ne.s32.totalorder %s573, %s574
      %p586 = scmp.eq.s32.totalorder %s102, 1
      %p587 = por %p585, %p586
      %p589 = scmp.ne.s32.totalorder %s574, %s588
      %p590 = scmp.eq.s32.totalorder %s102, 0
      %p591 = por %p589, %p590
      %s593 = sadd.s32 %s592, 1
      %p596 = scmp.eq.s32.totalorder %s96, 1
      %p597 = scmp.ne.s32.totalorder %s592, %s594
      %p598 = scmp.eq.s32.totalorder %s96, 0
      %p599 = por %p597, %p598
      %p600 = scmp.ne.s32.totalorder %s592, %s594
      %p601 = scmp.eq.s32.totalorder %s101, 1
      %p602 = por %p600, %p601
      %p603 = scmp.ne.s32.totalorder %s594, %s595
      %p604 = scmp.eq.s32.totalorder %s101, 0
      %p605 = por %p603, %p604
      %p606 = scmp.ne.s32.totalorder %s594, %s595
      %p607 = scmp.eq.s32.totalorder %s102, 1
      %p608 = por %p606, %p607
      %p610 = scmp.ne.s32.totalorder %s595, %s609
      %p611 = scmp.eq.s32.totalorder %s102, 0
      %p612 = por %p610, %p611
      %s614 = sadd.s32 %s613, 1
      %p617 = scmp.eq.s32.totalorder %s96, 1
      %p618 = scmp.ne.s32.totalorder %s613, %s615
      %p619 = scmp.eq.s32.totalorder %s96, 0
      %p620 = por %p618, %p619
      %p621 = scmp.ne.s32.totalorder %s613, %s615
      %p622 = scmp.eq.s32.totalorder %s101, 1
      %p623 = por %p621, %p622
      %p624 = scmp.ne.s32.totalorder %s615, %s616
      %p625 = scmp.eq.s32.totalorder %s101, 0
      %p626 = por %p624, %p625
      %p627 = scmp.ne.s32.totalorder %s615, %s616
      %p628 = scmp.eq.s32.totalorder %s102, 1
      %p629 = por %p627, %p628
      %p631 = scmp.ne.s32.totalorder %s616, %s630
      %p632 = scmp.eq.s32.totalorder %s102, 0
      %p633 = por %p631, %p632
      %s635 = sadd.s32 %s634, 1
      %p638 = scmp.eq.s32.totalorder %s96, 1
      %p639 = scmp.ne.s32.totalorder %s634, %s636
      %p640 = scmp.eq.s32.totalorder %s96, 0
      %p641 = por %p639, %p640
      %p642 = scmp.ne.s32.totalorder %s634, %s636
      %p643 = scmp.eq.s32.totalorder %s101, 1
      %p644 = por %p642, %p643
      %p645 = scmp.ne.s32.totalorder %s636, %s637
      %p646 = scmp.eq.s32.totalorder %s101, 0
      %p647 = por %p645, %p646
      %p648 = scmp.ne.s32.totalorder %s636, %s637
      %p649 = scmp.eq.s32.totalorder %s102, 1
      %p650 = por %p648, %p649
      %p652 = scmp.ne.s32.totalorder %s637, %s651
      %p653 = scmp.eq.s32.totalorder %s102, 0
      %p654 = por %p652, %p653
      %s656 = sadd.s32 %s655, 1
      %p659 = scmp.eq.s32.totalorder %s96, 1
      %p660 = scmp.ne.s32.totalorder %s655, %s657
      %p661 = scmp.eq.s32.totalorder %s96, 0
      %p662 = por %p660, %p661
      %p663 = scmp.ne.s32.totalorder %s655, %s657
      %p664 = scmp.eq.s32.totalorder %s101, 1
      %p665 = por %p663, %p664
      %p666 = scmp.ne.s32.totalorder %s657, %s658
      %p667 = scmp.eq.s32.totalorder %s101, 0
      %p668 = por %p666, %p667
      %p669 = scmp.ne.s32.totalorder %s657, %s658
      %p670 = scmp.eq.s32.totalorder %s102, 1
      %p671 = por %p669, %p670
      %p673 = scmp.ne.s32.totalorder %s658, %s672
      %p674 = scmp.eq.s32.totalorder %s102, 0
      %p675 = por %p673, %p674
      %s677 = sadd.s32 %s676, 1
      %p680 = scmp.eq.s32.totalorder %s96, 1
      %p681 = scmp.ne.s32.totalorder %s676, %s678
      %p682 = scmp.eq.s32.totalorder %s96, 0
      %p683 = por %p681, %p682
      %p684 = scmp.ne.s32.totalorder %s676, %s678
      %p685 = scmp.eq.s32.totalorder %s101, 1
      %p686 = por %p684, %p685
      %p687 = scmp.ne.s32.totalorder %s678, %s679
      %p688 = scmp.eq.s32.totalorder %s101, 0
      %p689 = por %p687, %p688
      %p690 = scmp.ne.s32.totalorder %s678, %s679
      %p691 = scmp.eq.s32.totalorder %s102, 1
      %p692 = por %p690, %p691
      %p694 = scmp.ne.s32.totalorder %s679, %s693
      %p695 = scmp.eq.s32.totalorder %s102, 0
      %p696 = por %p694, %p695
      %s698 = sadd.s32 %s697, 1
      %p701 = scmp.eq.s32.totalorder %s96, 1
      %p702 = scmp.ne.s32.totalorder %s697, %s699
      %p703 = scmp.eq.s32.totalorder %s96, 0
      %p704 = por %p702, %p703
      %p705 = scmp.ne.s32.totalorder %s697, %s699
      %p706 = scmp.eq.s32.totalorder %s101, 1
      %p707 = por %p705, %p706
      %p708 = scmp.ne.s32.totalorder %s699, %s700
      %p709 = scmp.eq.s32.totalorder %s101, 0
      %p710 = por %p708, %p709
      %p711 = scmp.ne.s32.totalorder %s699, %s700
      %p712 = scmp.eq.s32.totalorder %s102, 1
      %p713 = por %p711, %p712
      %p715 = scmp.ne.s32.totalorder %s700, %s714
      %p716 = scmp.eq.s32.totalorder %s102, 0
      %p717 = por %p715, %p716
      %s719 = sadd.s32 %s718, 1
      %p722 = scmp.eq.s32.totalorder %s96, 1
      %p723 = scmp.ne.s32.totalorder %s718, %s720
      %p724 = scmp.eq.s32.totalorder %s96, 0
      %p725 = por %p723, %p724
      %p726 = scmp.ne.s32.totalorder %s718, %s720
      %p727 = scmp.eq.s32.totalorder %s101, 1
      %p728 = por %p726, %p727
      %p729 = scmp.ne.s32.totalorder %s720, %s721
      %p730 = scmp.eq.s32.totalorder %s101, 0
      %p731 = por %p729, %p730
      %p732 = scmp.ne.s32.totalorder %s720, %s721
      %p733 = scmp.eq.s32.totalorder %s102, 1
      %p734 = por %p732, %p733
      %p736 = scmp.ne.s32.totalorder %s721, %s735
      %p737 = scmp.eq.s32.totalorder %s102, 0
      %p738 = por %p736, %p737
      %s740 = sadd.s32 %s739, 1
      %p743 = scmp.eq.s32.totalorder %s96, 1
      %p744 = scmp.ne.s32.totalorder %s739, %s741
      %p745 = scmp.eq.s32.totalorder %s96, 0
      %p746 = por %p744, %p745
      %p747 = scmp.ne.s32.totalorder %s739, %s741
      %p748 = scmp.eq.s32.totalorder %s101, 1
      %p749 = por %p747, %p748
      %p750 = scmp.ne.s32.totalorder %s741, %s742
      %p751 = scmp.eq.s32.totalorder %s101, 0
      %p752 = por %p750, %p751
      %p753 = scmp.ne.s32.totalorder %s741, %s742
      %p754 = scmp.eq.s32.totalorder %s102, 1
      %p755 = por %p753, %p754
      %p757 = scmp.ne.s32.totalorder %s742, %s756
      %p758 = scmp.eq.s32.totalorder %s102, 0
      %p759 = por %p757, %p758
      %s761 = sadd.s32 %s760, 1
      %p764 = scmp.eq.s32.totalorder %s96, 1
      %p765 = scmp.ne.s32.totalorder %s760, %s762
      %p766 = scmp.eq.s32.totalorder %s96, 0
      %p767 = por %p765, %p766
      %p768 = scmp.ne.s32.totalorder %s760, %s762
      %p769 = scmp.eq.s32.totalorder %s101, 1
      %p770 = por %p768, %p769
      %p771 = scmp.ne.s32.totalorder %s762, %s763
      %p772 = scmp.eq.s32.totalorder %s101, 0
      %p773 = por %p771, %p772
      %p774 = scmp.ne.s32.totalorder %s762, %s763
      %p775 = scmp.eq.s32.totalorder %s102, 1
      %p776 = por %p774, %p775
      %p778 = scmp.ne.s32.totalorder %s763, %s777
      %p779 = scmp.eq.s32.totalorder %s102, 0
      %p780 = por %p778, %p779
      %s782 = sadd.s32 %s781, 1
      %p785 = scmp.eq.s32.totalorder %s96, 1
      %p786 = scmp.ne.s32.totalorder %s781, %s783
      %p787 = scmp.eq.s32.totalorder %s96, 0
      %p788 = por %p786, %p787
      %p789 = scmp.ne.s32.totalorder %s781, %s783
      %p790 = scmp.eq.s32.totalorder %s101, 1
      %p791 = por %p789, %p790
      %p792 = scmp.ne.s32.totalorder %s783, %s784
      %p793 = scmp.eq.s32.totalorder %s101, 0
      %p794 = por %p792, %p793
      %p795 = scmp.ne.s32.totalorder %s783, %s784
      %p796 = scmp.eq.s32.totalorder %s102, 1
      %p797 = por %p795, %p796
      %p799 = scmp.ne.s32.totalorder %s784, %s798
      %p800 = scmp.eq.s32.totalorder %s102, 0
      %p801 = por %p799, %p800
      %s803 = sadd.s32 %s802, 1
      %p806 = scmp.eq.s32.totalorder %s96, 1
      %p807 = scmp.ne.s32.totalorder %s802, %s804
      %p808 = scmp.eq.s32.totalorder %s96, 0
      %p809 = por %p807, %p808
      %p810 = scmp.ne.s32.totalorder %s802, %s804
      %p811 = scmp.eq.s32.totalorder %s101, 1
      %p812 = por %p810, %p811
      %p813 = scmp.ne.s32.totalorder %s804, %s805
      %p814 = scmp.eq.s32.totalorder %s101, 0
      %p815 = por %p813, %p814
      %p816 = scmp.ne.s32.totalorder %s804, %s805
      %p817 = scmp.eq.s32.totalorder %s102, 1
      %p818 = por %p816, %p817
      %p820 = scmp.ne.s32.totalorder %s805, %s819
      %p821 = scmp.eq.s32.totalorder %s102, 0
      %p822 = por %p820, %p821
      %s824 = sadd.s32 %s823, 1
      %p827 = scmp.eq.s32.totalorder %s96, 1
      %p828 = scmp.ne.s32.totalorder %s823, %s825
      %p829 = scmp.eq.s32.totalorder %s96, 0
      %p830 = por %p828, %p829
      %p831 = scmp.ne.s32.totalorder %s823, %s825
      %p832 = scmp.eq.s32.totalorder %s101, 1
      %p833 = por %p831, %p832
      %p834 = scmp.ne.s32.totalorder %s825, %s826
      %p835 = scmp.eq.s32.totalorder %s101, 0
      %p836 = por %p834, %p835
      %p837 = scmp.ne.s32.totalorder %s825, %s826
      %p838 = scmp.eq.s32.totalorder %s102, 1
      %p839 = por %p837, %p838
      %p841 = scmp.ne.s32.totalorder %s826, %s840
      %p842 = scmp.eq.s32.totalorder %s102, 0
      %p843 = por %p841, %p842
      %s845 = sadd.s32 %s844, 1
      %p848 = scmp.eq.s32.totalorder %s96, 1
      %p849 = scmp.ne.s32.totalorder %s844, %s846
      %p850 = scmp.eq.s32.totalorder %s96, 0
      %p851 = por %p849, %p850
      %p852 = scmp.ne.s32.totalorder %s844, %s846
      %p853 = scmp.eq.s32.totalorder %s101, 1
      %p854 = por %p852, %p853
      %p855 = scmp.ne.s32.totalorder %s846, %s847
      %p856 = scmp.eq.s32.totalorder %s101, 0
      %p857 = por %p855, %p856
      %p858 = scmp.ne.s32.totalorder %s846, %s847
      %p859 = scmp.eq.s32.totalorder %s102, 1
      %p860 = por %p858, %p859
      %p862 = scmp.ne.s32.totalorder %s847, %s861
      %p863 = scmp.eq.s32.totalorder %s102, 0
      %p864 = por %p862, %p863
      %s866 = sadd.s32 %s865, 1
      %p869 = scmp.eq.s32.totalorder %s96, 1
      %p870 = scmp.ne.s32.totalorder %s865, %s867
      %p871 = scmp.eq.s32.totalorder %s96, 0
      %p872 = por %p870, %p871
      %p873 = scmp.ne.s32.totalorder %s865, %s867
      %p874 = scmp.eq.s32.totalorder %s101, 1
      %p875 = por %p873, %p874
      %p876 = scmp.ne.s32.totalorder %s867, %s868
      %p877 = scmp.eq.s32.totalorder %s101, 0
      %p878 = por %p876, %p877
      %p879 = scmp.ne.s32.totalorder %s867, %s868
      %p880 = scmp.eq.s32.totalorder %s102, 1
      %p881 = por %p879, %p880
      %p883 = scmp.ne.s32.totalorder %s868, %s882
      %p884 = scmp.eq.s32.totalorder %s102, 0
      %p885 = por %p883, %p884
      %s887 = sadd.s32 %s886, 1
      %p890 = scmp.eq.s32.totalorder %s96, 1
      %p891 = scmp.ne.s32.totalorder %s886, %s888
      %p892 = scmp.eq.s32.totalorder %s96, 0
      %p893 = por %p891, %p892
      %p894 = scmp.ne.s32.totalorder %s886, %s888
      %p895 = scmp.eq.s32.totalorder %s101, 1
      %p896 = por %p894, %p895
      %p897 = scmp.ne.s32.totalorder %s888, %s889
      %p898 = scmp.eq.s32.totalorder %s101, 0
      %p899 = por %p897, %p898
      %p900 = scmp.ne.s32.totalorder %s888, %s889
      %p901 = scmp.eq.s32.totalorder %s102, 1
      %p902 = por %p900, %p901
      %p904 = scmp.ne.s32.totalorder %s889, %s903
      %p905 = scmp.eq.s32.totalorder %s102, 0
      %p906 = por %p904, %p905
      %s908 = sadd.s32 %s907, 1
      %p911 = scmp.eq.s32.totalorder %s96, 1
      %p912 = scmp.ne.s32.totalorder %s907, %s909
      %p913 = scmp.eq.s32.totalorder %s96, 0
      %p914 = por %p912, %p913
      %p915 = scmp.ne.s32.totalorder %s907, %s909
      %p916 = scmp.eq.s32.totalorder %s101, 1
      %p917 = por %p915, %p916
      %p918 = scmp.ne.s32.totalorder %s909, %s910
      %p919 = scmp.eq.s32.totalorder %s101, 0
      %p920 = por %p918, %p919
      %p921 = scmp.ne.s32.totalorder %s909, %s910
      %p922 = scmp.eq.s32.totalorder %s102, 1
      %p923 = por %p921, %p922
      %p925 = scmp.ne.s32.totalorder %s910, %s924
      %p926 = scmp.eq.s32.totalorder %s102, 0
      %p927 = por %p925, %p926
      %s929 = sadd.s32 %s928, 1
      %p932 = scmp.eq.s32.totalorder %s96, 1
      %p933 = scmp.ne.s32.totalorder %s928, %s930
      %p934 = scmp.eq.s32.totalorder %s96, 0
      %p935 = por %p933, %p934
      %p936 = scmp.ne.s32.totalorder %s928, %s930
      %p937 = scmp.eq.s32.totalorder %s101, 1
      %p938 = por %p936, %p937
      %p939 = scmp.ne.s32.totalorder %s930, %s931
      %p940 = scmp.eq.s32.totalorder %s101, 0
      %p941 = por %p939, %p940
      %p942 = scmp.ne.s32.totalorder %s930, %s931
      %p943 = scmp.eq.s32.totalorder %s102, 1
      %p944 = por %p942, %p943
      %p946 = scmp.ne.s32.totalorder %s931, %s945
      %p947 = scmp.eq.s32.totalorder %s102, 0
      %p948 = por %p946, %p947
      %s949 = ssub.s32 %s96, %s103
      %p950 = scmp.eq.s32.totalorder %s949, 0
      %s952 = sadd.s32 %s951, 1
      %s953 = scalar_select %p950, %s951, %s952
      %p956 = pneg %p950
      %p957 = scmp.eq.s32.totalorder %s96, 1
      %p958 = por %p956, %p957
      %p959 = scmp.ne.s32.totalorder %s951, %s954
      %p960 = scmp.eq.s32.totalorder %s96, 0
      %p961 = por %p959, %p960
      %p962 = scmp.ne.s32.totalorder %s951, %s954
      %p963 = scmp.eq.s32.totalorder %s101, 1
      %p964 = por %p962, %p963
      %p965 = scmp.ne.s32.totalorder %s954, %s955
      %p966 = scmp.eq.s32.totalorder %s101, 0
      %p967 = por %p965, %p966
      %p968 = scmp.ne.s32.totalorder %s954, %s955
      %p969 = scmp.eq.s32.totalorder %s102, 1
      %p970 = por %p968, %p969
      %p972 = scmp.ne.s32.totalorder %s955, %s971
      %p973 = scmp.eq.s32.totalorder %s102, 0
      %p974 = por %p972, %p973
      %p975 = scmp.le.s32.totalorder 1, %s96
      %p976 = scmp.lt.s32.totalorder %s96, 3
      %p977 = pnand %p975, %p976
      %p978 = pneg %p977
      // Predicated region
      $region9: #{gnn_nl_forward.1} parent=5 // pred_check
        _
      $region10: #{gnn_nl_forward.1} parent=5 // pred_check_branch
        %980 = sbr.rel (%p977) target = $region12
      $region11: #{gnn_nl_forward.1} parent=5 // pred_region
        %s981 = ssub.s32 %s96, 1
        // Predicated region
        $region13: #{gnn_nl_forward.1} parent=11 // pred_check
          %p982 = pneg %p143
        $region14: #{gnn_nl_forward.1} parent=11 // pred_check_branch
          %984 = sbr.rel (%p982) target = $region16
        $region15: #{gnn_nl_forward.1} parent=11 // pred_region
          _
        $region16: #{gnn_nl_forward.1} parent=11 // pred_fallthru
          _
        // Predicated region
        $region17: #{gnn_nl_forward.1} parent=11 // pred_check
          %p985 = pneg %p164
        $region18: #{gnn_nl_forward.1} parent=11 // pred_check_branch
          %987 = sbr.rel (%p985) target = $region20
        $region19: #{gnn_nl_forward.1} parent=11 // pred_region
          _
        $region20: #{gnn_nl_forward.1} parent=11 // pred_fallthru
          _
        // Predicated region
        $region21: #{gnn_nl_forward.1} parent=11 // pred_check
          %p988 = pneg %p185
        $region22: #{gnn_nl_forward.1} parent=11 // pred_check_branch
          %990 = sbr.rel (%p988) target = $region24
        $region23: #{gnn_nl_forward.1} parent=11 // pred_region
          _
        $region24: #{gnn_nl_forward.1} parent=11 // pred_fallthru
          _
        // Predicated region
        $region25: #{gnn_nl_forward.1} parent=11 // pred_check
          %p991 = pneg %p206
        $region26: #{gnn_nl_forward.1} parent=11 // pred_check_branch
          %993 = sbr.rel (%p991) target = $region28
        $region27: #{gnn_nl_forward.1} parent=11 // pred_region
          _
        $region28: #{gnn_nl_forward.1} parent=11 // pred_fallthru
          _
        // Predicated region
        $region29: #{gnn_nl_forward.1} parent=11 // pred_check
          %p994 = pneg %p227
        $region30: #{gnn_nl_forward.1} parent=11 // pred_check_branch
          %996 = sbr.rel (%p994) target = $region32
        $region31: #{gnn_nl_forward.1} parent=11 // pred_region
          _
        $region32: #{gnn_nl_forward.1} parent=11 // pred_fallthru
          _
        // Predicated region
        $region33: #{gnn_nl_forward.1} parent=11 // pred_check
          %p997 = pneg %p248
        $region34: #{gnn_nl_forward.1} parent=11 // pred_check_branch
          %999 = sbr.rel (%p997) target = $region36
        $region35: #{gnn_nl_forward.1} parent=11 // pred_region
          _
        $region36: #{gnn_nl_forward.1} parent=11 // pred_fallthru
          _
        // Predicated region
        $region37: #{gnn_nl_forward.1} parent=11 // pred_check
          %p1000 = pneg %p269
        $region38: #{gnn_nl_forward.1} parent=11 // pred_check_branch
          %1002 = sbr.rel (%p1000) target = $region40
        $region39: #{gnn_nl_forward.1} parent=11 // pred_region
          _
        $region40: #{gnn_nl_forward.1} parent=11 // pred_fallthru
          _
        // Predicated region
        $region41: #{gnn_nl_forward.1} parent=11 // pred_check
          %p1003 = pneg %p290
        $region42: #{gnn_nl_forward.1} parent=11 // pred_check_branch
          %1005 = sbr.rel (%p1003) target = $region44
        $region43: #{gnn_nl_forward.1} parent=11 // pred_region
          _
        $region44: #{gnn_nl_forward.1} parent=11 // pred_fallthru
          _
        // Predicated region
        $region45: #{gnn_nl_forward.1} parent=11 // pred_check
          %p1006 = pneg %p311
        $region46: #{gnn_nl_forward.1} parent=11 // pred_check_branch
          %1008 = sbr.rel (%p1006) target = $region48
        $region47: #{gnn_nl_forward.1} parent=11 // pred_region
          _
        $region48: #{gnn_nl_forward.1} parent=11 // pred_fallthru
          _
        // Predicated region
        $region49: #{gnn_nl_forward.1} parent=11 // pred_check
          %p1009 = pneg %p332
        $region50: #{gnn_nl_forward.1} parent=11 // pred_check_branch
          %1011 = sbr.rel (%p1009) target = $region52
        $region51: #{gnn_nl_forward.1} parent=11 // pred_region
          _
        $region52: #{gnn_nl_forward.1} parent=11 // pred_fallthru
          _
        // Predicated region
        $region53: #{gnn_nl_forward.1} parent=11 // pred_check
          %p1012 = pneg %p353
        $region54: #{gnn_nl_forward.1} parent=11 // pred_check_branch
          %1014 = sbr.rel (%p1012) target = $region56
        $region55: #{gnn_nl_forward.1} parent=11 // pred_region
          _
        $region56: #{gnn_nl_forward.1} parent=11 // pred_fallthru
          _
        // Predicated region
        $region57: #{gnn_nl_forward.1} parent=11 // pred_check
          %p1015 = pneg %p374
        $region58: #{gnn_nl_forward.1} parent=11 // pred_check_branch
          %1017 = sbr.rel (%p1015) target = $region60
        $region59: #{gnn_nl_forward.1} parent=11 // pred_region
          _
        $region60: #{gnn_nl_forward.1} parent=11 // pred_fallthru
          _
        // Predicated region
        $region61: #{gnn_nl_forward.1} parent=11 // pred_check
          %p1018 = pneg %p395
        $region62: #{gnn_nl_forward.1} parent=11 // pred_check_branch
          %1020 = sbr.rel (%p1018) target = $region64
        $region63: #{gnn_nl_forward.1} parent=11 // pred_region
          _
        $region64: #{gnn_nl_forward.1} parent=11 // pred_fallthru
          _
        // Predicated region
        $region65: #{gnn_nl_forward.1} parent=11 // pred_check
          %p1021 = pneg %p416
        $region66: #{gnn_nl_forward.1} parent=11 // pred_check_branch
          %1023 = sbr.rel (%p1021) target = $region68
        $region67: #{gnn_nl_forward.1} parent=11 // pred_region
          _
        $region68: #{gnn_nl_forward.1} parent=11 // pred_fallthru
          _
        // Predicated region
        $region69: #{gnn_nl_forward.1} parent=11 // pred_check
          %p1024 = pneg %p437
        $region70: #{gnn_nl_forward.1} parent=11 // pred_check_branch
          %1026 = sbr.rel (%p1024) target = $region72
        $region71: #{gnn_nl_forward.1} parent=11 // pred_region
          _
        $region72: #{gnn_nl_forward.1} parent=11 // pred_fallthru
          _
        // Predicated region
        $region73: #{gnn_nl_forward.1} parent=11 // pred_check
          %p1027 = pneg %p458
        $region74: #{gnn_nl_forward.1} parent=11 // pred_check_branch
          %1029 = sbr.rel (%p1027) target = $region76
        $region75: #{gnn_nl_forward.1} parent=11 // pred_region
          _
        $region76: #{gnn_nl_forward.1} parent=11 // pred_fallthru
          _
        // Predicated region
        $region77: #{gnn_nl_forward.1} parent=11 // pred_check
          %p1030 = pneg %p479
        $region78: #{gnn_nl_forward.1} parent=11 // pred_check_branch
          %1032 = sbr.rel (%p1030) target = $region80
        $region79: #{gnn_nl_forward.1} parent=11 // pred_region
          _
        $region80: #{gnn_nl_forward.1} parent=11 // pred_fallthru
          _
        // Predicated region
        $region81: #{gnn_nl_forward.1} parent=11 // pred_check
          %p1033 = pneg %p500
        $region82: #{gnn_nl_forward.1} parent=11 // pred_check_branch
          %1035 = sbr.rel (%p1033) target = $region84
        $region83: #{gnn_nl_forward.1} parent=11 // pred_region
          _
        $region84: #{gnn_nl_forward.1} parent=11 // pred_fallthru
          _
        // Predicated region
        $region85: #{gnn_nl_forward.1} parent=11 // pred_check
          %p1036 = pneg %p521
        $region86: #{gnn_nl_forward.1} parent=11 // pred_check_branch
          %1038 = sbr.rel (%p1036) target = $region88
        $region87: #{gnn_nl_forward.1} parent=11 // pred_region
          _
        $region88: #{gnn_nl_forward.1} parent=11 // pred_fallthru
          _
        // Predicated region
        $region89: #{gnn_nl_forward.1} parent=11 // pred_check
          %p1039 = pneg %p542
        $region90: #{gnn_nl_forward.1} parent=11 // pred_check_branch
          %1041 = sbr.rel (%p1039) target = $region92
        $region91: #{gnn_nl_forward.1} parent=11 // pred_region
          _
        $region92: #{gnn_nl_forward.1} parent=11 // pred_fallthru
          _
        // Predicated region
        $region93: #{gnn_nl_forward.1} parent=11 // pred_check
          %p1042 = pneg %p563
        $region94: #{gnn_nl_forward.1} parent=11 // pred_check_branch
          %1044 = sbr.rel (%p1042) target = $region96
        $region95: #{gnn_nl_forward.1} parent=11 // pred_region
          _
        $region96: #{gnn_nl_forward.1} parent=11 // pred_fallthru
          _
        // Predicated region
        $region97: #{gnn_nl_forward.1} parent=11 // pred_check
          %p1045 = pneg %p584
        $region98: #{gnn_nl_forward.1} parent=11 // pred_check_branch
          %1047 = sbr.rel (%p1045) target = $region100
        $region99: #{gnn_nl_forward.1} parent=11 // pred_region
          _
        $region100: #{gnn_nl_forward.1} parent=11 // pred_fallthru
          _
        // Predicated region
        $region101: #{gnn_nl_forward.1} parent=11 // pred_check
          %p1048 = pneg %p605
        $region102: #{gnn_nl_forward.1} parent=11 // pred_check_branch
          %1050 = sbr.rel (%p1048) target = $region104
        $region103: #{gnn_nl_forward.1} parent=11 // pred_region
          _
        $region104: #{gnn_nl_forward.1} parent=11 // pred_fallthru
          _
        // Predicated region
        $region105: #{gnn_nl_forward.1} parent=11 // pred_check
          %p1051 = pneg %p626
        $region106: #{gnn_nl_forward.1} parent=11 // pred_check_branch
          %1053 = sbr.rel (%p1051) target = $region108
        $region107: #{gnn_nl_forward.1} parent=11 // pred_region
          _
        $region108: #{gnn_nl_forward.1} parent=11 // pred_fallthru
          _
        // Predicated region
        $region109: #{gnn_nl_forward.1} parent=11 // pred_check
          %p1054 = pneg %p647
        $region110: #{gnn_nl_forward.1} parent=11 // pred_check_branch
          %1056 = sbr.rel (%p1054) target = $region112
        $region111: #{gnn_nl_forward.1} parent=11 // pred_region
          _
        $region112: #{gnn_nl_forward.1} parent=11 // pred_fallthru
          _
        // Predicated region
        $region113: #{gnn_nl_forward.1} parent=11 // pred_check
          %p1057 = pneg %p668
        $region114: #{gnn_nl_forward.1} parent=11 // pred_check_branch
          %1059 = sbr.rel (%p1057) target = $region116
        $region115: #{gnn_nl_forward.1} parent=11 // pred_region
          _
        $region116: #{gnn_nl_forward.1} parent=11 // pred_fallthru
          _
        // Predicated region
        $region117: #{gnn_nl_forward.1} parent=11 // pred_check
          %p1060 = pneg %p689
        $region118: #{gnn_nl_forward.1} parent=11 // pred_check_branch
          %1062 = sbr.rel (%p1060) target = $region120
        $region119: #{gnn_nl_forward.1} parent=11 // pred_region
          _
        $region120: #{gnn_nl_forward.1} parent=11 // pred_fallthru
          _
        // Predicated region
        $region121: #{gnn_nl_forward.1} parent=11 // pred_check
          %p1063 = pneg %p710
        $region122: #{gnn_nl_forward.1} parent=11 // pred_check_branch
          %1065 = sbr.rel (%p1063) target = $region124
        $region123: #{gnn_nl_forward.1} parent=11 // pred_region
          _
        $region124: #{gnn_nl_forward.1} parent=11 // pred_fallthru
          _
        // Predicated region
        $region125: #{gnn_nl_forward.1} parent=11 // pred_check
          %p1066 = pneg %p731
        $region126: #{gnn_nl_forward.1} parent=11 // pred_check_branch
          %1068 = sbr.rel (%p1066) target = $region128
        $region127: #{gnn_nl_forward.1} parent=11 // pred_region
          _
        $region128: #{gnn_nl_forward.1} parent=11 // pred_fallthru
          _
        // Predicated region
        $region129: #{gnn_nl_forward.1} parent=11 // pred_check
          %p1069 = pneg %p752
        $region130: #{gnn_nl_forward.1} parent=11 // pred_check_branch
          %1071 = sbr.rel (%p1069) target = $region132
        $region131: #{gnn_nl_forward.1} parent=11 // pred_region
          _
        $region132: #{gnn_nl_forward.1} parent=11 // pred_fallthru
          _
        // Predicated region
        $region133: #{gnn_nl_forward.1} parent=11 // pred_check
          %p1072 = pneg %p773
        $region134: #{gnn_nl_forward.1} parent=11 // pred_check_branch
          %1074 = sbr.rel (%p1072) target = $region136
        $region135: #{gnn_nl_forward.1} parent=11 // pred_region
          _
        $region136: #{gnn_nl_forward.1} parent=11 // pred_fallthru
          _
        // Predicated region
        $region137: #{gnn_nl_forward.1} parent=11 // pred_check
          %p1075 = pneg %p794
        $region138: #{gnn_nl_forward.1} parent=11 // pred_check_branch
          %1077 = sbr.rel (%p1075) target = $region140
        $region139: #{gnn_nl_forward.1} parent=11 // pred_region
          _
        $region140: #{gnn_nl_forward.1} parent=11 // pred_fallthru
          _
        // Predicated region
        $region141: #{gnn_nl_forward.1} parent=11 // pred_check
          %p1078 = pneg %p815
        $region142: #{gnn_nl_forward.1} parent=11 // pred_check_branch
          %1080 = sbr.rel (%p1078) target = $region144
        $region143: #{gnn_nl_forward.1} parent=11 // pred_region
          _
        $region144: #{gnn_nl_forward.1} parent=11 // pred_fallthru
          _
        // Predicated region
        $region145: #{gnn_nl_forward.1} parent=11 // pred_check
          %p1081 = pneg %p836
        $region146: #{gnn_nl_forward.1} parent=11 // pred_check_branch
          %1083 = sbr.rel (%p1081) target = $region148
        $region147: #{gnn_nl_forward.1} parent=11 // pred_region
          _
        $region148: #{gnn_nl_forward.1} parent=11 // pred_fallthru
          _
        // Predicated region
        $region149: #{gnn_nl_forward.1} parent=11 // pred_check
          %p1084 = pneg %p857
        $region150: #{gnn_nl_forward.1} parent=11 // pred_check_branch
          %1086 = sbr.rel (%p1084) target = $region152
        $region151: #{gnn_nl_forward.1} parent=11 // pred_region
          _
        $region152: #{gnn_nl_forward.1} parent=11 // pred_fallthru
          _
        // Predicated region
        $region153: #{gnn_nl_forward.1} parent=11 // pred_check
          %p1087 = pneg %p878
        $region154: #{gnn_nl_forward.1} parent=11 // pred_check_branch
          %1089 = sbr.rel (%p1087) target = $region156
        $region155: #{gnn_nl_forward.1} parent=11 // pred_region
          _
        $region156: #{gnn_nl_forward.1} parent=11 // pred_fallthru
          _
        // Predicated region
        $region157: #{gnn_nl_forward.1} parent=11 // pred_check
          %p1090 = pneg %p899
        $region158: #{gnn_nl_forward.1} parent=11 // pred_check_branch
          %1092 = sbr.rel (%p1090) target = $region160
        $region159: #{gnn_nl_forward.1} parent=11 // pred_region
          _
        $region160: #{gnn_nl_forward.1} parent=11 // pred_fallthru
          _
        // Predicated region
        $region161: #{gnn_nl_forward.1} parent=11 // pred_check
          %p1093 = pneg %p920
        $region162: #{gnn_nl_forward.1} parent=11 // pred_check_branch
          %1095 = sbr.rel (%p1093) target = $region164
        $region163: #{gnn_nl_forward.1} parent=11 // pred_region
          _
        $region164: #{gnn_nl_forward.1} parent=11 // pred_fallthru
          _
        // Predicated region
        $region165: #{gnn_nl_forward.1} parent=11 // pred_check
          %p1096 = pneg %p941
        $region166: #{gnn_nl_forward.1} parent=11 // pred_check_branch
          %1098 = sbr.rel (%p1096) target = $region168
        $region167: #{gnn_nl_forward.1} parent=11 // pred_region
          _
        $region168: #{gnn_nl_forward.1} parent=11 // pred_fallthru
          _
      $region12: #{gnn_nl_forward.1} parent=5 // pred_fallthru
        _
      %p1099 = scmp.lt.s32.totalorder %s96, 2
      // Predicated region
      $region169: #{gnn_nl_forward.1} parent=5 // pred_check
        %p1100 = pneg %p1099
      $region170: #{gnn_nl_forward.1} parent=5 // pred_check_branch
        %1102 = sbr.rel (%p1100) target = $region172
      $region171: #{gnn_nl_forward.1} parent=5 // pred_region
        // Predicated region
        $region173: #{gnn_nl_forward.1} parent=171 // pred_check
          %p1103 = pneg %p116
        $region174: #{gnn_nl_forward.1} parent=171 // pred_check_branch
          %1105 = sbr.rel (%p1103) target = $region176
        $region175: #{gnn_nl_forward.1} parent=171 // pred_region
          %p1106 = scmp.lt.s32.totalorder %s96, 1
          %s1107 = scalar_select %p1106, %s96, 1
          %s1108 = smul.addr %s1107, 8
          %s1109 = scalar_lea.vmem %s1, %s1108
        $region176: #{gnn_nl_forward.1} parent=171 // pred_fallthru
          _
      $region172: #{gnn_nl_forward.1} parent=5 // pred_fallthru
        _
      %p1110 = scmp.le.s32.totalorder 1, %s96
      %p1111 = scmp.lt.s32.totalorder %s96, 3
      %p1112 = pnand %p1110, %p1111
      %p1113 = pneg %p1112
      // Predicated region
      $region177: #{gnn_nl_forward.1} parent=5 // pred_check
        _
      $region178: #{gnn_nl_forward.1} parent=5 // pred_check_branch
        %1115 = sbr.rel (%p1112) target = $region180
      $region179: #{gnn_nl_forward.1} parent=5 // pred_region
        %s1116 = ssub.s32 %s96, 1
        %p1117 = scmp.lt.s32.totalorder %s101, 1
        %s1118 = scalar_select %p1117, %s101, 1
        %s1119 = smul.addr %s1118, 8
        %s1120 = scalar_lea.vmem %s1, %s1119
        %p1121 = pneg %p122
        %p1122 = pneg %p119
        %p1123 = pneg %p143
        %p1124 = pneg %p140
        %p1125 = pneg %p164
        %p1126 = pneg %p161
        %p1127 = pneg %p185
        %p1128 = pneg %p182
        %p1129 = pneg %p206
        %p1130 = pneg %p203
        %p1131 = pneg %p227
        %p1132 = pneg %p224
        %p1133 = pneg %p248
        %p1134 = pneg %p245
        %p1135 = pneg %p269
        %p1136 = pneg %p266
        %p1137 = pneg %p290
        %p1138 = pneg %p287
        %p1139 = pneg %p311
        %p1140 = pneg %p308
        %p1141 = pneg %p332
        %p1142 = pneg %p329
        %p1143 = pneg %p353
        %p1144 = pneg %p350
        %p1145 = pneg %p374
        %p1146 = pneg %p371
        %p1147 = pneg %p395
        %p1148 = pneg %p392
        %p1149 = pneg %p416
        %p1150 = pneg %p413
        %p1151 = pneg %p437
        %p1152 = pneg %p434
        %p1153 = pneg %p458
        %p1154 = pneg %p455
        %p1155 = pneg %p479
        %p1156 = pneg %p476
        %p1157 = pneg %p500
        %p1158 = pneg %p497
        %p1159 = pneg %p521
        %p1160 = pneg %p518
        %p1161 = pneg %p542
        %p1162 = pneg %p539
        %p1163 = pneg %p563
        %p1164 = pneg %p560
        %p1165 = pneg %p584
        %p1166 = pneg %p581
        %p1167 = pneg %p605
        %p1168 = pneg %p602
        %p1169 = pneg %p626
        %p1170 = pneg %p623
        %p1171 = pneg %p647
        %p1172 = pneg %p644
        %p1173 = pneg %p668
        %p1174 = pneg %p665
        %p1175 = pneg %p689
        %p1176 = pneg %p686
        %p1177 = pneg %p710
        %p1178 = pneg %p707
        %p1179 = pneg %p731
        %p1180 = pneg %p728
        %p1181 = pneg %p752
        %p1182 = pneg %p749
        %p1183 = pneg %p773
        %p1184 = pneg %p770
        %p1185 = pneg %p794
        %p1186 = pneg %p791
        %p1187 = pneg %p815
        %p1188 = pneg %p812
        %p1189 = pneg %p836
        %p1190 = pneg %p833
        %p1191 = pneg %p857
        %p1192 = pneg %p854
        %p1193 = pneg %p878
        %p1194 = pneg %p875
        %p1195 = pneg %p899
        %p1196 = pneg %p896
        %p1197 = pneg %p920
        %p1198 = pneg %p917
        %p1199 = pneg %p941
        %p1200 = pneg %p938
        %p1201 = pneg %p967
        %p1202 = pneg %p964
        %s1203 = sand.u32 %s954, 1
        %s1204 = scalar_lea.sflag [#allocation6], %s1203
        %s1205 = sand.u32 %s954, 1
        %s1206 = smul.addr %s1205, 8
        %s1207 = scalar_lea.vmem [#allocation5], %s1206
        %p1208 = scmp.lt.s32.totalorder %s101, 1
        %s1209 = scalar_select %p1208, %s101, 1
        %s1210 = smul.addr %s1209, 8
        %s1211 = scalar_lea.vmem %s1, %s1210
        %v1213 = vld [vmem:[%s1211] sm:$0xff]
        %v1214 = vlaneseq
        %v1215 = vshrl.u32 %v1214, 7
        %v1216 = vlaneseq
        %v1217 = vand.u32 %v1216, 127
        %vm1218 = vcmp.eq.s32.totalorder %v1215, %v1217
        %v1219 = vpack.c.bf16 %v1213, %v1213
        %v1222 = vunpack.c.l.s4 1966171168
        %v1223 = vunpack.c.0.s8 %v1222
        %v1224 = vlaneseq
        %v1225 = vshrl.u32 %v1224, 7
        %v1226 = vsub.s32 %v1223, %v1225
        %v1227 = vrot.slane %v1219, %v1226
        %v1228 = vcombine.high %v1227, %v1227
        %v1230 = vunpack.c.l.s4 1966171168
        %v1231 = vunpack.c.0.s8 %v1230
        %v1232 = vlaneseq
        %v1233 = vshrl.u32 %v1232, 7
        %v1234 = vsub.s32 %v1231, %v1233
        %v1235 = vrot.slane %v1227, %v1234
        %v1237 = vunpack.c.l.s4 1966171168
        %v1238 = vunpack.c.0.s8 %v1237
        %v1239 = vlaneseq
        %v1240 = vshrl.u32 %v1239, 7
        %v1241 = vsub.s32 %v1238, %v1240
        %v1242 = vrot.slane %v1228, %v1241
        %v1243 = vcombine.high %v1235, %v1235
        %v1244 = vcombine.high %v1242, %v1242
        %v1245 = vunpack.i.l.s16 %v1235
        %v1246 = vunpack.i.h.s16 %v1235
        %v1247 = vunpack.i.l.s16 %v1242
        %v1248 = vunpack.i.h.s16 %v1242
        %v1249 = vunpack.i.l.s16 %v1243
        %v1250 = vunpack.i.h.s16 %v1243
        %v1251 = vunpack.i.l.s16 %v1244
        %v1252 = vunpack.i.h.s16 %v1244
        %v1253 = vpack.i.b16 %v1245, %v1245
        %v1254 = vpack.i.b16 %v1246, %v1246
        %v1255 = vpack.i.b16 %v1247, %v1247
        %v1256 = vpack.i.b16 %v1248, %v1248
        %v1257 = vpack.i.b16 %v1249, %v1249
        %v1258 = vpack.i.b16 %v1250, %v1250
        %v1259 = vpack.i.b16 %v1251, %v1251
        %v1260 = vpack.i.b16 %v1252, %v1252
        %v1261 = vlaneseq
        %v1262 = vshrl.u32 %v1261, 7
        %v1263 = vsub.s32 0, %v1262
        %v1264 = vrot.slane %v1253, %v1263
        %v1265 = vlaneseq
        %v1266 = vshrl.u32 %v1265, 7
        %v1267 = vsub.s32 0, %v1266
        %v1268 = vrot.slane %v1254, %v1267
        %v1269 = vlaneseq
        %v1270 = vshrl.u32 %v1269, 7
        %v1271 = vsub.s32 0, %v1270
        %v1272 = vrot.slane %v1255, %v1271
        %v1273 = vlaneseq
        %v1274 = vshrl.u32 %v1273, 7
        %v1275 = vsub.s32 0, %v1274
        %v1276 = vrot.slane %v1256, %v1275
        %v1277 = vlaneseq
        %v1278 = vshrl.u32 %v1277, 7
        %v1279 = vsub.s32 0, %v1278
        %v1280 = vrot.slane %v1257, %v1279
        %v1281 = vlaneseq
        %v1282 = vshrl.u32 %v1281, 7
        %v1283 = vsub.s32 0, %v1282
        %v1284 = vrot.slane %v1258, %v1283
        %v1285 = vlaneseq
        %v1286 = vshrl.u32 %v1285, 7
        %v1287 = vsub.s32 0, %v1286
        %v1288 = vrot.slane %v1259, %v1287
        %v1289 = vlaneseq
        %v1290 = vshrl.u32 %v1289, 7
        %v1291 = vsub.s32 0, %v1290
        %v1292 = vrot.slane %v1260, %v1291
        %v1294 = vpack.i.b16 %v1264, %v1264
        %v1296 = vlaneseq
        %v1297 = vshrl.u32 %v1296, 7
        %v1298 = vsub.s32 0, %v1297
        %v1299 = vrot.slane %v1294, %v1298
        %v1301 = vpack.i.b16 %v1268, %v1268
        %v1303 = vlaneseq
        %v1304 = vshrl.u32 %v1303, 7
        %v1305 = vsub.s32 0, %v1304
        %v1306 = vrot.slane %v1301, %v1305
        %v1308 = vpack.i.b16 %v1272, %v1272
        %v1310 = vlaneseq
        %v1311 = vshrl.u32 %v1310, 7
        %v1312 = vsub.s32 0, %v1311
        %v1313 = vrot.slane %v1308, %v1312
        %v1315 = vpack.i.b16 %v1276, %v1276
        %v1317 = vlaneseq
        %v1318 = vshrl.u32 %v1317, 7
        %v1319 = vsub.s32 0, %v1318
        %v1320 = vrot.slane %v1315, %v1319
        %v1322 = vpack.i.b16 %v1280, %v1280
        %v1324 = vlaneseq
        %v1325 = vshrl.u32 %v1324, 7
        %v1326 = vsub.s32 0, %v1325
        %v1327 = vrot.slane %v1322, %v1326
        %v1329 = vpack.i.b16 %v1284, %v1284
        %v1331 = vlaneseq
        %v1332 = vshrl.u32 %v1331, 7
        %v1333 = vsub.s32 0, %v1332
        %v1334 = vrot.slane %v1329, %v1333
        %v1336 = vpack.i.b16 %v1288, %v1288
        %v1338 = vlaneseq
        %v1339 = vshrl.u32 %v1338, 7
        %v1340 = vsub.s32 0, %v1339
        %v1341 = vrot.slane %v1336, %v1340
        %v1343 = vpack.i.b16 %v1292, %v1292
        %v1345 = vlaneseq
        %v1346 = vshrl.u32 %v1345, 7
        %v1347 = vsub.s32 0, %v1346
        %v1348 = vrot.slane %v1343, %v1347
        %v1349 = vsub.bf16 %v1299, %v1219
        %v1350 = vsub.bf16 %v1306, %v1219
        %v1351 = vsub.bf16 %v1313, %v1219
        %v1352 = vsub.bf16 %v1320, %v1219
        %v1353 = vsub.bf16 %v1327, %v1219
        %v1354 = vsub.bf16 %v1334, %v1219
        %v1355 = vsub.bf16 %v1341, %v1219
        %v1356 = vsub.bf16 %v1348, %v1219
        %v1357 = vand.u32 2147450879, %v1349
        %v1358 = vand.u32 2147450879, %v1350
        %v1359 = vand.u32 2147450879, %v1351
        %v1360 = vand.u32 2147450879, %v1352
        %v1361 = vand.u32 2147450879, %v1353
        %v1362 = vand.u32 2147450879, %v1354
        %v1363 = vand.u32 2147450879, %v1355
        %v1364 = vand.u32 2147450879, %v1356
        %v1365 = vld [vmem:[%s3] sm:$0xf]
        %v1366 = vld [vmem:[%s3 + $0x4] sm:$0xf]
        %v1367 = vld [vmem:[%s5] sm:$0x1]
        %v1369 = vlaneseq
        %v1370 = vshrl.u32 %v1369, 7
        %v1371 = vsub.s32 0, %v1370
        %v1372 = vrot.slane %v1367, %v1371
        %v1382 = vunpack.c.l.b16 %v1357
        %v1383 = vunpack.c.l.b16 %v1358
        %v1384 = vunpack.c.l.b16 %v1359
        %v1385 = vunpack.c.l.b16 %v1360
        %v1386 = vunpack.c.l.b16 %v1361
        %v1387 = vunpack.c.l.b16 %v1362
        %v1388 = vunpack.c.l.b16 %v1363
        %v1389 = vunpack.c.l.b16 %v1364
        %v1390 = vpack.c.b16 %v1383, %v1382
        %v1391 = vpack.c.b16 %v1385, %v1384
        %v1392 = vpack.c.b16 %v1387, %v1386
        %v1393 = vpack.c.b16 %v1389, %v1388
        %v1396 = vunpack.c.l.b16 %v1365
        %v1397 = vunpack.c.l.b16 %v1366
        %v1398 = vpack.c.b16 %v1397, %v1396
        %vm1400 = vcmask 130048
        %v1402 = vsel %vm1400, %v1390, 0
        %v1405 = vsel %vm1400, %v1391, 0
        %v1408 = vsel %vm1400, %v1392, 0
        %v1411 = vsel %vm1400, %v1393, 0
        %1413 = vmatprep.subr.bf16.mxu0 0
        %1414 = vmatpush1.bf16.msra.mxu0 0
        %1415 = vmatprep.subr.bf16.mxu0 0
        %1416 = vmatpush1.bf16.msra.mxu0 0
        %1417 = vmatprep.subr.bf16.mxu0 0
        %1418 = vmatpush1.bf16.msra.mxu0 0
        %1419 = vmatprep.subr.bf16.mxu0 0
        %1420 = vmatpush1.bf16.msra.mxu0 0
        %1421 = vmatprep.subr.bf16.mxu0 0
        %1422 = vmatpush1.bf16.msra.mxu0 0
        %1423 = vmatprep.subr.bf16.mxu0 0
        %1424 = vmatpush1.bf16.msra.mxu0 0
        %1425 = vmatprep.subr.bf16.mxu0 0
        %1426 = vmatpush1.bf16.msra.mxu0 0
        %1427 = vmatprep.subr.bf16.mxu0 0
        %1428 = vmatpush1.bf16.msra.mxu0 %v1398
        %1429 = vmatprep.subr.bf16.mxu0 0
        %1430 = vmatpush2.bf16.msra.mxu0 0
        %1431 = vmatprep.subr.bf16.mxu0 0
        %1432 = vmatpush2.bf16.msra.mxu0 0
        %1433 = vmatprep.subr.bf16.mxu0 0
        %1434 = vmatpush2.bf16.msra.mxu0 0
        %1435 = vmatprep.subr.bf16.mxu0 0
        %1436 = vmatpush2.bf16.msra.mxu0 0
        %1437 = vmatprep.subr.bf16.mxu0 0
        %1438 = vmatpush2.bf16.msra.mxu0 0
        %1439 = vmatprep.subr.bf16.mxu0 0
        %1440 = vmatpush2.bf16.msra.mxu0 0
        %1441 = vmatprep.subr.bf16.mxu0 0
        %1442 = vmatpush2.bf16.msra.mxu0 0
        %1443 = vmatprep.subr.bf16.mxu0 0
        %1444 = vmatpush2.bf16.msra.mxu0 0
        %1445 = vmatprep.mubr.bf16.mxu0 0
        %1446 = vmatmul.mubr.bf16.gmra.mxu0 %v1402
        %v1447 = vpop.f32.mrf.mxu0
        %v1448 = vadd.f32 %v1372, %v1447
        %v1449 = vpop.f32.mrf.mxu0
        %v1450 = vpop.f32.mrf.mxu0
        %v1451 = vadd.f32 %v1372, %v1450
        %v1452 = vpop.f32.mrf.mxu0
        %1453 = vmatprep.mubr.bf16.mxu0 0
        %1454 = vmatmul.mubr.bf16.gmra.mxu0 %v1405
        %v1455 = vpop.f32.mrf.mxu0
        %v1456 = vadd.f32 %v1372, %v1455
        %v1457 = vpop.f32.mrf.mxu0
        %v1458 = vpop.f32.mrf.mxu0
        %v1459 = vadd.f32 %v1372, %v1458
        %v1460 = vpop.f32.mrf.mxu0
        %1461 = vmatprep.mubr.bf16.mxu0 0
        %1462 = vmatmul.mubr.bf16.gmra.mxu0 %v1408
        %v1463 = vpop.f32.mrf.mxu0
        %v1464 = vadd.f32 %v1372, %v1463
        %v1465 = vpop.f32.mrf.mxu0
        %v1466 = vpop.f32.mrf.mxu0
        %v1467 = vadd.f32 %v1372, %v1466
        %v1468 = vpop.f32.mrf.mxu0
        %1469 = vmatprep.mubr.bf16.mxu0 0
        %1470 = vmatmul.mubr.bf16.gmra.mxu0 %v1411
        %v1471 = vpop.f32.mrf.mxu0
        %v1472 = vadd.f32 %v1372, %v1471
        %v1473 = vpop.f32.mrf.mxu0
        %v1474 = vpop.f32.mrf.mxu0
        %v1475 = vadd.f32 %v1372, %v1474
        %v1476 = vpop.f32.mrf.mxu0
        %1477 = vdwg.mxu0
        %vm1478 = vcmp.ge.f32.partialorder %v1448, 0.0
        %vm1479 = vcmp.ge.f32.partialorder %v1451, 0.0
        %vm1480 = vcmp.ge.f32.partialorder %v1456, 0.0
        %vm1481 = vcmp.ge.f32.partialorder %v1459, 0.0
        %vm1482 = vcmp.ge.f32.partialorder %v1464, 0.0
        %vm1483 = vcmp.ge.f32.partialorder %v1467, 0.0
        %vm1484 = vcmp.ge.f32.partialorder %v1472, 0.0
        %vm1485 = vcmp.ge.f32.partialorder %v1475, 0.0
        %v1486 = vmul.f32 %v1448, 0.01
        %v1487 = vmul.f32 %v1451, 0.01
        %v1488 = vmul.f32 %v1456, 0.01
        %v1489 = vmul.f32 %v1459, 0.01
        %v1490 = vmul.f32 %v1464, 0.01
        %v1491 = vmul.f32 %v1467, 0.01
        %v1492 = vmul.f32 %v1472, 0.01
        %v1493 = vmul.f32 %v1475, 0.01
        %v1494 = vsel %vm1478, %v1448, %v1486
        %v1495 = vsel %vm1479, %v1451, %v1487
        %v1496 = vsel %vm1480, %v1456, %v1488
        %v1497 = vsel %vm1481, %v1459, %v1489
        %v1498 = vsel %vm1482, %v1464, %v1490
        %v1499 = vsel %vm1483, %v1467, %v1491
        %v1500 = vsel %vm1484, %v1472, %v1492
        %v1501 = vsel %vm1485, %v1475, %v1493
        %v1502 = vpack.c.bf16 %v1495, %v1494
        %v1503 = vpack.c.bf16 %v1497, %v1496
        %v1504 = vpack.c.bf16 %v1499, %v1498
        %v1505 = vpack.c.bf16 %v1501, %v1500
        %v1506 = vld [vmem:[%s7] sm:$0xf]
        %v1507 = vld [vmem:[%s7 + $0x4] sm:$0xf]
        %v1508 = vld [vmem:[%s7 + $0x8] sm:$0xf]
        %v1509 = vld [vmem:[%s7 + $0xc] sm:$0xf]
        %v1510 = vld [vmem:[%s9] sm:$0x1]
        %v1512 = vlaneseq
        %v1513 = vshrl.u32 %v1512, 7
        %v1514 = vsub.s32 0, %v1513
        %v1515 = vrot.slane %v1510, %v1514
        %v1521 = vunpack.c.l.b16 %v1506
        %v1522 = vunpack.c.l.b16 %v1507
        %v1523 = vunpack.c.l.b16 %v1508
        %v1524 = vunpack.c.l.b16 %v1509
        %v1525 = vpack.c.b16 %v1522, %v1521
        %v1526 = vpack.c.b16 %v1524, %v1523
        %vm1529 = vcmask 261120
        %v1531 = vsel %vm1529, %v1502, 0
        %v1534 = vsel %vm1529, %v1503, 0
        %v1537 = vsel %vm1529, %v1504, 0
        %v1540 = vsel %vm1529, %v1505, 0
        %1542 = vmatprep.subr.bf16.mxu0 0
        %1543 = vmatpush1.bf16.msra.mxu0 0
        %1544 = vmatprep.subr.bf16.mxu0 0
        %1545 = vmatpush1.bf16.msra.mxu0 0
        %1546 = vmatprep.subr.bf16.mxu0 0
        %1547 = vmatpush1.bf16.msra.mxu0 0
        %1548 = vmatprep.subr.bf16.mxu0 0
        %1549 = vmatpush1.bf16.msra.mxu0 0
        %1550 = vmatprep.subr.bf16.mxu0 0
        %1551 = vmatpush1.bf16.msra.mxu0 0
        %1552 = vmatprep.subr.bf16.mxu0 0
        %1553 = vmatpush1.bf16.msra.mxu0 0
        %1554 = vmatprep.subr.bf16.mxu0 0
        %1555 = vmatpush1.bf16.msra.mxu0 %v1526
        %1556 = vmatprep.subr.bf16.mxu0 0
        %1557 = vmatpush1.bf16.msra.mxu0 %v1525
        %1558 = vmatprep.subr.bf16.mxu0 0
        %1559 = vmatpush2.bf16.msra.mxu0 0
        %1560 = vmatprep.subr.bf16.mxu0 0
        %1561 = vmatpush2.bf16.msra.mxu0 0
        %1562 = vmatprep.subr.bf16.mxu0 0
        %1563 = vmatpush2.bf16.msra.mxu0 0
        %1564 = vmatprep.subr.bf16.mxu0 0
        %1565 = vmatpush2.bf16.msra.mxu0 0
        %1566 = vmatprep.subr.bf16.mxu0 0
        %1567 = vmatpush2.bf16.msra.mxu0 0
        %1568 = vmatprep.subr.bf16.mxu0 0
        %1569 = vmatpush2.bf16.msra.mxu0 0
        %1570 = vmatprep.subr.bf16.mxu0 0
        %1571 = vmatpush2.bf16.msra.mxu0 0
        %1572 = vmatprep.subr.bf16.mxu0 0
        %1573 = vmatpush2.bf16.msra.mxu0 0
        %1574 = vmatprep.mubr.bf16.mxu0 0
        %1575 = vmatmul.mubr.bf16.gmra.mxu0 %v1531
        %v1576 = vpop.f32.mrf.mxu0
        %v1577 = vadd.f32 %v1515, %v1576
        %v1578 = vpop.f32.mrf.mxu0
        %v1579 = vpop.f32.mrf.mxu0
        %v1580 = vadd.f32 %v1515, %v1579
        %v1581 = vpop.f32.mrf.mxu0
        %1582 = vmatprep.mubr.bf16.mxu0 0
        %1583 = vmatmul.mubr.bf16.gmra.mxu0 %v1534
        %v1584 = vpop.f32.mrf.mxu0
        %v1585 = vadd.f32 %v1515, %v1584
        %v1586 = vpop.f32.mrf.mxu0
        %v1587 = vpop.f32.mrf.mxu0
        %v1588 = vadd.f32 %v1515, %v1587
        %v1589 = vpop.f32.mrf.mxu0
        %1590 = vmatprep.mubr.bf16.mxu0 0
        %1591 = vmatmul.mubr.bf16.gmra.mxu0 %v1537
        %v1592 = vpop.f32.mrf.mxu0
        %v1593 = vadd.f32 %v1515, %v1592
        %v1594 = vpop.f32.mrf.mxu0
        %v1595 = vpop.f32.mrf.mxu0
        %v1596 = vadd.f32 %v1515, %v1595
        %v1597 = vpop.f32.mrf.mxu0
        %1598 = vmatprep.mubr.bf16.mxu0 0
        %1599 = vmatmul.mubr.bf16.gmra.mxu0 %v1540
        %v1600 = vpop.f32.mrf.mxu0
        %v1601 = vadd.f32 %v1515, %v1600
        %v1602 = vpop.f32.mrf.mxu0
        %v1603 = vpop.f32.mrf.mxu0
        %v1604 = vadd.f32 %v1515, %v1603
        %v1605 = vpop.f32.mrf.mxu0
        %1606 = vdwg.mxu0
        %vm1607 = vcmp.ge.f32.partialorder %v1577, 0.0
        %vm1608 = vcmp.ge.f32.partialorder %v1580, 0.0
        %vm1609 = vcmp.ge.f32.partialorder %v1585, 0.0
        %vm1610 = vcmp.ge.f32.partialorder %v1588, 0.0
        %vm1611 = vcmp.ge.f32.partialorder %v1593, 0.0
        %vm1612 = vcmp.ge.f32.partialorder %v1596, 0.0
        %vm1613 = vcmp.ge.f32.partialorder %v1601, 0.0
        %vm1614 = vcmp.ge.f32.partialorder %v1604, 0.0
        %v1615 = vmul.f32 %v1577, 0.01
        %v1616 = vmul.f32 %v1580, 0.01
        %v1617 = vmul.f32 %v1585, 0.01
        %v1618 = vmul.f32 %v1588, 0.01
        %v1619 = vmul.f32 %v1593, 0.01
        %v1620 = vmul.f32 %v1596, 0.01
        %v1621 = vmul.f32 %v1601, 0.01
        %v1622 = vmul.f32 %v1604, 0.01
        %v1623 = vsel %vm1607, %v1577, %v1615
        %v1624 = vsel %vm1608, %v1580, %v1616
        %v1625 = vsel %vm1609, %v1585, %v1617
        %v1626 = vsel %vm1610, %v1588, %v1618
        %v1627 = vsel %vm1611, %v1593, %v1619
        %v1628 = vsel %vm1612, %v1596, %v1620
        %v1629 = vsel %vm1613, %v1601, %v1621
        %v1630 = vsel %vm1614, %v1604, %v1622
        %v1631 = vpack.c.bf16 %v1624, %v1623
        %v1632 = vpack.c.bf16 %v1626, %v1625
        %v1633 = vpack.c.bf16 %v1628, %v1627
        %v1634 = vpack.c.bf16 %v1630, %v1629
        %v1635 = vld [vmem:[%s11] sm:$0xf]
        %v1636 = vld [vmem:[%s11 + $0x4] sm:$0xf]
        %v1637 = vld [vmem:[%s11 + $0x8] sm:$0xf]
        %v1638 = vld [vmem:[%s11 + $0xc] sm:$0xf]
        %v1639 = vld [vmem:[%s13] sm:$0x1]
        %v1641 = vlaneseq
        %v1642 = vshrl.u32 %v1641, 7
        %v1643 = vsub.s32 0, %v1642
        %v1644 = vrot.slane %v1639, %v1643
        %v1650 = vunpack.c.l.b16 %v1635
        %v1651 = vunpack.c.l.b16 %v1636
        %v1652 = vunpack.c.l.b16 %v1637
        %v1653 = vunpack.c.l.b16 %v1638
        %v1654 = vpack.c.b16 %v1651, %v1650
        %v1655 = vpack.c.b16 %v1653, %v1652
        %v1659 = vsel %vm1529, %v1631, 0
        %v1662 = vsel %vm1529, %v1632, 0
        %v1665 = vsel %vm1529, %v1633, 0
        %v1668 = vsel %vm1529, %v1634, 0
        %1670 = vmatprep.subr.bf16.mxu0 0
        %1671 = vmatpush1.bf16.msra.mxu0 0
        %1672 = vmatprep.subr.bf16.mxu0 0
        %1673 = vmatpush1.bf16.msra.mxu0 0
        %1674 = vmatprep.subr.bf16.mxu0 0
        %1675 = vmatpush1.bf16.msra.mxu0 0
        %1676 = vmatprep.subr.bf16.mxu0 0
        %1677 = vmatpush1.bf16.msra.mxu0 0
        %1678 = vmatprep.subr.bf16.mxu0 0
        %1679 = vmatpush1.bf16.msra.mxu0 0
        %1680 = vmatprep.subr.bf16.mxu0 0
        %1681 = vmatpush1.bf16.msra.mxu0 0
        %1682 = vmatprep.subr.bf16.mxu0 0
        %1683 = vmatpush1.bf16.msra.mxu0 %v1655
        %1684 = vmatprep.subr.bf16.mxu0 0
        %1685 = vmatpush1.bf16.msra.mxu0 %v1654
        %1686 = vmatprep.subr.bf16.mxu0 0
        %1687 = vmatpush2.bf16.msra.mxu0 0
        %1688 = vmatprep.subr.bf16.mxu0 0
        %1689 = vmatpush2.bf16.msra.mxu0 0
        %1690 = vmatprep.subr.bf16.mxu0 0
        %1691 = vmatpush2.bf16.msra.mxu0 0
        %1692 = vmatprep.subr.bf16.mxu0 0
        %1693 = vmatpush2.bf16.msra.mxu0 0
        %1694 = vmatprep.subr.bf16.mxu0 0
        %1695 = vmatpush2.bf16.msra.mxu0 0
        %1696 = vmatprep.subr.bf16.mxu0 0
        %1697 = vmatpush2.bf16.msra.mxu0 0
        %1698 = vmatprep.subr.bf16.mxu0 0
        %1699 = vmatpush2.bf16.msra.mxu0 0
        %1700 = vmatprep.subr.bf16.mxu0 0
        %1701 = vmatpush2.bf16.msra.mxu0 0
        %1702 = vmatprep.mubr.bf16.mxu0 0
        %1703 = vmatmul.mubr.bf16.gmra.mxu0 %v1659
        %v1704 = vpop.f32.mrf.mxu0
        %v1705 = vadd.f32 %v1644, %v1704
        %v1706 = vpop.f32.mrf.mxu0
        %v1707 = vpop.f32.mrf.mxu0
        %v1708 = vadd.f32 %v1644, %v1707
        %v1709 = vpop.f32.mrf.mxu0
        %1710 = vmatprep.mubr.bf16.mxu0 0
        %1711 = vmatmul.mubr.bf16.gmra.mxu0 %v1662
        %v1712 = vpop.f32.mrf.mxu0
        %v1713 = vadd.f32 %v1644, %v1712
        %v1714 = vpop.f32.mrf.mxu0
        %v1715 = vpop.f32.mrf.mxu0
        %v1716 = vadd.f32 %v1644, %v1715
        %v1717 = vpop.f32.mrf.mxu0
        %1718 = vmatprep.mubr.bf16.mxu0 0
        %1719 = vmatmul.mubr.bf16.gmra.mxu0 %v1665
        %v1720 = vpop.f32.mrf.mxu0
        %v1721 = vadd.f32 %v1644, %v1720
        %v1722 = vpop.f32.mrf.mxu0
        %v1723 = vpop.f32.mrf.mxu0
        %v1724 = vadd.f32 %v1644, %v1723
        %v1725 = vpop.f32.mrf.mxu0
        %1726 = vmatprep.mubr.bf16.mxu0 0
        %1727 = vmatmul.mubr.bf16.gmra.mxu0 %v1668
        %v1728 = vpop.f32.mrf.mxu0
        %v1729 = vadd.f32 %v1644, %v1728
        %v1730 = vpop.f32.mrf.mxu0
        %v1731 = vpop.f32.mrf.mxu0
        %v1732 = vadd.f32 %v1644, %v1731
        %v1733 = vpop.f32.mrf.mxu0
        %1734 = vdwg.mxu0
        %vm1735 = vcmp.ge.f32.partialorder %v1705, 0.0
        %vm1736 = vcmp.ge.f32.partialorder %v1708, 0.0
        %vm1737 = vcmp.ge.f32.partialorder %v1713, 0.0
        %vm1738 = vcmp.ge.f32.partialorder %v1716, 0.0
        %vm1739 = vcmp.ge.f32.partialorder %v1721, 0.0
        %vm1740 = vcmp.ge.f32.partialorder %v1724, 0.0
        %vm1741 = vcmp.ge.f32.partialorder %v1729, 0.0
        %vm1742 = vcmp.ge.f32.partialorder %v1732, 0.0
        %v1743 = vmul.f32 %v1705, 0.01
        %v1744 = vmul.f32 %v1708, 0.01
        %v1745 = vmul.f32 %v1713, 0.01
        %v1746 = vmul.f32 %v1716, 0.01
        %v1747 = vmul.f32 %v1721, 0.01
        %v1748 = vmul.f32 %v1724, 0.01
        %v1749 = vmul.f32 %v1729, 0.01
        %v1750 = vmul.f32 %v1732, 0.01
        %v1751 = vsel %vm1735, %v1705, %v1743
        %v1752 = vsel %vm1736, %v1708, %v1744
        %v1753 = vsel %vm1737, %v1713, %v1745
        %v1754 = vsel %vm1738, %v1716, %v1746
        %v1755 = vsel %vm1739, %v1721, %v1747
        %v1756 = vsel %vm1740, %v1724, %v1748
        %v1757 = vsel %vm1741, %v1729, %v1749
        %v1758 = vsel %vm1742, %v1732, %v1750
        %v1759 = vpack.c.bf16 %v1752, %v1751
        %v1760 = vpack.c.bf16 %v1754, %v1753
        %v1761 = vpack.c.bf16 %v1756, %v1755
        %v1762 = vpack.c.bf16 %v1758, %v1757
        %v1763 = vld [vmem:[%s15] sm:$0xf]
        %v1764 = vld [vmem:[%s15 + $0x4] sm:$0xf]
        %v1765 = vld [vmem:[%s17] sm:$0x1]
        %v1767 = vlaneseq
        %v1768 = vshrl.u32 %v1767, 7
        %v1769 = vsub.s32 0, %v1768
        %v1770 = vrot.slane %v1765, %v1769
        %v1774 = vunpack.c.l.b16 %v1763
        %v1775 = vunpack.c.l.b16 %v1764
        %v1776 = vpack.c.b16 %v1775, %v1774
        %v1779 = vsel %vm1400, %v1759, 0
        %v1782 = vsel %vm1400, %v1760, 0
        %v1785 = vsel %vm1400, %v1761, 0
        %v1788 = vsel %vm1400, %v1762, 0
        %1790 = vmatprep.subr.bf16.mxu0 0
        %1791 = vmatpush1.bf16.msra.mxu0 0
        %1792 = vmatprep.subr.bf16.mxu0 0
        %1793 = vmatpush1.bf16.msra.mxu0 0
        %1794 = vmatprep.subr.bf16.mxu0 0
        %1795 = vmatpush1.bf16.msra.mxu0 0
        %1796 = vmatprep.subr.bf16.mxu0 0
        %1797 = vmatpush1.bf16.msra.mxu0 0
        %1798 = vmatprep.subr.bf16.mxu0 0
        %1799 = vmatpush1.bf16.msra.mxu0 0
        %1800 = vmatprep.subr.bf16.mxu0 0
        %1801 = vmatpush1.bf16.msra.mxu0 0
        %1802 = vmatprep.subr.bf16.mxu0 0
        %1803 = vmatpush1.bf16.msra.mxu0 0
        %1804 = vmatprep.subr.bf16.mxu0 0
        %1805 = vmatpush1.bf16.msra.mxu0 %v1776
        %1806 = vmatprep.subr.bf16.mxu0 0
        %1807 = vmatpush2.bf16.msra.mxu0 0
        %1808 = vmatprep.subr.bf16.mxu0 0
        %1809 = vmatpush2.bf16.msra.mxu0 0
        %1810 = vmatprep.subr.bf16.mxu0 0
        %1811 = vmatpush2.bf16.msra.mxu0 0
        %1812 = vmatprep.subr.bf16.mxu0 0
        %1813 = vmatpush2.bf16.msra.mxu0 0
        %1814 = vmatprep.subr.bf16.mxu0 0
        %1815 = vmatpush2.bf16.msra.mxu0 0
        %1816 = vmatprep.subr.bf16.mxu0 0
        %1817 = vmatpush2.bf16.msra.mxu0 0
        %1818 = vmatprep.subr.bf16.mxu0 0
        %1819 = vmatpush2.bf16.msra.mxu0 0
        %1820 = vmatprep.subr.bf16.mxu0 0
        %1821 = vmatpush2.bf16.msra.mxu0 0
        %1822 = vmatprep.mubr.bf16.mxu0 0
        %1823 = vmatmul.mubr.bf16.gmra.mxu0 %v1779
        %v1824 = vpop.f32.mrf.mxu0
        %v1825 = vadd.f32 %v1770, %v1824
        %v1826 = vpop.f32.mrf.mxu0
        %v1827 = vpop.f32.mrf.mxu0
        %v1828 = vadd.f32 %v1770, %v1827
        %v1829 = vpop.f32.mrf.mxu0
        %1830 = vmatprep.mubr.bf16.mxu0 0
        %1831 = vmatmul.mubr.bf16.gmra.mxu0 %v1782
        %v1832 = vpop.f32.mrf.mxu0
        %v1833 = vadd.f32 %v1770, %v1832
        %v1834 = vpop.f32.mrf.mxu0
        %v1835 = vpop.f32.mrf.mxu0
        %v1836 = vadd.f32 %v1770, %v1835
        %v1837 = vpop.f32.mrf.mxu0
        %1838 = vmatprep.mubr.bf16.mxu0 0
        %1839 = vmatmul.mubr.bf16.gmra.mxu0 %v1785
        %v1840 = vpop.f32.mrf.mxu0
        %v1841 = vadd.f32 %v1770, %v1840
        %v1842 = vpop.f32.mrf.mxu0
        %v1843 = vpop.f32.mrf.mxu0
        %v1844 = vadd.f32 %v1770, %v1843
        %v1845 = vpop.f32.mrf.mxu0
        %1846 = vmatprep.mubr.bf16.mxu0 0
        %1847 = vmatmul.mubr.bf16.gmra.mxu0 %v1788
        %v1848 = vpop.f32.mrf.mxu0
        %v1849 = vadd.f32 %v1770, %v1848
        %v1850 = vpop.f32.mrf.mxu0
        %v1851 = vpop.f32.mrf.mxu0
        %v1852 = vadd.f32 %v1770, %v1851
        %v1853 = vpop.f32.mrf.mxu0
        %1854 = vdwg.mxu0
        %vm1855 = vcmp.ge.f32.partialorder %v1825, 0.0
        %vm1856 = vcmp.ge.f32.partialorder %v1828, 0.0
        %vm1857 = vcmp.ge.f32.partialorder %v1833, 0.0
        %vm1858 = vcmp.ge.f32.partialorder %v1836, 0.0
        %vm1859 = vcmp.ge.f32.partialorder %v1841, 0.0
        %vm1860 = vcmp.ge.f32.partialorder %v1844, 0.0
        %vm1861 = vcmp.ge.f32.partialorder %v1849, 0.0
        %vm1862 = vcmp.ge.f32.partialorder %v1852, 0.0
        %v1863 = vmul.f32 %v1825, 0.01
        %v1864 = vmul.f32 %v1828, 0.01
        %v1865 = vmul.f32 %v1833, 0.01
        %v1866 = vmul.f32 %v1836, 0.01
        %v1867 = vmul.f32 %v1841, 0.01
        %v1868 = vmul.f32 %v1844, 0.01
        %v1869 = vmul.f32 %v1849, 0.01
        %v1870 = vmul.f32 %v1852, 0.01
        %v1871 = vsel %vm1855, %v1825, %v1863
        %v1872 = vsel %vm1856, %v1828, %v1864
        %v1873 = vsel %vm1857, %v1833, %v1865
        %v1874 = vsel %vm1858, %v1836, %v1866
        %v1875 = vsel %vm1859, %v1841, %v1867
        %v1876 = vsel %vm1860, %v1844, %v1868
        %v1877 = vsel %vm1861, %v1849, %v1869
        %v1878 = vsel %vm1862, %v1852, %v1870
        %v1879 = vpack.c.bf16 %v1872, %v1871
        %v1880 = vpack.c.bf16 %v1874, %v1873
        %v1881 = vpack.c.bf16 %v1876, %v1875
        %v1882 = vpack.c.bf16 %v1878, %v1877
        %v1883 = vunpack.c.l.bf16 %v1879
        %v1884 = vunpack.c.h.bf16 %v1879
        %v1885 = vunpack.c.l.bf16 %v1880
        %v1886 = vunpack.c.h.bf16 %v1880
        %v1887 = vunpack.c.l.bf16 %v1881
        %v1888 = vunpack.c.h.bf16 %v1881
        %v1889 = vunpack.c.l.bf16 %v1882
        %v1890 = vunpack.c.h.bf16 %v1882
        %v1891 = vld [vmem:[%s19] sm:$0x1]
        %v1893 = vlaneseq
        %v1894 = vshrl.u32 %v1893, 7
        %v1895 = vsub.s32 0, %v1894
        %v1896 = vrot.slane %v1891, %v1895
        %v1898 = vmul.f32 %v1883, %v1896
        %v1899 = vmul.f32 %v1884, %v1896
        %v1900 = vmul.f32 %v1885, %v1896
        %v1901 = vmul.f32 %v1886, %v1896
        %v1902 = vmul.f32 %v1887, %v1896
        %v1903 = vmul.f32 %v1888, %v1896
        %v1904 = vmul.f32 %v1889, %v1896
        %v1905 = vmul.f32 %v1890, %v1896
        %v1906 = vsel %vm1400, %v1898, 0.0
        %1907 = vadd.xlane.f32.xlu0 %v1906
        %v1908 = vpop.xlane.xlu0 %1907
        %v1909 = vsel %vm1400, %v1899, 0.0
        %1910 = vadd.xlane.f32.xlu0 %v1909
        %v1911 = vpop.xlane.xlu0 %1910
        %v1912 = vsel %vm1400, %v1900, 0.0
        %1913 = vadd.xlane.f32.xlu0 %v1912
        %v1914 = vpop.xlane.xlu0 %1913
        %v1915 = vsel %vm1400, %v1901, 0.0
        %1916 = vadd.xlane.f32.xlu0 %v1915
        %v1917 = vpop.xlane.xlu0 %1916
        %v1918 = vsel %vm1400, %v1902, 0.0
        %1919 = vadd.xlane.f32.xlu0 %v1918
        %v1920 = vpop.xlane.xlu0 %1919
        %v1921 = vsel %vm1400, %v1903, 0.0
        %1922 = vadd.xlane.f32.xlu0 %v1921
        %v1923 = vpop.xlane.xlu0 %1922
        %v1924 = vsel %vm1400, %v1904, 0.0
        %1925 = vadd.xlane.f32.xlu0 %v1924
        %v1926 = vpop.xlane.xlu0 %1925
        %v1927 = vsel %vm1400, %v1905, 0.0
        %1928 = vadd.xlane.f32.xlu0 %v1927
        %v1929 = vpop.xlane.xlu0 %1928
        %v1930 = vld [vmem:[#allocation2] sm:$0x1]
        %v1932 = vlaneseq
        %v1933 = vshrl.u32 %v1932, 7
        %v1934 = vsub.s32 0, %v1933
        %v1935 = vrot.slane %v1930, %v1934
        %v1937 = vadd.f32 %v1908, %v1935
        %v1938 = vadd.f32 %v1911, %v1935
        %v1939 = vadd.f32 %v1914, %v1935
        %v1940 = vadd.f32 %v1917, %v1935
        %v1941 = vadd.f32 %v1920, %v1935
        %v1942 = vadd.f32 %v1923, %v1935
        %v1943 = vadd.f32 %v1926, %v1935
        %v1944 = vadd.f32 %v1929, %v1935
        %v1945 = vsub.f32 %v1937, 1e+08
        %v1946 = vsub.f32 %v1938, 1e+08
        %v1947 = vsub.f32 %v1939, 1e+08
        %v1948 = vsub.f32 %v1940, 1e+08
        %v1949 = vsub.f32 %v1941, 1e+08
        %v1950 = vsub.f32 %v1942, 1e+08
        %v1951 = vsub.f32 %v1943, 1e+08
        %v1952 = vsub.f32 %v1944, 1e+08
        %1961 = vset.pattern.permute.xlu0 0
        %1962 = vperm.xlu0 %1961, %v1945
        %v1963 = vpop.permute.xlu0 %1962
        %1964 = vset.pattern.permute.xlu0 0
        %1965 = vperm.xlu0 %1964, %v1946
        %v1966 = vpop.permute.xlu0 %1965
        %1967 = vset.pattern.permute.xlu0 0
        %1968 = vperm.xlu0 %1967, %v1947
        %v1969 = vpop.permute.xlu0 %1968
        %1970 = vset.pattern.permute.xlu0 0
        %1971 = vperm.xlu0 %1970, %v1948
        %v1972 = vpop.permute.xlu0 %1971
        %1973 = vset.pattern.permute.xlu0 0
        %1974 = vperm.xlu0 %1973, %v1949
        %v1975 = vpop.permute.xlu0 %1974
        %1976 = vset.pattern.permute.xlu0 0
        %1977 = vperm.xlu0 %1976, %v1950
        %v1978 = vpop.permute.xlu0 %1977
        %1979 = vset.pattern.permute.xlu0 0
        %1980 = vperm.xlu0 %1979, %v1951
        %v1981 = vpop.permute.xlu0 %1980
        %1982 = vset.pattern.permute.xlu0 0
        %1983 = vperm.xlu0 %1982, %v1952
        %v1984 = vpop.permute.xlu0 %1983
        %v1985 = vlaneseq
        %v1986 = vshrl.u32 %v1985, 7
        %v1987 = vsub.s32 %v1217, %v1986
        %v1988 = vrot.slane %v1963, %v1987
        %v1989 = vlaneseq
        %v1990 = vshrl.u32 %v1989, 7
        %v1991 = vsub.s32 %v1217, %v1990
        %v1992 = vrot.slane %v1966, %v1991
        %v1993 = vlaneseq
        %v1994 = vshrl.u32 %v1993, 7
        %v1995 = vsub.s32 %v1217, %v1994
        %v1996 = vrot.slane %v1969, %v1995
        %v1997 = vlaneseq
        %v1998 = vshrl.u32 %v1997, 7
        %v1999 = vsub.s32 %v1217, %v1998
        %v2000 = vrot.slane %v1972, %v1999
        %v2001 = vlaneseq
        %v2002 = vshrl.u32 %v2001, 7
        %v2003 = vsub.s32 %v1217, %v2002
        %v2004 = vrot.slane %v1975, %v2003
        %v2005 = vlaneseq
        %v2006 = vshrl.u32 %v2005, 7
        %v2007 = vsub.s32 %v1217, %v2006
        %v2008 = vrot.slane %v1978, %v2007
        %v2009 = vlaneseq
        %v2010 = vshrl.u32 %v2009, 7
        %v2011 = vsub.s32 %v1217, %v2010
        %v2012 = vrot.slane %v1981, %v2011
        %v2013 = vlaneseq
        %v2014 = vshrl.u32 %v2013, 7
        %v2015 = vsub.s32 %v1217, %v2014
        %v2016 = vrot.slane %v1984, %v2015
        %vm2017 = vcmask 1041409
        %v2018 = vsel %vm2017, %v1992, %v1988
        %vm2019 = vcmask 1042434
        %v2020 = vsel %vm2019, %v1996, %v2018
        %vm2021 = vcmask 1043459
        %v2022 = vsel %vm2021, %v2000, %v2020
        %vm2023 = vcmask 1044484
        %v2024 = vsel %vm2023, %v2004, %v2022
        %vm2025 = vcmask 1045509
        %v2026 = vsel %vm2025, %v2008, %v2024
        %vm2027 = vcmask 1046534
        %v2028 = vsel %vm2027, %v2012, %v2026
        %vm2029 = vcmask 1047559
        %v2030 = vsel %vm2029, %v2016, %v2028
        %2040 = vset.pattern.permute.xlu0 0
        %2041 = vperm.xlu0 %2040, %v1937
        %v2042 = vpop.permute.xlu0 %2041
        %2043 = vset.pattern.permute.xlu0 0
        %2044 = vperm.xlu0 %2043, %v1938
        %v2045 = vpop.permute.xlu0 %2044
        %2046 = vset.pattern.permute.xlu0 0
        %2047 = vperm.xlu0 %2046, %v1939
        %v2048 = vpop.permute.xlu0 %2047
        %2049 = vset.pattern.permute.xlu0 0
        %2050 = vperm.xlu0 %2049, %v1940
        %v2051 = vpop.permute.xlu0 %2050
        %2052 = vset.pattern.permute.xlu0 0
        %2053 = vperm.xlu0 %2052, %v1941
        %v2054 = vpop.permute.xlu0 %2053
        %2055 = vset.pattern.permute.xlu0 0
        %2056 = vperm.xlu0 %2055, %v1942
        %v2057 = vpop.permute.xlu0 %2056
        %2058 = vset.pattern.permute.xlu0 0
        %2059 = vperm.xlu0 %2058, %v1943
        %v2060 = vpop.permute.xlu0 %2059
        %2061 = vset.pattern.permute.xlu0 0
        %2062 = vperm.xlu0 %2061, %v1944
        %v2063 = vpop.permute.xlu0 %2062
        %v2064 = vlaneseq
        %v2065 = vshrl.u32 %v2064, 7
        %v2066 = vsub.s32 %v1217, %v2065
        %v2067 = vrot.slane %v2042, %v2066
        %v2068 = vlaneseq
        %v2069 = vshrl.u32 %v2068, 7
        %v2070 = vsub.s32 %v1217, %v2069
        %v2071 = vrot.slane %v2045, %v2070
        %v2072 = vlaneseq
        %v2073 = vshrl.u32 %v2072, 7
        %v2074 = vsub.s32 %v1217, %v2073
        %v2075 = vrot.slane %v2048, %v2074
        %v2076 = vlaneseq
        %v2077 = vshrl.u32 %v2076, 7
        %v2078 = vsub.s32 %v1217, %v2077
        %v2079 = vrot.slane %v2051, %v2078
        %v2080 = vlaneseq
        %v2081 = vshrl.u32 %v2080, 7
        %v2082 = vsub.s32 %v1217, %v2081
        %v2083 = vrot.slane %v2054, %v2082
        %v2084 = vlaneseq
        %v2085 = vshrl.u32 %v2084, 7
        %v2086 = vsub.s32 %v1217, %v2085
        %v2087 = vrot.slane %v2057, %v2086
        %v2088 = vlaneseq
        %v2089 = vshrl.u32 %v2088, 7
        %v2090 = vsub.s32 %v1217, %v2089
        %v2091 = vrot.slane %v2060, %v2090
        %v2092 = vlaneseq
        %v2093 = vshrl.u32 %v2092, 7
        %v2094 = vsub.s32 %v1217, %v2093
        %v2095 = vrot.slane %v2063, %v2094
        %v2096 = vsel %vm2017, %v2071, %v2067
        %v2097 = vsel %vm2019, %v2075, %v2096
        %v2098 = vsel %vm2021, %v2079, %v2097
        %v2099 = vsel %vm2023, %v2083, %v2098
        %v2100 = vsel %vm2025, %v2087, %v2099
        %v2101 = vsel %vm2027, %v2091, %v2100
        %v2102 = vsel %vm2029, %v2095, %v2101
        %v2104 = vsel %vm1218, %v2030, %v2102
        %vm2105 = vcmask 64512
        %v2106 = vsel %vm2105, %v2104, -inf
        %2107 = vmax.xlane.f32.xlu0 %v2106
        %v2108 = vpop.xlane.xlu0 %2107
        %v2109 = vsub.f32 %v2104, %v2108
        %v2110 = vmul.f32 %v2109, 1.442695
        %v2111 = vpow.pop %v2110
        %v2112 = vsel %vm2105, %v2111, 0.0
        %2113 = vadd.xlane.f32.xlu0 %v2112
        %v2114 = vpop.xlane.xlu0 %2113
        %v2115 = vrcp.pop %v2114
        %v2116 = vmul.f32 %v2111, %v2115
        %v2117 = vpack.c.bf16 %v2116, %v2116
        %v2119 = vsel %vm2105, %v2117, 0
        %vm2121 = vcmask 1043456
        %v2123 = vsel %vm2121, %v1219, 0
        %2125 = vmatprep.subr.bf16.mxu0 0
        %2126 = vmatpush1.bf16.msra.mxu0 0
        %2127 = vmatprep.subr.bf16.mxu0 0
        %2128 = vmatpush1.bf16.msra.mxu0 0
        %2129 = vmatprep.subr.bf16.mxu0 0
        %2130 = vmatpush1.bf16.msra.mxu0 0
        %2131 = vmatprep.subr.bf16.mxu0 0
        %2132 = vmatpush1.bf16.msra.mxu0 0
        %2133 = vmatprep.subr.bf16.mxu0 0
        %2134 = vmatpush1.bf16.msra.mxu0 0
        %2135 = vmatprep.subr.bf16.mxu0 0
        %2136 = vmatpush1.bf16.msra.mxu0 0
        %2137 = vmatprep.subr.bf16.mxu0 0
        %2138 = vmatpush1.bf16.msra.mxu0 0
        %2139 = vmatprep.subr.bf16.mxu0 0
        %2140 = vmatpush1.bf16.msra.mxu0 %v2123
        %2141 = vmatprep.subr.bf16.mxu0 0
        %2142 = vmatpush2.bf16.msra.mxu0 0
        %2143 = vmatprep.subr.bf16.mxu0 0
        %2144 = vmatpush2.bf16.msra.mxu0 0
        %2145 = vmatprep.subr.bf16.mxu0 0
        %2146 = vmatpush2.bf16.msra.mxu0 0
        %2147 = vmatprep.subr.bf16.mxu0 0
        %2148 = vmatpush2.bf16.msra.mxu0 0
        %2149 = vmatprep.subr.bf16.mxu0 0
        %2150 = vmatpush2.bf16.msra.mxu0 0
        %2151 = vmatprep.subr.bf16.mxu0 0
        %2152 = vmatpush2.bf16.msra.mxu0 0
        %2153 = vmatprep.subr.bf16.mxu0 0
        %2154 = vmatpush2.bf16.msra.mxu0 0
        %2155 = vmatprep.subr.bf16.mxu0 0
        %2156 = vmatpush2.bf16.msra.mxu0 0
        %2157 = vmatprep.mubr.bf16.mxu0 0
        %2158 = vmatmul.mubr.bf16.gmra.mxu0 %v2119
        %v2159 = vpop.f32.mrf.mxu0
        %v2160 = vadd.f32 0.0, %v2159
        %v2161 = vpop.f32.mrf.mxu0
        %v2162 = vpop.f32.mrf.mxu0
        %v2163 = vpop.f32.mrf.mxu0
        %2164 = vdwg.mxu0
        %v2165 = vld [vmem:[%s23] sm:$0xf]
        %v2166 = vld [vmem:[%s23 + $0x4] sm:$0xf]
        %v2167 = vpack.c.bf16 %v2160, %v2160
        %v2168 = vld [vmem:[%s25] sm:$0xf]
        %v2169 = vld [vmem:[%s25 + $0x4] sm:$0xf]
        %v2172 = vunpack.c.l.b16 %v2168
        %v2173 = vunpack.c.l.b16 %v2169
        %v2174 = vpack.c.b16 %v2173, %v2172
        %v2177 = vsel %vm1400, %v2167, 0
        %2179 = vmatprep.subr.bf16.mxu0 0
        %2180 = vmatpush1.bf16.msra.mxu0 0
        %2181 = vmatprep.subr.bf16.mxu0 0
        %2182 = vmatpush1.bf16.msra.mxu0 0
        %2183 = vmatprep.subr.bf16.mxu0 0
        %2184 = vmatpush1.bf16.msra.mxu0 0
        %2185 = vmatprep.subr.bf16.mxu0 0
        %2186 = vmatpush1.bf16.msra.mxu0 0
        %2187 = vmatprep.subr.bf16.mxu0 0
        %2188 = vmatpush1.bf16.msra.mxu0 0
        %2189 = vmatprep.subr.bf16.mxu0 0
        %2190 = vmatpush1.bf16.msra.mxu0 0
        %2191 = vmatprep.subr.bf16.mxu0 0
        %2192 = vmatpush1.bf16.msra.mxu0 0
        %2193 = vmatprep.subr.bf16.mxu0 0
        %2194 = vmatpush1.bf16.msra.mxu0 %v2174
        %2195 = vmatprep.subr.bf16.mxu0 0
        %2196 = vmatpush2.bf16.msra.mxu0 0
        %2197 = vmatprep.subr.bf16.mxu0 0
        %2198 = vmatpush2.bf16.msra.mxu0 0
        %2199 = vmatprep.subr.bf16.mxu0 0
        %2200 = vmatpush2.bf16.msra.mxu0 0
        %2201 = vmatprep.subr.bf16.mxu0 0
        %2202 = vmatpush2.bf16.msra.mxu0 0
        %2203 = vmatprep.subr.bf16.mxu0 0
        %2204 = vmatpush2.bf16.msra.mxu0 0
        %2205 = vmatprep.subr.bf16.mxu0 0
        %2206 = vmatpush2.bf16.msra.mxu0 0
        %2207 = vmatprep.subr.bf16.mxu0 0
        %2208 = vmatpush2.bf16.msra.mxu0 0
        %2209 = vmatprep.subr.bf16.mxu0 0
        %2210 = vmatpush2.bf16.msra.mxu0 0
        %2211 = vmatprep.mubr.bf16.mxu0 0
        %2212 = vmatmul.mubr.bf16.gmra.mxu0 %v2177
        %v2213 = vpop.f32.mrf.mxu0
        %v2214 = vadd.f32 0.0, %v2213
        %v2215 = vpop.f32.mrf.mxu0
        %v2216 = vpop.f32.mrf.mxu0
        %v2217 = vpop.f32.mrf.mxu0
        %2218 = vdwg.mxu0
        %v2221 = vunpack.c.l.b16 %v2165
        %v2222 = vunpack.c.l.b16 %v2166
        %v2223 = vpack.c.b16 %v2222, %v2221
        %v2225 = vsel %vm1400, %v1219, 0
        %2227 = vmatprep.subr.bf16.mxu0 0
        %2228 = vmatpush1.bf16.msra.mxu0 0
        %2229 = vmatprep.subr.bf16.mxu0 0
        %2230 = vmatpush1.bf16.msra.mxu0 0
        %2231 = vmatprep.subr.bf16.mxu0 0
        %2232 = vmatpush1.bf16.msra.mxu0 0
        %2233 = vmatprep.subr.bf16.mxu0 0
        %2234 = vmatpush1.bf16.msra.mxu0 0
        %2235 = vmatprep.subr.bf16.mxu0 0
        %2236 = vmatpush1.bf16.msra.mxu0 0
        %2237 = vmatprep.subr.bf16.mxu0 0
        %2238 = vmatpush1.bf16.msra.mxu0 0
        %2239 = vmatprep.subr.bf16.mxu0 0
        %2240 = vmatpush1.bf16.msra.mxu0 0
        %2241 = vmatprep.subr.bf16.mxu0 0
        %2242 = vmatpush1.bf16.msra.mxu0 %v2223
        %2243 = vmatprep.subr.bf16.mxu0 0
        %2244 = vmatpush2.bf16.msra.mxu0 0
        %2245 = vmatprep.subr.bf16.mxu0 0
        %2246 = vmatpush2.bf16.msra.mxu0 0
        %2247 = vmatprep.subr.bf16.mxu0 0
        %2248 = vmatpush2.bf16.msra.mxu0 0
        %2249 = vmatprep.subr.bf16.mxu0 0
        %2250 = vmatpush2.bf16.msra.mxu0 0
        %2251 = vmatprep.subr.bf16.mxu0 0
        %2252 = vmatpush2.bf16.msra.mxu0 0
        %2253 = vmatprep.subr.bf16.mxu0 0
        %2254 = vmatpush2.bf16.msra.mxu0 0
        %2255 = vmatprep.subr.bf16.mxu0 0
        %2256 = vmatpush2.bf16.msra.mxu0 0
        %2257 = vmatprep.subr.bf16.mxu0 0
        %2258 = vmatpush2.bf16.msra.mxu0 0
        %2259 = vmatprep.mubr.bf16.mxu0 0
        %2260 = vmatmul.mubr.bf16.gmra.mxu0 %v2225
        %v2261 = vpop.f32.mrf.mxu0
        %v2262 = vadd.f32 %v2214, %v2261
        %v2263 = vpop.f32.mrf.mxu0
        %v2264 = vpop.f32.mrf.mxu0
        %v2265 = vpop.f32.mrf.mxu0
        %2266 = vdwg.mxu0
        %v2267 = vld [vmem:[%s27] sm:$0x1]
        %v2269 = vlaneseq
        %v2270 = vshrl.u32 %v2269, 7
        %v2271 = vsub.s32 0, %v2270
        %v2272 = vrot.slane %v2267, %v2271
        %v2274 = vadd.f32 %v2262, %v2272
        %vm2275 = vcmp.ge.f32.partialorder %v2274, 0.0
        %v2276 = vmul.f32 %v2274, 0.01
        %v2277 = vsel %vm2275, %v2274, %v2276
        %2279 = vrot.lane.b32.xlu0 %v2277, 16
        %v2280 = vpop.permute.xlu0 %2279
        %v2282 = vsel %vm1400, %v1213, %v2280
        %v2283 = vpack.c.bf16 %v2282, %v2282
        %v2286 = vunpack.c.l.s4 1966171168
        %v2287 = vunpack.c.0.s8 %v2286
        %v2288 = vlaneseq
        %v2289 = vshrl.u32 %v2288, 7
        %v2290 = vsub.s32 %v2287, %v2289
        %v2291 = vrot.slane %v2283, %v2290
        %v2292 = vcombine.high %v2291, %v2291
        %v2294 = vunpack.c.l.s4 1966171168
        %v2295 = vunpack.c.0.s8 %v2294
        %v2296 = vlaneseq
        %v2297 = vshrl.u32 %v2296, 7
        %v2298 = vsub.s32 %v2295, %v2297
        %v2299 = vrot.slane %v2291, %v2298
        %v2301 = vunpack.c.l.s4 1966171168
        %v2302 = vunpack.c.0.s8 %v2301
        %v2303 = vlaneseq
        %v2304 = vshrl.u32 %v2303, 7
        %v2305 = vsub.s32 %v2302, %v2304
        %v2306 = vrot.slane %v2292, %v2305
        %v2307 = vcombine.high %v2299, %v2299
        %v2308 = vcombine.high %v2306, %v2306
        %v2309 = vunpack.i.l.s16 %v2299
        %v2310 = vunpack.i.h.s16 %v2299
        %v2311 = vunpack.i.l.s16 %v2306
        %v2312 = vunpack.i.h.s16 %v2306
        %v2313 = vunpack.i.l.s16 %v2307
        %v2314 = vunpack.i.h.s16 %v2307
        %v2315 = vunpack.i.l.s16 %v2308
        %v2316 = vunpack.i.h.s16 %v2308
        %v2317 = vpack.i.b16 %v2309, %v2309
        %v2318 = vpack.i.b16 %v2310, %v2310
        %v2319 = vpack.i.b16 %v2311, %v2311
        %v2320 = vpack.i.b16 %v2312, %v2312
        %v2321 = vpack.i.b16 %v2313, %v2313
        %v2322 = vpack.i.b16 %v2314, %v2314
        %v2323 = vpack.i.b16 %v2315, %v2315
        %v2324 = vpack.i.b16 %v2316, %v2316
        %v2325 = vlaneseq
        %v2326 = vshrl.u32 %v2325, 7
        %v2327 = vsub.s32 0, %v2326
        %v2328 = vrot.slane %v2317, %v2327
        %v2329 = vlaneseq
        %v2330 = vshrl.u32 %v2329, 7
        %v2331 = vsub.s32 0, %v2330
        %v2332 = vrot.slane %v2318, %v2331
        %v2333 = vlaneseq
        %v2334 = vshrl.u32 %v2333, 7
        %v2335 = vsub.s32 0, %v2334
        %v2336 = vrot.slane %v2319, %v2335
        %v2337 = vlaneseq
        %v2338 = vshrl.u32 %v2337, 7
        %v2339 = vsub.s32 0, %v2338
        %v2340 = vrot.slane %v2320, %v2339
        %v2341 = vlaneseq
        %v2342 = vshrl.u32 %v2341, 7
        %v2343 = vsub.s32 0, %v2342
        %v2344 = vrot.slane %v2321, %v2343
        %v2345 = vlaneseq
        %v2346 = vshrl.u32 %v2345, 7
        %v2347 = vsub.s32 0, %v2346
        %v2348 = vrot.slane %v2322, %v2347
        %v2349 = vlaneseq
        %v2350 = vshrl.u32 %v2349, 7
        %v2351 = vsub.s32 0, %v2350
        %v2352 = vrot.slane %v2323, %v2351
        %v2353 = vlaneseq
        %v2354 = vshrl.u32 %v2353, 7
        %v2355 = vsub.s32 0, %v2354
        %v2356 = vrot.slane %v2324, %v2355
        %v2358 = vpack.i.b16 %v2328, %v2328
        %v2360 = vlaneseq
        %v2361 = vshrl.u32 %v2360, 7
        %v2362 = vsub.s32 0, %v2361
        %v2363 = vrot.slane %v2358, %v2362
        %v2365 = vpack.i.b16 %v2332, %v2332
        %v2367 = vlaneseq
        %v2368 = vshrl.u32 %v2367, 7
        %v2369 = vsub.s32 0, %v2368
        %v2370 = vrot.slane %v2365, %v2369
        %v2372 = vpack.i.b16 %v2336, %v2336
        %v2374 = vlaneseq
        %v2375 = vshrl.u32 %v2374, 7
        %v2376 = vsub.s32 0, %v2375
        %v2377 = vrot.slane %v2372, %v2376
        %v2379 = vpack.i.b16 %v2340, %v2340
        %v2381 = vlaneseq
        %v2382 = vshrl.u32 %v2381, 7
        %v2383 = vsub.s32 0, %v2382
        %v2384 = vrot.slane %v2379, %v2383
        %v2386 = vpack.i.b16 %v2344, %v2344
        %v2388 = vlaneseq
        %v2389 = vshrl.u32 %v2388, 7
        %v2390 = vsub.s32 0, %v2389
        %v2391 = vrot.slane %v2386, %v2390
        %v2393 = vpack.i.b16 %v2348, %v2348
        %v2395 = vlaneseq
        %v2396 = vshrl.u32 %v2395, 7
        %v2397 = vsub.s32 0, %v2396
        %v2398 = vrot.slane %v2393, %v2397
        %v2400 = vpack.i.b16 %v2352, %v2352
        %v2402 = vlaneseq
        %v2403 = vshrl.u32 %v2402, 7
        %v2404 = vsub.s32 0, %v2403
        %v2405 = vrot.slane %v2400, %v2404
        %v2407 = vpack.i.b16 %v2356, %v2356
        %v2409 = vlaneseq
        %v2410 = vshrl.u32 %v2409, 7
        %v2411 = vsub.s32 0, %v2410
        %v2412 = vrot.slane %v2407, %v2411
        %v2413 = vsub.bf16 %v2363, %v2283
        %v2414 = vsub.bf16 %v2370, %v2283
        %v2415 = vsub.bf16 %v2377, %v2283
        %v2416 = vsub.bf16 %v2384, %v2283
        %v2417 = vsub.bf16 %v2391, %v2283
        %v2418 = vsub.bf16 %v2398, %v2283
        %v2419 = vsub.bf16 %v2405, %v2283
        %v2420 = vsub.bf16 %v2412, %v2283
        %v2421 = vand.u32 2147450879, %v2413
        %v2422 = vand.u32 2147450879, %v2414
        %v2423 = vand.u32 2147450879, %v2415
        %v2424 = vand.u32 2147450879, %v2416
        %v2425 = vand.u32 2147450879, %v2417
        %v2426 = vand.u32 2147450879, %v2418
        %v2427 = vand.u32 2147450879, %v2419
        %v2428 = vand.u32 2147450879, %v2420
        %v2429 = vld [vmem:[%s29] sm:$0xf]
        %v2430 = vld [vmem:[%s29 + $0x4] sm:$0xf]
        %v2431 = vld [vmem:[%s29 + $0x8] sm:$0xf]
        %v2432 = vld [vmem:[%s31] sm:$0x1]
        %v2434 = vlaneseq
        %v2435 = vshrl.u32 %v2434, 7
        %v2436 = vsub.s32 0, %v2435
        %v2437 = vrot.slane %v2432, %v2436
        %v2447 = vunpack.c.l.b16 %v2421
        %v2448 = vunpack.c.l.b16 %v2422
        %v2449 = vunpack.c.l.b16 %v2423
        %v2450 = vunpack.c.l.b16 %v2424
        %v2451 = vunpack.c.l.b16 %v2425
        %v2452 = vunpack.c.l.b16 %v2426
        %v2453 = vunpack.c.l.b16 %v2427
        %v2454 = vunpack.c.l.b16 %v2428
        %v2455 = vpack.c.b16 %v2448, %v2447
        %v2456 = vpack.c.b16 %v2450, %v2449
        %v2457 = vpack.c.b16 %v2452, %v2451
        %v2458 = vpack.c.b16 %v2454, %v2453
        %v2462 = vunpack.c.l.b16 %v2429
        %v2463 = vunpack.c.l.b16 %v2430
        %v2464 = vunpack.c.l.b16 %v2431
        %v2465 = vpack.c.b16 %v2463, %v2462
        %v2466 = vpack.c.b16 %v2464, %v2464
        %vm2468 = vcmask 195584
        %v2470 = vsel %vm2468, %v2455, 0
        %v2473 = vsel %vm2468, %v2456, 0
        %v2476 = vsel %vm2468, %v2457, 0
        %v2479 = vsel %vm2468, %v2458, 0
        %v2482 = vsel %vm2121, %v2466, 0
        %2484 = vmatprep.subr.bf16.mxu0 0
        %2485 = vmatpush1.bf16.msra.mxu0 0
        %2486 = vmatprep.subr.bf16.mxu0 0
        %2487 = vmatpush1.bf16.msra.mxu0 0
        %2488 = vmatprep.subr.bf16.mxu0 0
        %2489 = vmatpush1.bf16.msra.mxu0 0
        %2490 = vmatprep.subr.bf16.mxu0 0
        %2491 = vmatpush1.bf16.msra.mxu0 0
        %2492 = vmatprep.subr.bf16.mxu0 0
        %2493 = vmatpush1.bf16.msra.mxu0 0
        %2494 = vmatprep.subr.bf16.mxu0 0
        %2495 = vmatpush1.bf16.msra.mxu0 0
        %2496 = vmatprep.subr.bf16.mxu0 0
        %2497 = vmatpush1.bf16.msra.mxu0 %v2482
        %2498 = vmatprep.subr.bf16.mxu0 0
        %2499 = vmatpush1.bf16.msra.mxu0 %v2465
        %2500 = vmatprep.subr.bf16.mxu0 0
        %2501 = vmatpush2.bf16.msra.mxu0 0
        %2502 = vmatprep.subr.bf16.mxu0 0
        %2503 = vmatpush2.bf16.msra.mxu0 0
        %2504 = vmatprep.subr.bf16.mxu0 0
        %2505 = vmatpush2.bf16.msra.mxu0 0
        %2506 = vmatprep.subr.bf16.mxu0 0
        %2507 = vmatpush2.bf16.msra.mxu0 0
        %2508 = vmatprep.subr.bf16.mxu0 0
        %2509 = vmatpush2.bf16.msra.mxu0 0
        %2510 = vmatprep.subr.bf16.mxu0 0
        %2511 = vmatpush2.bf16.msra.mxu0 0
        %2512 = vmatprep.subr.bf16.mxu0 0
        %2513 = vmatpush2.bf16.msra.mxu0 0
        %2514 = vmatprep.subr.bf16.mxu0 0
        %2515 = vmatpush2.bf16.msra.mxu0 0
        %2516 = vmatprep.mubr.bf16.mxu0 0
        %2517 = vmatmul.mubr.bf16.gmra.mxu0 %v2470
        %v2518 = vpop.f32.mrf.mxu0
        %v2519 = vadd.f32 %v2437, %v2518
        %v2520 = vpop.f32.mrf.mxu0
        %v2521 = vpop.f32.mrf.mxu0
        %v2522 = vadd.f32 %v2437, %v2521
        %v2523 = vpop.f32.mrf.mxu0
        %2524 = vmatprep.mubr.bf16.mxu0 0
        %2525 = vmatmul.mubr.bf16.gmra.mxu0 %v2473
        %v2526 = vpop.f32.mrf.mxu0
        %v2527 = vadd.f32 %v2437, %v2526
        %v2528 = vpop.f32.mrf.mxu0
        %v2529 = vpop.f32.mrf.mxu0
        %v2530 = vadd.f32 %v2437, %v2529
        %v2531 = vpop.f32.mrf.mxu0
        %2532 = vmatprep.mubr.bf16.mxu0 0
        %2533 = vmatmul.mubr.bf16.gmra.mxu0 %v2476
        %v2534 = vpop.f32.mrf.mxu0
        %v2535 = vadd.f32 %v2437, %v2534
        %v2536 = vpop.f32.mrf.mxu0
        %v2537 = vpop.f32.mrf.mxu0
        %v2538 = vadd.f32 %v2437, %v2537
        %v2539 = vpop.f32.mrf.mxu0
        %2540 = vmatprep.mubr.bf16.mxu0 0
        %2541 = vmatmul.mubr.bf16.gmra.mxu0 %v2479
        %v2542 = vpop.f32.mrf.mxu0
        %v2543 = vadd.f32 %v2437, %v2542
        %v2544 = vpop.f32.mrf.mxu0
        %v2545 = vpop.f32.mrf.mxu0
        %v2546 = vadd.f32 %v2437, %v2545
        %v2547 = vpop.f32.mrf.mxu0
        %2548 = vdwg.mxu0
        %vm2549 = vcmp.ge.f32.partialorder %v2519, 0.0
        %vm2550 = vcmp.ge.f32.partialorder %v2522, 0.0
        %vm2551 = vcmp.ge.f32.partialorder %v2527, 0.0
        %vm2552 = vcmp.ge.f32.partialorder %v2530, 0.0
        %vm2553 = vcmp.ge.f32.partialorder %v2535, 0.0
        %vm2554 = vcmp.ge.f32.partialorder %v2538, 0.0
        %vm2555 = vcmp.ge.f32.partialorder %v2543, 0.0
        %vm2556 = vcmp.ge.f32.partialorder %v2546, 0.0
        %v2557 = vmul.f32 %v2519, 0.01
        %v2558 = vmul.f32 %v2522, 0.01
        %v2559 = vmul.f32 %v2527, 0.01
        %v2560 = vmul.f32 %v2530, 0.01
        %v2561 = vmul.f32 %v2535, 0.01
        %v2562 = vmul.f32 %v2538, 0.01
        %v2563 = vmul.f32 %v2543, 0.01
        %v2564 = vmul.f32 %v2546, 0.01
        %v2565 = vsel %vm2549, %v2519, %v2557
        %v2566 = vsel %vm2550, %v2522, %v2558
        %v2567 = vsel %vm2551, %v2527, %v2559
        %v2568 = vsel %vm2552, %v2530, %v2560
        %v2569 = vsel %vm2553, %v2535, %v2561
        %v2570 = vsel %vm2554, %v2538, %v2562
        %v2571 = vsel %vm2555, %v2543, %v2563
        %v2572 = vsel %vm2556, %v2546, %v2564
        %v2573 = vpack.c.bf16 %v2566, %v2565
        %v2574 = vpack.c.bf16 %v2568, %v2567
        %v2575 = vpack.c.bf16 %v2570, %v2569
        %v2576 = vpack.c.bf16 %v2572, %v2571
        %v2577 = vld [vmem:[%s33] sm:$0xf]
        %v2578 = vld [vmem:[%s33 + $0x4] sm:$0xf]
        %v2579 = vld [vmem:[%s33 + $0x8] sm:$0xf]
        %v2580 = vld [vmem:[%s33 + $0xc] sm:$0xf]
        %v2581 = vld [vmem:[%s35] sm:$0x1]
        %v2583 = vlaneseq
        %v2584 = vshrl.u32 %v2583, 7
        %v2585 = vsub.s32 0, %v2584
        %v2586 = vrot.slane %v2581, %v2585
        %v2592 = vunpack.c.l.b16 %v2577
        %v2593 = vunpack.c.l.b16 %v2578
        %v2594 = vunpack.c.l.b16 %v2579
        %v2595 = vunpack.c.l.b16 %v2580
        %v2596 = vpack.c.b16 %v2593, %v2592
        %v2597 = vpack.c.b16 %v2595, %v2594
        %v2601 = vsel %vm1529, %v2573, 0
        %v2604 = vsel %vm1529, %v2574, 0
        %v2607 = vsel %vm1529, %v2575, 0
        %v2610 = vsel %vm1529, %v2576, 0
        %2612 = vmatprep.subr.bf16.mxu0 0
        %2613 = vmatpush1.bf16.msra.mxu0 0
        %2614 = vmatprep.subr.bf16.mxu0 0
        %2615 = vmatpush1.bf16.msra.mxu0 0
        %2616 = vmatprep.subr.bf16.mxu0 0
        %2617 = vmatpush1.bf16.msra.mxu0 0
        %2618 = vmatprep.subr.bf16.mxu0 0
        %2619 = vmatpush1.bf16.msra.mxu0 0
        %2620 = vmatprep.subr.bf16.mxu0 0
        %2621 = vmatpush1.bf16.msra.mxu0 0
        %2622 = vmatprep.subr.bf16.mxu0 0
        %2623 = vmatpush1.bf16.msra.mxu0 0
        %2624 = vmatprep.subr.bf16.mxu0 0
        %2625 = vmatpush1.bf16.msra.mxu0 %v2597
        %2626 = vmatprep.subr.bf16.mxu0 0
        %2627 = vmatpush1.bf16.msra.mxu0 %v2596
        %2628 = vmatprep.subr.bf16.mxu0 0
        %2629 = vmatpush2.bf16.msra.mxu0 0
        %2630 = vmatprep.subr.bf16.mxu0 0
        %2631 = vmatpush2.bf16.msra.mxu0 0
        %2632 = vmatprep.subr.bf16.mxu0 0
        %2633 = vmatpush2.bf16.msra.mxu0 0
        %2634 = vmatprep.subr.bf16.mxu0 0
        %2635 = vmatpush2.bf16.msra.mxu0 0
        %2636 = vmatprep.subr.bf16.mxu0 0
        %2637 = vmatpush2.bf16.msra.mxu0 0
        %2638 = vmatprep.subr.bf16.mxu0 0
        %2639 = vmatpush2.bf16.msra.mxu0 0
        %2640 = vmatprep.subr.bf16.mxu0 0
        %2641 = vmatpush2.bf16.msra.mxu0 0
        %2642 = vmatprep.subr.bf16.mxu0 0
        %2643 = vmatpush2.bf16.msra.mxu0 0
        %2644 = vmatprep.mubr.bf16.mxu0 0
        %2645 = vmatmul.mubr.bf16.gmra.mxu0 %v2601
        %v2646 = vpop.f32.mrf.mxu0
        %v2647 = vadd.f32 %v2586, %v2646
        %v2648 = vpop.f32.mrf.mxu0
        %v2649 = vpop.f32.mrf.mxu0
        %v2650 = vadd.f32 %v2586, %v2649
        %v2651 = vpop.f32.mrf.mxu0
        %2652 = vmatprep.mubr.bf16.mxu0 0
        %2653 = vmatmul.mubr.bf16.gmra.mxu0 %v2604
        %v2654 = vpop.f32.mrf.mxu0
        %v2655 = vadd.f32 %v2586, %v2654
        %v2656 = vpop.f32.mrf.mxu0
        %v2657 = vpop.f32.mrf.mxu0
        %v2658 = vadd.f32 %v2586, %v2657
        %v2659 = vpop.f32.mrf.mxu0
        %2660 = vmatprep.mubr.bf16.mxu0 0
        %2661 = vmatmul.mubr.bf16.gmra.mxu0 %v2607
        %v2662 = vpop.f32.mrf.mxu0
        %v2663 = vadd.f32 %v2586, %v2662
        %v2664 = vpop.f32.mrf.mxu0
        %v2665 = vpop.f32.mrf.mxu0
        %v2666 = vadd.f32 %v2586, %v2665
        %v2667 = vpop.f32.mrf.mxu0
        %2668 = vmatprep.mubr.bf16.mxu0 0
        %2669 = vmatmul.mubr.bf16.gmra.mxu0 %v2610
        %v2670 = vpop.f32.mrf.mxu0
        %v2671 = vadd.f32 %v2586, %v2670
        %v2672 = vpop.f32.mrf.mxu0
        %v2673 = vpop.f32.mrf.mxu0
        %v2674 = vadd.f32 %v2586, %v2673
        %v2675 = vpop.f32.mrf.mxu0
        %2676 = vdwg.mxu0
        %vm2677 = vcmp.ge.f32.partialorder %v2647, 0.0
        %vm2678 = vcmp.ge.f32.partialorder %v2650, 0.0
        %vm2679 = vcmp.ge.f32.partialorder %v2655, 0.0
        %vm2680 = vcmp.ge.f32.partialorder %v2658, 0.0
        %vm2681 = vcmp.ge.f32.partialorder %v2663, 0.0
        %vm2682 = vcmp.ge.f32.partialorder %v2666, 0.0
        %vm2683 = vcmp.ge.f32.partialorder %v2671, 0.0
        %vm2684 = vcmp.ge.f32.partialorder %v2674, 0.0
        %v2685 = vmul.f32 %v2647, 0.01
        %v2686 = vmul.f32 %v2650, 0.01
        %v2687 = vmul.f32 %v2655, 0.01
        %v2688 = vmul.f32 %v2658, 0.01
        %v2689 = vmul.f32 %v2663, 0.01
        %v2690 = vmul.f32 %v2666, 0.01
        %v2691 = vmul.f32 %v2671, 0.01
        %v2692 = vmul.f32 %v2674, 0.01
        %v2693 = vsel %vm2677, %v2647, %v2685
        %v2694 = vsel %vm2678, %v2650, %v2686
        %v2695 = vsel %vm2679, %v2655, %v2687
        %v2696 = vsel %vm2680, %v2658, %v2688
        %v2697 = vsel %vm2681, %v2663, %v2689
        %v2698 = vsel %vm2682, %v2666, %v2690
        %v2699 = vsel %vm2683, %v2671, %v2691
        %v2700 = vsel %vm2684, %v2674, %v2692
        %v2701 = vpack.c.bf16 %v2694, %v2693
        %v2702 = vpack.c.bf16 %v2696, %v2695
        %v2703 = vpack.c.bf16 %v2698, %v2697
        %v2704 = vpack.c.bf16 %v2700, %v2699
        %v2705 = vld [vmem:[%s37] sm:$0xf]
        %v2706 = vld [vmem:[%s37 + $0x4] sm:$0xf]
        %v2707 = vld [vmem:[%s37 + $0x8] sm:$0xf]
        %v2708 = vld [vmem:[%s37 + $0xc] sm:$0xf]
        %v2709 = vld [vmem:[%s39] sm:$0x1]
        %v2711 = vlaneseq
        %v2712 = vshrl.u32 %v2711, 7
        %v2713 = vsub.s32 0, %v2712
        %v2714 = vrot.slane %v2709, %v2713
        %v2720 = vunpack.c.l.b16 %v2705
        %v2721 = vunpack.c.l.b16 %v2706
        %v2722 = vunpack.c.l.b16 %v2707
        %v2723 = vunpack.c.l.b16 %v2708
        %v2724 = vpack.c.b16 %v2721, %v2720
        %v2725 = vpack.c.b16 %v2723, %v2722
        %v2729 = vsel %vm1529, %v2701, 0
        %v2732 = vsel %vm1529, %v2702, 0
        %v2735 = vsel %vm1529, %v2703, 0
        %v2738 = vsel %vm1529, %v2704, 0
        %2740 = vmatprep.subr.bf16.mxu0 0
        %2741 = vmatpush1.bf16.msra.mxu0 0
        %2742 = vmatprep.subr.bf16.mxu0 0
        %2743 = vmatpush1.bf16.msra.mxu0 0
        %2744 = vmatprep.subr.bf16.mxu0 0
        %2745 = vmatpush1.bf16.msra.mxu0 0
        %2746 = vmatprep.subr.bf16.mxu0 0
        %2747 = vmatpush1.bf16.msra.mxu0 0
        %2748 = vmatprep.subr.bf16.mxu0 0
        %2749 = vmatpush1.bf16.msra.mxu0 0
        %2750 = vmatprep.subr.bf16.mxu0 0
        %2751 = vmatpush1.bf16.msra.mxu0 0
        %2752 = vmatprep.subr.bf16.mxu0 0
        %2753 = vmatpush1.bf16.msra.mxu0 %v2725
        %2754 = vmatprep.subr.bf16.mxu0 0
        %2755 = vmatpush1.bf16.msra.mxu0 %v2724
        %2756 = vmatprep.subr.bf16.mxu0 0
        %2757 = vmatpush2.bf16.msra.mxu0 0
        %2758 = vmatprep.subr.bf16.mxu0 0
        %2759 = vmatpush2.bf16.msra.mxu0 0
        %2760 = vmatprep.subr.bf16.mxu0 0
        %2761 = vmatpush2.bf16.msra.mxu0 0
        %2762 = vmatprep.subr.bf16.mxu0 0
        %2763 = vmatpush2.bf16.msra.mxu0 0
        %2764 = vmatprep.subr.bf16.mxu0 0
        %2765 = vmatpush2.bf16.msra.mxu0 0
        %2766 = vmatprep.subr.bf16.mxu0 0
        %2767 = vmatpush2.bf16.msra.mxu0 0
        %2768 = vmatprep.subr.bf16.mxu0 0
        %2769 = vmatpush2.bf16.msra.mxu0 0
        %2770 = vmatprep.subr.bf16.mxu0 0
        %2771 = vmatpush2.bf16.msra.mxu0 0
        %2772 = vmatprep.mubr.bf16.mxu0 0
        %2773 = vmatmul.mubr.bf16.gmra.mxu0 %v2729
        %v2774 = vpop.f32.mrf.mxu0
        %v2775 = vadd.f32 %v2714, %v2774
        %v2776 = vpop.f32.mrf.mxu0
        %v2777 = vpop.f32.mrf.mxu0
        %v2778 = vadd.f32 %v2714, %v2777
        %v2779 = vpop.f32.mrf.mxu0
        %2780 = vmatprep.mubr.bf16.mxu0 0
        %2781 = vmatmul.mubr.bf16.gmra.mxu0 %v2732
        %v2782 = vpop.f32.mrf.mxu0
        %v2783 = vadd.f32 %v2714, %v2782
        %v2784 = vpop.f32.mrf.mxu0
        %v2785 = vpop.f32.mrf.mxu0
        %v2786 = vadd.f32 %v2714, %v2785
        %v2787 = vpop.f32.mrf.mxu0
        %2788 = vmatprep.mubr.bf16.mxu0 0
        %2789 = vmatmul.mubr.bf16.gmra.mxu0 %v2735
        %v2790 = vpop.f32.mrf.mxu0
        %v2791 = vadd.f32 %v2714, %v2790
        %v2792 = vpop.f32.mrf.mxu0
        %v2793 = vpop.f32.mrf.mxu0
        %v2794 = vadd.f32 %v2714, %v2793
        %v2795 = vpop.f32.mrf.mxu0
        %2796 = vmatprep.mubr.bf16.mxu0 0
        %2797 = vmatmul.mubr.bf16.gmra.mxu0 %v2738
        %v2798 = vpop.f32.mrf.mxu0
        %v2799 = vadd.f32 %v2714, %v2798
        %v2800 = vpop.f32.mrf.mxu0
        %v2801 = vpop.f32.mrf.mxu0
        %v2802 = vadd.f32 %v2714, %v2801
        %v2803 = vpop.f32.mrf.mxu0
        %2804 = vdwg.mxu0
        %vm2805 = vcmp.ge.f32.partialorder %v2775, 0.0
        %vm2806 = vcmp.ge.f32.partialorder %v2778, 0.0
        %vm2807 = vcmp.ge.f32.partialorder %v2783, 0.0
        %vm2808 = vcmp.ge.f32.partialorder %v2786, 0.0
        %vm2809 = vcmp.ge.f32.partialorder %v2791, 0.0
        %vm2810 = vcmp.ge.f32.partialorder %v2794, 0.0
        %vm2811 = vcmp.ge.f32.partialorder %v2799, 0.0
        %vm2812 = vcmp.ge.f32.partialorder %v2802, 0.0
        %v2813 = vmul.f32 %v2775, 0.01
        %v2814 = vmul.f32 %v2778, 0.01
        %v2815 = vmul.f32 %v2783, 0.01
        %v2816 = vmul.f32 %v2786, 0.01
        %v2817 = vmul.f32 %v2791, 0.01
        %v2818 = vmul.f32 %v2794, 0.01
        %v2819 = vmul.f32 %v2799, 0.01
        %v2820 = vmul.f32 %v2802, 0.01
        %v2821 = vsel %vm2805, %v2775, %v2813
        %v2822 = vsel %vm2806, %v2778, %v2814
        %v2823 = vsel %vm2807, %v2783, %v2815
        %v2824 = vsel %vm2808, %v2786, %v2816
        %v2825 = vsel %vm2809, %v2791, %v2817
        %v2826 = vsel %vm2810, %v2794, %v2818
        %v2827 = vsel %vm2811, %v2799, %v2819
        %v2828 = vsel %vm2812, %v2802, %v2820
        %v2829 = vpack.c.bf16 %v2822, %v2821
        %v2830 = vpack.c.bf16 %v2824, %v2823
        %v2831 = vpack.c.bf16 %v2826, %v2825
        %v2832 = vpack.c.bf16 %v2828, %v2827
        %v2833 = vld [vmem:[%s41] sm:$0xf]
        %v2834 = vld [vmem:[%s41 + $0x4] sm:$0xf]
        %v2835 = vld [vmem:[%s43] sm:$0x1]
        %v2837 = vlaneseq
        %v2838 = vshrl.u32 %v2837, 7
        %v2839 = vsub.s32 0, %v2838
        %v2840 = vrot.slane %v2835, %v2839
        %v2844 = vunpack.c.l.b16 %v2833
        %v2845 = vunpack.c.l.b16 %v2834
        %v2846 = vpack.c.b16 %v2845, %v2844
        %v2849 = vsel %vm1400, %v2829, 0
        %v2852 = vsel %vm1400, %v2830, 0
        %v2855 = vsel %vm1400, %v2831, 0
        %v2858 = vsel %vm1400, %v2832, 0
        %2860 = vmatprep.subr.bf16.mxu0 0
        %2861 = vmatpush1.bf16.msra.mxu0 0
        %2862 = vmatprep.subr.bf16.mxu0 0
        %2863 = vmatpush1.bf16.msra.mxu0 0
        %2864 = vmatprep.subr.bf16.mxu0 0
        %2865 = vmatpush1.bf16.msra.mxu0 0
        %2866 = vmatprep.subr.bf16.mxu0 0
        %2867 = vmatpush1.bf16.msra.mxu0 0
        %2868 = vmatprep.subr.bf16.mxu0 0
        %2869 = vmatpush1.bf16.msra.mxu0 0
        %2870 = vmatprep.subr.bf16.mxu0 0
        %2871 = vmatpush1.bf16.msra.mxu0 0
        %2872 = vmatprep.subr.bf16.mxu0 0
        %2873 = vmatpush1.bf16.msra.mxu0 0
        %2874 = vmatprep.subr.bf16.mxu0 0
        %2875 = vmatpush1.bf16.msra.mxu0 %v2846
        %2876 = vmatprep.subr.bf16.mxu0 0
        %2877 = vmatpush2.bf16.msra.mxu0 0
        %2878 = vmatprep.subr.bf16.mxu0 0
        %2879 = vmatpush2.bf16.msra.mxu0 0
        %2880 = vmatprep.subr.bf16.mxu0 0
        %2881 = vmatpush2.bf16.msra.mxu0 0
        %2882 = vmatprep.subr.bf16.mxu0 0
        %2883 = vmatpush2.bf16.msra.mxu0 0
        %2884 = vmatprep.subr.bf16.mxu0 0
        %2885 = vmatpush2.bf16.msra.mxu0 0
        %2886 = vmatprep.subr.bf16.mxu0 0
        %2887 = vmatpush2.bf16.msra.mxu0 0
        %2888 = vmatprep.subr.bf16.mxu0 0
        %2889 = vmatpush2.bf16.msra.mxu0 0
        %2890 = vmatprep.subr.bf16.mxu0 0
        %2891 = vmatpush2.bf16.msra.mxu0 0
        %2892 = vmatprep.mubr.bf16.mxu0 0
        %2893 = vmatmul.mubr.bf16.gmra.mxu0 %v2849
        %v2894 = vpop.f32.mrf.mxu0
        %v2895 = vadd.f32 %v2840, %v2894
        %v2896 = vpop.f32.mrf.mxu0
        %v2897 = vpop.f32.mrf.mxu0
        %v2898 = vadd.f32 %v2840, %v2897
        %v2899 = vpop.f32.mrf.mxu0
        %2900 = vmatprep.mubr.bf16.mxu0 0
        %2901 = vmatmul.mubr.bf16.gmra.mxu0 %v2852
        %v2902 = vpop.f32.mrf.mxu0
        %v2903 = vadd.f32 %v2840, %v2902
        %v2904 = vpop.f32.mrf.mxu0
        %v2905 = vpop.f32.mrf.mxu0
        %v2906 = vadd.f32 %v2840, %v2905
        %v2907 = vpop.f32.mrf.mxu0
        %2908 = vmatprep.mubr.bf16.mxu0 0
        %2909 = vmatmul.mubr.bf16.gmra.mxu0 %v2855
        %v2910 = vpop.f32.mrf.mxu0
        %v2911 = vadd.f32 %v2840, %v2910
        %v2912 = vpop.f32.mrf.mxu0
        %v2913 = vpop.f32.mrf.mxu0
        %v2914 = vadd.f32 %v2840, %v2913
        %v2915 = vpop.f32.mrf.mxu0
        %2916 = vmatprep.mubr.bf16.mxu0 0
        %2917 = vmatmul.mubr.bf16.gmra.mxu0 %v2858
        %v2918 = vpop.f32.mrf.mxu0
        %v2919 = vadd.f32 %v2840, %v2918
        %v2920 = vpop.f32.mrf.mxu0
        %v2921 = vpop.f32.mrf.mxu0
        %v2922 = vadd.f32 %v2840, %v2921
        %v2923 = vpop.f32.mrf.mxu0
        %2924 = vdwg.mxu0
        %vm2925 = vcmp.ge.f32.partialorder %v2895, 0.0
        %vm2926 = vcmp.ge.f32.partialorder %v2898, 0.0
        %vm2927 = vcmp.ge.f32.partialorder %v2903, 0.0
        %vm2928 = vcmp.ge.f32.partialorder %v2906, 0.0
        %vm2929 = vcmp.ge.f32.partialorder %v2911, 0.0
        %vm2930 = vcmp.ge.f32.partialorder %v2914, 0.0
        %vm2931 = vcmp.ge.f32.partialorder %v2919, 0.0
        %vm2932 = vcmp.ge.f32.partialorder %v2922, 0.0
        %v2933 = vmul.f32 %v2895, 0.01
        %v2934 = vmul.f32 %v2898, 0.01
        %v2935 = vmul.f32 %v2903, 0.01
        %v2936 = vmul.f32 %v2906, 0.01
        %v2937 = vmul.f32 %v2911, 0.01
        %v2938 = vmul.f32 %v2914, 0.01
        %v2939 = vmul.f32 %v2919, 0.01
        %v2940 = vmul.f32 %v2922, 0.01
        %v2941 = vsel %vm2925, %v2895, %v2933
        %v2942 = vsel %vm2926, %v2898, %v2934
        %v2943 = vsel %vm2927, %v2903, %v2935
        %v2944 = vsel %vm2928, %v2906, %v2936
        %v2945 = vsel %vm2929, %v2911, %v2937
        %v2946 = vsel %vm2930, %v2914, %v2938
        %v2947 = vsel %vm2931, %v2919, %v2939
        %v2948 = vsel %vm2932, %v2922, %v2940
        %v2949 = vpack.c.bf16 %v2942, %v2941
        %v2950 = vpack.c.bf16 %v2944, %v2943
        %v2951 = vpack.c.bf16 %v2946, %v2945
        %v2952 = vpack.c.bf16 %v2948, %v2947
        %v2953 = vunpack.c.l.bf16 %v2949
        %v2954 = vunpack.c.h.bf16 %v2949
        %v2955 = vunpack.c.l.bf16 %v2950
        %v2956 = vunpack.c.h.bf16 %v2950
        %v2957 = vunpack.c.l.bf16 %v2951
        %v2958 = vunpack.c.h.bf16 %v2951
        %v2959 = vunpack.c.l.bf16 %v2952
        %v2960 = vunpack.c.h.bf16 %v2952
        %v2961 = vld [vmem:[%s45] sm:$0x1]
        %v2963 = vlaneseq
        %v2964 = vshrl.u32 %v2963, 7
        %v2965 = vsub.s32 0, %v2964
        %v2966 = vrot.slane %v2961, %v2965
        %v2968 = vmul.f32 %v2953, %v2966
        %v2969 = vmul.f32 %v2954, %v2966
        %v2970 = vmul.f32 %v2955, %v2966
        %v2971 = vmul.f32 %v2956, %v2966
        %v2972 = vmul.f32 %v2957, %v2966
        %v2973 = vmul.f32 %v2958, %v2966
        %v2974 = vmul.f32 %v2959, %v2966
        %v2975 = vmul.f32 %v2960, %v2966
        %v2976 = vsel %vm1400, %v2968, 0.0
        %2977 = vadd.xlane.f32.xlu0 %v2976
        %v2978 = vpop.xlane.xlu0 %2977
        %v2979 = vsel %vm1400, %v2969, 0.0
        %2980 = vadd.xlane.f32.xlu0 %v2979
        %v2981 = vpop.xlane.xlu0 %2980
        %v2982 = vsel %vm1400, %v2970, 0.0
        %2983 = vadd.xlane.f32.xlu0 %v2982
        %v2984 = vpop.xlane.xlu0 %2983
        %v2985 = vsel %vm1400, %v2971, 0.0
        %2986 = vadd.xlane.f32.xlu0 %v2985
        %v2987 = vpop.xlane.xlu0 %2986
        %v2988 = vsel %vm1400, %v2972, 0.0
        %2989 = vadd.xlane.f32.xlu0 %v2988
        %v2990 = vpop.xlane.xlu0 %2989
        %v2991 = vsel %vm1400, %v2973, 0.0
        %2992 = vadd.xlane.f32.xlu0 %v2991
        %v2993 = vpop.xlane.xlu0 %2992
        %v2994 = vsel %vm1400, %v2974, 0.0
        %2995 = vadd.xlane.f32.xlu0 %v2994
        %v2996 = vpop.xlane.xlu0 %2995
        %v2997 = vsel %vm1400, %v2975, 0.0
        %2998 = vadd.xlane.f32.xlu0 %v2997
        %v2999 = vpop.xlane.xlu0 %2998
        %v3000 = vld [vmem:[#allocation3] sm:$0x1]
        %v3002 = vlaneseq
        %v3003 = vshrl.u32 %v3002, 7
        %v3004 = vsub.s32 0, %v3003
        %v3005 = vrot.slane %v3000, %v3004
        %v3007 = vadd.f32 %v2978, %v3005
        %v3008 = vadd.f32 %v2981, %v3005
        %v3009 = vadd.f32 %v2984, %v3005
        %v3010 = vadd.f32 %v2987, %v3005
        %v3011 = vadd.f32 %v2990, %v3005
        %v3012 = vadd.f32 %v2993, %v3005
        %v3013 = vadd.f32 %v2996, %v3005
        %v3014 = vadd.f32 %v2999, %v3005
        %v3015 = vsub.f32 %v3007, 1e+08
        %v3016 = vsub.f32 %v3008, 1e+08
        %v3017 = vsub.f32 %v3009, 1e+08
        %v3018 = vsub.f32 %v3010, 1e+08
        %v3019 = vsub.f32 %v3011, 1e+08
        %v3020 = vsub.f32 %v3012, 1e+08
        %v3021 = vsub.f32 %v3013, 1e+08
        %v3022 = vsub.f32 %v3014, 1e+08
        %3031 = vset.pattern.permute.xlu0 0
        %3032 = vperm.xlu0 %3031, %v3015
        %v3033 = vpop.permute.xlu0 %3032
        %3034 = vset.pattern.permute.xlu0 0
        %3035 = vperm.xlu0 %3034, %v3016
        %v3036 = vpop.permute.xlu0 %3035
        %3037 = vset.pattern.permute.xlu0 0
        %3038 = vperm.xlu0 %3037, %v3017
        %v3039 = vpop.permute.xlu0 %3038
        %3040 = vset.pattern.permute.xlu0 0
        %3041 = vperm.xlu0 %3040, %v3018
        %v3042 = vpop.permute.xlu0 %3041
        %3043 = vset.pattern.permute.xlu0 0
        %3044 = vperm.xlu0 %3043, %v3019
        %v3045 = vpop.permute.xlu0 %3044
        %3046 = vset.pattern.permute.xlu0 0
        %3047 = vperm.xlu0 %3046, %v3020
        %v3048 = vpop.permute.xlu0 %3047
        %3049 = vset.pattern.permute.xlu0 0
        %3050 = vperm.xlu0 %3049, %v3021
        %v3051 = vpop.permute.xlu0 %3050
        %3052 = vset.pattern.permute.xlu0 0
        %3053 = vperm.xlu0 %3052, %v3022
        %v3054 = vpop.permute.xlu0 %3053
        %v3055 = vlaneseq
        %v3056 = vshrl.u32 %v3055, 7
        %v3057 = vsub.s32 %v1217, %v3056
        %v3058 = vrot.slane %v3033, %v3057
        %v3059 = vlaneseq
        %v3060 = vshrl.u32 %v3059, 7
        %v3061 = vsub.s32 %v1217, %v3060
        %v3062 = vrot.slane %v3036, %v3061
        %v3063 = vlaneseq
        %v3064 = vshrl.u32 %v3063, 7
        %v3065 = vsub.s32 %v1217, %v3064
        %v3066 = vrot.slane %v3039, %v3065
        %v3067 = vlaneseq
        %v3068 = vshrl.u32 %v3067, 7
        %v3069 = vsub.s32 %v1217, %v3068
        %v3070 = vrot.slane %v3042, %v3069
        %v3071 = vlaneseq
        %v3072 = vshrl.u32 %v3071, 7
        %v3073 = vsub.s32 %v1217, %v3072
        %v3074 = vrot.slane %v3045, %v3073
        %v3075 = vlaneseq
        %v3076 = vshrl.u32 %v3075, 7
        %v3077 = vsub.s32 %v1217, %v3076
        %v3078 = vrot.slane %v3048, %v3077
        %v3079 = vlaneseq
        %v3080 = vshrl.u32 %v3079, 7
        %v3081 = vsub.s32 %v1217, %v3080
        %v3082 = vrot.slane %v3051, %v3081
        %v3083 = vlaneseq
        %v3084 = vshrl.u32 %v3083, 7
        %v3085 = vsub.s32 %v1217, %v3084
        %v3086 = vrot.slane %v3054, %v3085
        %v3087 = vsel %vm2017, %v3062, %v3058
        %v3088 = vsel %vm2019, %v3066, %v3087
        %v3089 = vsel %vm2021, %v3070, %v3088
        %v3090 = vsel %vm2023, %v3074, %v3089
        %v3091 = vsel %vm2025, %v3078, %v3090
        %v3092 = vsel %vm2027, %v3082, %v3091
        %v3093 = vsel %vm2029, %v3086, %v3092
        %3103 = vset.pattern.permute.xlu0 0
        %3104 = vperm.xlu0 %3103, %v3007
        %v3105 = vpop.permute.xlu0 %3104
        %3106 = vset.pattern.permute.xlu0 0
        %3107 = vperm.xlu0 %3106, %v3008
        %v3108 = vpop.permute.xlu0 %3107
        %3109 = vset.pattern.permute.xlu0 0
        %3110 = vperm.xlu0 %3109, %v3009
        %v3111 = vpop.permute.xlu0 %3110
        %3112 = vset.pattern.permute.xlu0 0
        %3113 = vperm.xlu0 %3112, %v3010
        %v3114 = vpop.permute.xlu0 %3113
        %3115 = vset.pattern.permute.xlu0 0
        %3116 = vperm.xlu0 %3115, %v3011
        %v3117 = vpop.permute.xlu0 %3116
        %3118 = vset.pattern.permute.xlu0 0
        %3119 = vperm.xlu0 %3118, %v3012
        %v3120 = vpop.permute.xlu0 %3119
        %3121 = vset.pattern.permute.xlu0 0
        %3122 = vperm.xlu0 %3121, %v3013
        %v3123 = vpop.permute.xlu0 %3122
        %3124 = vset.pattern.permute.xlu0 0
        %3125 = vperm.xlu0 %3124, %v3014
        %v3126 = vpop.permute.xlu0 %3125
        %v3127 = vlaneseq
        %v3128 = vshrl.u32 %v3127, 7
        %v3129 = vsub.s32 %v1217, %v3128
        %v3130 = vrot.slane %v3105, %v3129
        %v3131 = vlaneseq
        %v3132 = vshrl.u32 %v3131, 7
        %v3133 = vsub.s32 %v1217, %v3132
        %v3134 = vrot.slane %v3108, %v3133
        %v3135 = vlaneseq
        %v3136 = vshrl.u32 %v3135, 7
        %v3137 = vsub.s32 %v1217, %v3136
        %v3138 = vrot.slane %v3111, %v3137
        %v3139 = vlaneseq
        %v3140 = vshrl.u32 %v3139, 7
        %v3141 = vsub.s32 %v1217, %v3140
        %v3142 = vrot.slane %v3114, %v3141
        %v3143 = vlaneseq
        %v3144 = vshrl.u32 %v3143, 7
        %v3145 = vsub.s32 %v1217, %v3144
        %v3146 = vrot.slane %v3117, %v3145
        %v3147 = vlaneseq
        %v3148 = vshrl.u32 %v3147, 7
        %v3149 = vsub.s32 %v1217, %v3148
        %v3150 = vrot.slane %v3120, %v3149
        %v3151 = vlaneseq
        %v3152 = vshrl.u32 %v3151, 7
        %v3153 = vsub.s32 %v1217, %v3152
        %v3154 = vrot.slane %v3123, %v3153
        %v3155 = vlaneseq
        %v3156 = vshrl.u32 %v3155, 7
        %v3157 = vsub.s32 %v1217, %v3156
        %v3158 = vrot.slane %v3126, %v3157
        %v3159 = vsel %vm2017, %v3134, %v3130
        %v3160 = vsel %vm2019, %v3138, %v3159
        %v3161 = vsel %vm2021, %v3142, %v3160
        %v3162 = vsel %vm2023, %v3146, %v3161
        %v3163 = vsel %vm2025, %v3150, %v3162
        %v3164 = vsel %vm2027, %v3154, %v3163
        %v3165 = vsel %vm2029, %v3158, %v3164
        %v3167 = vsel %vm1218, %v3093, %v3165
        %v3168 = vsel %vm2105, %v3167, -inf
        %3169 = vmax.xlane.f32.xlu0 %v3168
        %v3170 = vpop.xlane.xlu0 %3169
        %v3171 = vsub.f32 %v3167, %v3170
        %v3172 = vmul.f32 %v3171, 1.442695
        %v3173 = vpow.pop %v3172
        %v3174 = vsel %vm2105, %v3173, 0.0
        %3175 = vadd.xlane.f32.xlu0 %v3174
        %v3176 = vpop.xlane.xlu0 %3175
        %v3177 = vrcp.pop %v3176
        %v3178 = vmul.f32 %v3173, %v3177
        %v3179 = vpack.c.bf16 %v3178, %v3178
        %v3181 = vsel %vm2105, %v3179, 0
        %v3184 = vsel %vm2121, %v2283, 0
        %3186 = vmatprep.subr.bf16.mxu0 0
        %3187 = vmatpush1.bf16.msra.mxu0 0
        %3188 = vmatprep.subr.bf16.mxu0 0
        %3189 = vmatpush1.bf16.msra.mxu0 0
        %3190 = vmatprep.subr.bf16.mxu0 0
        %3191 = vmatpush1.bf16.msra.mxu0 0
        %3192 = vmatprep.subr.bf16.mxu0 0
        %3193 = vmatpush1.bf16.msra.mxu0 0
        %3194 = vmatprep.subr.bf16.mxu0 0
        %3195 = vmatpush1.bf16.msra.mxu0 0
        %3196 = vmatprep.subr.bf16.mxu0 0
        %3197 = vmatpush1.bf16.msra.mxu0 0
        %3198 = vmatprep.subr.bf16.mxu0 0
        %3199 = vmatpush1.bf16.msra.mxu0 0
        %3200 = vmatprep.subr.bf16.mxu0 0
        %3201 = vmatpush1.bf16.msra.mxu0 %v3184
        %3202 = vmatprep.subr.bf16.mxu0 0
        %3203 = vmatpush2.bf16.msra.mxu0 0
        %3204 = vmatprep.subr.bf16.mxu0 0
        %3205 = vmatpush2.bf16.msra.mxu0 0
        %3206 = vmatprep.subr.bf16.mxu0 0
        %3207 = vmatpush2.bf16.msra.mxu0 0
        %3208 = vmatprep.subr.bf16.mxu0 0
        %3209 = vmatpush2.bf16.msra.mxu0 0
        %3210 = vmatprep.subr.bf16.mxu0 0
        %3211 = vmatpush2.bf16.msra.mxu0 0
        %3212 = vmatprep.subr.bf16.mxu0 0
        %3213 = vmatpush2.bf16.msra.mxu0 0
        %3214 = vmatprep.subr.bf16.mxu0 0
        %3215 = vmatpush2.bf16.msra.mxu0 0
        %3216 = vmatprep.subr.bf16.mxu0 0
        %3217 = vmatpush2.bf16.msra.mxu0 0
        %3218 = vmatprep.mubr.bf16.mxu0 0
        %3219 = vmatmul.mubr.bf16.gmra.mxu0 %v3181
        %v3220 = vpop.f32.mrf.mxu0
        %v3221 = vadd.f32 0.0, %v3220
        %v3222 = vpop.f32.mrf.mxu0
        %v3223 = vpop.f32.mrf.mxu0
        %v3224 = vpop.f32.mrf.mxu0
        %3225 = vdwg.mxu0
        %v3226 = vld [vmem:[%s49] sm:$0xf]
        %v3227 = vld [vmem:[%s49 + $0x4] sm:$0xf]
        %v3228 = vld [vmem:[%s49 + $0x8] sm:$0xf]
        %v3229 = vpack.c.bf16 %v3221, %v3221
        %v3230 = vld [vmem:[%s51] sm:$0xf]
        %v3231 = vld [vmem:[%s51 + $0x4] sm:$0xf]
        %v3232 = vld [vmem:[%s51 + $0x8] sm:$0xf]
        %v3236 = vunpack.c.l.b16 %v3230
        %v3237 = vunpack.c.l.b16 %v3231
        %v3238 = vunpack.c.l.b16 %v3232
        %v3239 = vpack.c.b16 %v3237, %v3236
        %v3240 = vpack.c.b16 %v3238, %v3238
        %v3243 = vsel %vm2468, %v3229, 0
        %v3246 = vsel %vm2121, %v3240, 0
        %3248 = vmatprep.subr.bf16.mxu0 0
        %3249 = vmatpush1.bf16.msra.mxu0 0
        %3250 = vmatprep.subr.bf16.mxu0 0
        %3251 = vmatpush1.bf16.msra.mxu0 0
        %3252 = vmatprep.subr.bf16.mxu0 0
        %3253 = vmatpush1.bf16.msra.mxu0 0
        %3254 = vmatprep.subr.bf16.mxu0 0
        %3255 = vmatpush1.bf16.msra.mxu0 0
        %3256 = vmatprep.subr.bf16.mxu0 0
        %3257 = vmatpush1.bf16.msra.mxu0 0
        %3258 = vmatprep.subr.bf16.mxu0 0
        %3259 = vmatpush1.bf16.msra.mxu0 0
        %3260 = vmatprep.subr.bf16.mxu0 0
        %3261 = vmatpush1.bf16.msra.mxu0 %v3246
        %3262 = vmatprep.subr.bf16.mxu0 0
        %3263 = vmatpush1.bf16.msra.mxu0 %v3239
        %3264 = vmatprep.subr.bf16.mxu0 0
        %3265 = vmatpush2.bf16.msra.mxu0 0
        %3266 = vmatprep.subr.bf16.mxu0 0
        %3267 = vmatpush2.bf16.msra.mxu0 0
        %3268 = vmatprep.subr.bf16.mxu0 0
        %3269 = vmatpush2.bf16.msra.mxu0 0
        %3270 = vmatprep.subr.bf16.mxu0 0
        %3271 = vmatpush2.bf16.msra.mxu0 0
        %3272 = vmatprep.subr.bf16.mxu0 0
        %3273 = vmatpush2.bf16.msra.mxu0 0
        %3274 = vmatprep.subr.bf16.mxu0 0
        %3275 = vmatpush2.bf16.msra.mxu0 0
        %3276 = vmatprep.subr.bf16.mxu0 0
        %3277 = vmatpush2.bf16.msra.mxu0 0
        %3278 = vmatprep.subr.bf16.mxu0 0
        %3279 = vmatpush2.bf16.msra.mxu0 0
        %3280 = vmatprep.mubr.bf16.mxu0 0
        %3281 = vmatmul.mubr.bf16.gmra.mxu0 %v3243
        %v3282 = vpop.f32.mrf.mxu0
        %v3283 = vadd.f32 0.0, %v3282
        %v3284 = vpop.f32.mrf.mxu0
        %v3285 = vpop.f32.mrf.mxu0
        %v3286 = vpop.f32.mrf.mxu0
        %3287 = vdwg.mxu0
        %v3291 = vunpack.c.l.b16 %v3226
        %v3292 = vunpack.c.l.b16 %v3227
        %v3293 = vunpack.c.l.b16 %v3228
        %v3294 = vpack.c.b16 %v3292, %v3291
        %v3295 = vpack.c.b16 %v3293, %v3293
        %v3297 = vsel %vm2468, %v2283, 0
        %v3300 = vsel %vm2121, %v3295, 0
        %3302 = vmatprep.subr.bf16.mxu0 0
        %3303 = vmatpush1.bf16.msra.mxu0 0
        %3304 = vmatprep.subr.bf16.mxu0 0
        %3305 = vmatpush1.bf16.msra.mxu0 0
        %3306 = vmatprep.subr.bf16.mxu0 0
        %3307 = vmatpush1.bf16.msra.mxu0 0
        %3308 = vmatprep.subr.bf16.mxu0 0
        %3309 = vmatpush1.bf16.msra.mxu0 0
        %3310 = vmatprep.subr.bf16.mxu0 0
        %3311 = vmatpush1.bf16.msra.mxu0 0
        %3312 = vmatprep.subr.bf16.mxu0 0
        %3313 = vmatpush1.bf16.msra.mxu0 0
        %3314 = vmatprep.subr.bf16.mxu0 0
        %3315 = vmatpush1.bf16.msra.mxu0 %v3300
        %3316 = vmatprep.subr.bf16.mxu0 0
        %3317 = vmatpush1.bf16.msra.mxu0 %v3294
        %3318 = vmatprep.subr.bf16.mxu0 0
        %3319 = vmatpush2.bf16.msra.mxu0 0
        %3320 = vmatprep.subr.bf16.mxu0 0
        %3321 = vmatpush2.bf16.msra.mxu0 0
        %3322 = vmatprep.subr.bf16.mxu0 0
        %3323 = vmatpush2.bf16.msra.mxu0 0
        %3324 = vmatprep.subr.bf16.mxu0 0
        %3325 = vmatpush2.bf16.msra.mxu0 0
        %3326 = vmatprep.subr.bf16.mxu0 0
        %3327 = vmatpush2.bf16.msra.mxu0 0
        %3328 = vmatprep.subr.bf16.mxu0 0
        %3329 = vmatpush2.bf16.msra.mxu0 0
        %3330 = vmatprep.subr.bf16.mxu0 0
        %3331 = vmatpush2.bf16.msra.mxu0 0
        %3332 = vmatprep.subr.bf16.mxu0 0
        %3333 = vmatpush2.bf16.msra.mxu0 0
        %3334 = vmatprep.mubr.bf16.mxu0 0
        %3335 = vmatmul.mubr.bf16.gmra.mxu0 %v3297
        %v3336 = vpop.f32.mrf.mxu0
        %v3337 = vadd.f32 %v3283, %v3336
        %v3338 = vpop.f32.mrf.mxu0
        %v3339 = vpop.f32.mrf.mxu0
        %v3340 = vpop.f32.mrf.mxu0
        %3341 = vdwg.mxu0
        %v3342 = vld [vmem:[%s53] sm:$0x1]
        %v3344 = vlaneseq
        %v3345 = vshrl.u32 %v3344, 7
        %v3346 = vsub.s32 0, %v3345
        %v3347 = vrot.slane %v3342, %v3346
        %v3349 = vadd.f32 %v3337, %v3347
        %vm3350 = vcmp.ge.f32.partialorder %v3349, 0.0
        %v3351 = vmul.f32 %v3349, 0.01
        %v3352 = vsel %vm3350, %v3349, %v3351
        %3354 = vrot.lane.b32.xlu0 %v3352, 24
        %v3355 = vpop.permute.xlu0 %3354
        %v3357 = vsel %vm2468, %v2282, %v3355
        %v3358 = vpack.c.bf16 %v3357, %v3357
        %v3361 = vunpack.c.l.s4 1966171168
        %v3362 = vunpack.c.0.s8 %v3361
        %v3363 = vlaneseq
        %v3364 = vshrl.u32 %v3363, 7
        %v3365 = vsub.s32 %v3362, %v3364
        %v3366 = vrot.slane %v3358, %v3365
        %v3367 = vcombine.high %v3366, %v3366
        %v3369 = vunpack.c.l.s4 1966171168
        %v3370 = vunpack.c.0.s8 %v3369
        %v3371 = vlaneseq
        %v3372 = vshrl.u32 %v3371, 7
        %v3373 = vsub.s32 %v3370, %v3372
        %v3374 = vrot.slane %v3366, %v3373
        %v3376 = vunpack.c.l.s4 1966171168
        %v3377 = vunpack.c.0.s8 %v3376
        %v3378 = vlaneseq
        %v3379 = vshrl.u32 %v3378, 7
        %v3380 = vsub.s32 %v3377, %v3379
        %v3381 = vrot.slane %v3367, %v3380
        %v3382 = vcombine.high %v3374, %v3374
        %v3383 = vcombine.high %v3381, %v3381
        %v3384 = vunpack.i.l.s16 %v3374
        %v3385 = vunpack.i.h.s16 %v3374
        %v3386 = vunpack.i.l.s16 %v3381
        %v3387 = vunpack.i.h.s16 %v3381
        %v3388 = vunpack.i.l.s16 %v3382
        %v3389 = vunpack.i.h.s16 %v3382
        %v3390 = vunpack.i.l.s16 %v3383
        %v3391 = vunpack.i.h.s16 %v3383
        %v3392 = vpack.i.b16 %v3384, %v3384
        %v3393 = vpack.i.b16 %v3385, %v3385
        %v3394 = vpack.i.b16 %v3386, %v3386
        %v3395 = vpack.i.b16 %v3387, %v3387
        %v3396 = vpack.i.b16 %v3388, %v3388
        %v3397 = vpack.i.b16 %v3389, %v3389
        %v3398 = vpack.i.b16 %v3390, %v3390
        %v3399 = vpack.i.b16 %v3391, %v3391
        %v3400 = vlaneseq
        %v3401 = vshrl.u32 %v3400, 7
        %v3402 = vsub.s32 0, %v3401
        %v3403 = vrot.slane %v3392, %v3402
        %v3404 = vlaneseq
        %v3405 = vshrl.u32 %v3404, 7
        %v3406 = vsub.s32 0, %v3405
        %v3407 = vrot.slane %v3393, %v3406
        %v3408 = vlaneseq
        %v3409 = vshrl.u32 %v3408, 7
        %v3410 = vsub.s32 0, %v3409
        %v3411 = vrot.slane %v3394, %v3410
        %v3412 = vlaneseq
        %v3413 = vshrl.u32 %v3412, 7
        %v3414 = vsub.s32 0, %v3413
        %v3415 = vrot.slane %v3395, %v3414
        %v3416 = vlaneseq
        %v3417 = vshrl.u32 %v3416, 7
        %v3418 = vsub.s32 0, %v3417
        %v3419 = vrot.slane %v3396, %v3418
        %v3420 = vlaneseq
        %v3421 = vshrl.u32 %v3420, 7
        %v3422 = vsub.s32 0, %v3421
        %v3423 = vrot.slane %v3397, %v3422
        %v3424 = vlaneseq
        %v3425 = vshrl.u32 %v3424, 7
        %v3426 = vsub.s32 0, %v3425
        %v3427 = vrot.slane %v3398, %v3426
        %v3428 = vlaneseq
        %v3429 = vshrl.u32 %v3428, 7
        %v3430 = vsub.s32 0, %v3429
        %v3431 = vrot.slane %v3399, %v3430
        %v3433 = vpack.i.b16 %v3403, %v3403
        %v3435 = vlaneseq
        %v3436 = vshrl.u32 %v3435, 7
        %v3437 = vsub.s32 0, %v3436
        %v3438 = vrot.slane %v3433, %v3437
        %v3440 = vpack.i.b16 %v3407, %v3407
        %v3442 = vlaneseq
        %v3443 = vshrl.u32 %v3442, 7
        %v3444 = vsub.s32 0, %v3443
        %v3445 = vrot.slane %v3440, %v3444
        %v3447 = vpack.i.b16 %v3411, %v3411
        %v3449 = vlaneseq
        %v3450 = vshrl.u32 %v3449, 7
        %v3451 = vsub.s32 0, %v3450
        %v3452 = vrot.slane %v3447, %v3451
        %v3454 = vpack.i.b16 %v3415, %v3415
        %v3456 = vlaneseq
        %v3457 = vshrl.u32 %v3456, 7
        %v3458 = vsub.s32 0, %v3457
        %v3459 = vrot.slane %v3454, %v3458
        %v3461 = vpack.i.b16 %v3419, %v3419
        %v3463 = vlaneseq
        %v3464 = vshrl.u32 %v3463, 7
        %v3465 = vsub.s32 0, %v3464
        %v3466 = vrot.slane %v3461, %v3465
        %v3468 = vpack.i.b16 %v3423, %v3423
        %v3470 = vlaneseq
        %v3471 = vshrl.u32 %v3470, 7
        %v3472 = vsub.s32 0, %v3471
        %v3473 = vrot.slane %v3468, %v3472
        %v3475 = vpack.i.b16 %v3427, %v3427
        %v3477 = vlaneseq
        %v3478 = vshrl.u32 %v3477, 7
        %v3479 = vsub.s32 0, %v3478
        %v3480 = vrot.slane %v3475, %v3479
        %v3482 = vpack.i.b16 %v3431, %v3431
        %v3484 = vlaneseq
        %v3485 = vshrl.u32 %v3484, 7
        %v3486 = vsub.s32 0, %v3485
        %v3487 = vrot.slane %v3482, %v3486
        %v3488 = vsub.bf16 %v3438, %v3358
        %v3489 = vsub.bf16 %v3445, %v3358
        %v3490 = vsub.bf16 %v3452, %v3358
        %v3491 = vsub.bf16 %v3459, %v3358
        %v3492 = vsub.bf16 %v3466, %v3358
        %v3493 = vsub.bf16 %v3473, %v3358
        %v3494 = vsub.bf16 %v3480, %v3358
        %v3495 = vsub.bf16 %v3487, %v3358
        %v3496 = vand.u32 2147450879, %v3488
        %v3497 = vand.u32 2147450879, %v3489
        %v3498 = vand.u32 2147450879, %v3490
        %v3499 = vand.u32 2147450879, %v3491
        %v3500 = vand.u32 2147450879, %v3492
        %v3501 = vand.u32 2147450879, %v3493
        %v3502 = vand.u32 2147450879, %v3494
        %v3503 = vand.u32 2147450879, %v3495
        %v3504 = vld [vmem:[%s55] sm:$0xf]
        %v3505 = vld [vmem:[%s55 + $0x4] sm:$0xf]
        %v3506 = vld [vmem:[%s55 + $0x8] sm:$0xf]
        %v3507 = vld [vmem:[%s55 + $0xc] sm:$0xf]
        %v3508 = vld [vmem:[%s57] sm:$0x1]
        %v3510 = vlaneseq
        %v3511 = vshrl.u32 %v3510, 7
        %v3512 = vsub.s32 0, %v3511
        %v3513 = vrot.slane %v3508, %v3512
        %v3523 = vunpack.c.l.b16 %v3496
        %v3524 = vunpack.c.l.b16 %v3497
        %v3525 = vunpack.c.l.b16 %v3498
        %v3526 = vunpack.c.l.b16 %v3499
        %v3527 = vunpack.c.l.b16 %v3500
        %v3528 = vunpack.c.l.b16 %v3501
        %v3529 = vunpack.c.l.b16 %v3502
        %v3530 = vunpack.c.l.b16 %v3503
        %v3531 = vpack.c.b16 %v3524, %v3523
        %v3532 = vpack.c.b16 %v3526, %v3525
        %v3533 = vpack.c.b16 %v3528, %v3527
        %v3534 = vpack.c.b16 %v3530, %v3529
        %v3539 = vunpack.c.l.b16 %v3504
        %v3540 = vunpack.c.l.b16 %v3505
        %v3541 = vunpack.c.l.b16 %v3506
        %v3542 = vunpack.c.l.b16 %v3507
        %v3543 = vpack.c.b16 %v3540, %v3539
        %v3544 = vpack.c.b16 %v3542, %v3541
        %v3548 = vsel %vm1529, %v3531, 0
        %v3551 = vsel %vm1529, %v3532, 0
        %v3554 = vsel %vm1529, %v3533, 0
        %v3557 = vsel %vm1529, %v3534, 0
        %3559 = vmatprep.subr.bf16.mxu0 0
        %3560 = vmatpush1.bf16.msra.mxu0 0
        %3561 = vmatprep.subr.bf16.mxu0 0
        %3562 = vmatpush1.bf16.msra.mxu0 0
        %3563 = vmatprep.subr.bf16.mxu0 0
        %3564 = vmatpush1.bf16.msra.mxu0 0
        %3565 = vmatprep.subr.bf16.mxu0 0
        %3566 = vmatpush1.bf16.msra.mxu0 0
        %3567 = vmatprep.subr.bf16.mxu0 0
        %3568 = vmatpush1.bf16.msra.mxu0 0
        %3569 = vmatprep.subr.bf16.mxu0 0
        %3570 = vmatpush1.bf16.msra.mxu0 0
        %3571 = vmatprep.subr.bf16.mxu0 0
        %3572 = vmatpush1.bf16.msra.mxu0 %v3544
        %3573 = vmatprep.subr.bf16.mxu0 0
        %3574 = vmatpush1.bf16.msra.mxu0 %v3543
        %3575 = vmatprep.subr.bf16.mxu0 0
        %3576 = vmatpush2.bf16.msra.mxu0 0
        %3577 = vmatprep.subr.bf16.mxu0 0
        %3578 = vmatpush2.bf16.msra.mxu0 0
        %3579 = vmatprep.subr.bf16.mxu0 0
        %3580 = vmatpush2.bf16.msra.mxu0 0
        %3581 = vmatprep.subr.bf16.mxu0 0
        %3582 = vmatpush2.bf16.msra.mxu0 0
        %3583 = vmatprep.subr.bf16.mxu0 0
        %3584 = vmatpush2.bf16.msra.mxu0 0
        %3585 = vmatprep.subr.bf16.mxu0 0
        %3586 = vmatpush2.bf16.msra.mxu0 0
        %3587 = vmatprep.subr.bf16.mxu0 0
        %3588 = vmatpush2.bf16.msra.mxu0 0
        %3589 = vmatprep.subr.bf16.mxu0 0
        %3590 = vmatpush2.bf16.msra.mxu0 0
        %3591 = vmatprep.mubr.bf16.mxu0 0
        %3592 = vmatmul.mubr.bf16.gmra.mxu0 %v3548
        %v3593 = vpop.f32.mrf.mxu0
        %v3594 = vadd.f32 %v3513, %v3593
        %v3595 = vpop.f32.mrf.mxu0
        %v3596 = vpop.f32.mrf.mxu0
        %v3597 = vadd.f32 %v3513, %v3596
        %v3598 = vpop.f32.mrf.mxu0
        %3599 = vmatprep.mubr.bf16.mxu0 0
        %3600 = vmatmul.mubr.bf16.gmra.mxu0 %v3551
        %v3601 = vpop.f32.mrf.mxu0
        %v3602 = vadd.f32 %v3513, %v3601
        %v3603 = vpop.f32.mrf.mxu0
        %v3604 = vpop.f32.mrf.mxu0
        %v3605 = vadd.f32 %v3513, %v3604
        %v3606 = vpop.f32.mrf.mxu0
        %3607 = vmatprep.mubr.bf16.mxu0 0
        %3608 = vmatmul.mubr.bf16.gmra.mxu0 %v3554
        %v3609 = vpop.f32.mrf.mxu0
        %v3610 = vadd.f32 %v3513, %v3609
        %v3611 = vpop.f32.mrf.mxu0
        %v3612 = vpop.f32.mrf.mxu0
        %v3613 = vadd.f32 %v3513, %v3612
        %v3614 = vpop.f32.mrf.mxu0
        %3615 = vmatprep.mubr.bf16.mxu0 0
        %3616 = vmatmul.mubr.bf16.gmra.mxu0 %v3557
        %v3617 = vpop.f32.mrf.mxu0
        %v3618 = vadd.f32 %v3513, %v3617
        %v3619 = vpop.f32.mrf.mxu0
        %v3620 = vpop.f32.mrf.mxu0
        %v3621 = vadd.f32 %v3513, %v3620
        %v3622 = vpop.f32.mrf.mxu0
        %3623 = vdwg.mxu0
        %vm3624 = vcmp.ge.f32.partialorder %v3594, 0.0
        %vm3625 = vcmp.ge.f32.partialorder %v3597, 0.0
        %vm3626 = vcmp.ge.f32.partialorder %v3602, 0.0
        %vm3627 = vcmp.ge.f32.partialorder %v3605, 0.0
        %vm3628 = vcmp.ge.f32.partialorder %v3610, 0.0
        %vm3629 = vcmp.ge.f32.partialorder %v3613, 0.0
        %vm3630 = vcmp.ge.f32.partialorder %v3618, 0.0
        %vm3631 = vcmp.ge.f32.partialorder %v3621, 0.0
        %v3632 = vmul.f32 %v3594, 0.01
        %v3633 = vmul.f32 %v3597, 0.01
        %v3634 = vmul.f32 %v3602, 0.01
        %v3635 = vmul.f32 %v3605, 0.01
        %v3636 = vmul.f32 %v3610, 0.01
        %v3637 = vmul.f32 %v3613, 0.01
        %v3638 = vmul.f32 %v3618, 0.01
        %v3639 = vmul.f32 %v3621, 0.01
        %v3640 = vsel %vm3624, %v3594, %v3632
        %v3641 = vsel %vm3625, %v3597, %v3633
        %v3642 = vsel %vm3626, %v3602, %v3634
        %v3643 = vsel %vm3627, %v3605, %v3635
        %v3644 = vsel %vm3628, %v3610, %v3636
        %v3645 = vsel %vm3629, %v3613, %v3637
        %v3646 = vsel %vm3630, %v3618, %v3638
        %v3647 = vsel %vm3631, %v3621, %v3639
        %v3648 = vpack.c.bf16 %v3641, %v3640
        %v3649 = vpack.c.bf16 %v3643, %v3642
        %v3650 = vpack.c.bf16 %v3645, %v3644
        %v3651 = vpack.c.bf16 %v3647, %v3646
        %v3652 = vld [vmem:[%s59] sm:$0xf]
        %v3653 = vld [vmem:[%s59 + $0x4] sm:$0xf]
        %v3654 = vld [vmem:[%s59 + $0x8] sm:$0xf]
        %v3655 = vld [vmem:[%s59 + $0xc] sm:$0xf]
        %v3656 = vld [vmem:[%s61] sm:$0x1]
        %v3658 = vlaneseq
        %v3659 = vshrl.u32 %v3658, 7
        %v3660 = vsub.s32 0, %v3659
        %v3661 = vrot.slane %v3656, %v3660
        %v3667 = vunpack.c.l.b16 %v3652
        %v3668 = vunpack.c.l.b16 %v3653
        %v3669 = vunpack.c.l.b16 %v3654
        %v3670 = vunpack.c.l.b16 %v3655
        %v3671 = vpack.c.b16 %v3668, %v3667
        %v3672 = vpack.c.b16 %v3670, %v3669
        %v3676 = vsel %vm1529, %v3648, 0
        %v3679 = vsel %vm1529, %v3649, 0
        %v3682 = vsel %vm1529, %v3650, 0
        %v3685 = vsel %vm1529, %v3651, 0
        %3687 = vmatprep.subr.bf16.mxu0 0
        %3688 = vmatpush1.bf16.msra.mxu0 0
        %3689 = vmatprep.subr.bf16.mxu0 0
        %3690 = vmatpush1.bf16.msra.mxu0 0
        %3691 = vmatprep.subr.bf16.mxu0 0
        %3692 = vmatpush1.bf16.msra.mxu0 0
        %3693 = vmatprep.subr.bf16.mxu0 0
        %3694 = vmatpush1.bf16.msra.mxu0 0
        %3695 = vmatprep.subr.bf16.mxu0 0
        %3696 = vmatpush1.bf16.msra.mxu0 0
        %3697 = vmatprep.subr.bf16.mxu0 0
        %3698 = vmatpush1.bf16.msra.mxu0 0
        %3699 = vmatprep.subr.bf16.mxu0 0
        %3700 = vmatpush1.bf16.msra.mxu0 %v3672
        %3701 = vmatprep.subr.bf16.mxu0 0
        %3702 = vmatpush1.bf16.msra.mxu0 %v3671
        %3703 = vmatprep.subr.bf16.mxu0 0
        %3704 = vmatpush2.bf16.msra.mxu0 0
        %3705 = vmatprep.subr.bf16.mxu0 0
        %3706 = vmatpush2.bf16.msra.mxu0 0
        %3707 = vmatprep.subr.bf16.mxu0 0
        %3708 = vmatpush2.bf16.msra.mxu0 0
        %3709 = vmatprep.subr.bf16.mxu0 0
        %3710 = vmatpush2.bf16.msra.mxu0 0
        %3711 = vmatprep.subr.bf16.mxu0 0
        %3712 = vmatpush2.bf16.msra.mxu0 0
        %3713 = vmatprep.subr.bf16.mxu0 0
        %3714 = vmatpush2.bf16.msra.mxu0 0
        %3715 = vmatprep.subr.bf16.mxu0 0
        %3716 = vmatpush2.bf16.msra.mxu0 0
        %3717 = vmatprep.subr.bf16.mxu0 0
        %3718 = vmatpush2.bf16.msra.mxu0 0
        %3719 = vmatprep.mubr.bf16.mxu0 0
        %3720 = vmatmul.mubr.bf16.gmra.mxu0 %v3676
        %v3721 = vpop.f32.mrf.mxu0
        %v3722 = vadd.f32 %v3661, %v3721
        %v3723 = vpop.f32.mrf.mxu0
        %v3724 = vpop.f32.mrf.mxu0
        %v3725 = vadd.f32 %v3661, %v3724
        %v3726 = vpop.f32.mrf.mxu0
        %3727 = vmatprep.mubr.bf16.mxu0 0
        %3728 = vmatmul.mubr.bf16.gmra.mxu0 %v3679
        %v3729 = vpop.f32.mrf.mxu0
        %v3730 = vadd.f32 %v3661, %v3729
        %v3731 = vpop.f32.mrf.mxu0
        %v3732 = vpop.f32.mrf.mxu0
        %v3733 = vadd.f32 %v3661, %v3732
        %v3734 = vpop.f32.mrf.mxu0
        %3735 = vmatprep.mubr.bf16.mxu0 0
        %3736 = vmatmul.mubr.bf16.gmra.mxu0 %v3682
        %v3737 = vpop.f32.mrf.mxu0
        %v3738 = vadd.f32 %v3661, %v3737
        %v3739 = vpop.f32.mrf.mxu0
        %v3740 = vpop.f32.mrf.mxu0
        %v3741 = vadd.f32 %v3661, %v3740
        %v3742 = vpop.f32.mrf.mxu0
        %3743 = vmatprep.mubr.bf16.mxu0 0
        %3744 = vmatmul.mubr.bf16.gmra.mxu0 %v3685
        %v3745 = vpop.f32.mrf.mxu0
        %v3746 = vadd.f32 %v3661, %v3745
        %v3747 = vpop.f32.mrf.mxu0
        %v3748 = vpop.f32.mrf.mxu0
        %v3749 = vadd.f32 %v3661, %v3748
        %v3750 = vpop.f32.mrf.mxu0
        %3751 = vdwg.mxu0
        %vm3752 = vcmp.ge.f32.partialorder %v3722, 0.0
        %vm3753 = vcmp.ge.f32.partialorder %v3725, 0.0
        %vm3754 = vcmp.ge.f32.partialorder %v3730, 0.0
        %vm3755 = vcmp.ge.f32.partialorder %v3733, 0.0
        %vm3756 = vcmp.ge.f32.partialorder %v3738, 0.0
        %vm3757 = vcmp.ge.f32.partialorder %v3741, 0.0
        %vm3758 = vcmp.ge.f32.partialorder %v3746, 0.0
        %vm3759 = vcmp.ge.f32.partialorder %v3749, 0.0
        %v3760 = vmul.f32 %v3722, 0.01
        %v3761 = vmul.f32 %v3725, 0.01
        %v3762 = vmul.f32 %v3730, 0.01
        %v3763 = vmul.f32 %v3733, 0.01
        %v3764 = vmul.f32 %v3738, 0.01
        %v3765 = vmul.f32 %v3741, 0.01
        %v3766 = vmul.f32 %v3746, 0.01
        %v3767 = vmul.f32 %v3749, 0.01
        %v3768 = vsel %vm3752, %v3722, %v3760
        %v3769 = vsel %vm3753, %v3725, %v3761
        %v3770 = vsel %vm3754, %v3730, %v3762
        %v3771 = vsel %vm3755, %v3733, %v3763
        %v3772 = vsel %vm3756, %v3738, %v3764
        %v3773 = vsel %vm3757, %v3741, %v3765
        %v3774 = vsel %vm3758, %v3746, %v3766
        %v3775 = vsel %vm3759, %v3749, %v3767
        %v3776 = vpack.c.bf16 %v3769, %v3768
        %v3777 = vpack.c.bf16 %v3771, %v3770
        %v3778 = vpack.c.bf16 %v3773, %v3772
        %v3779 = vpack.c.bf16 %v3775, %v3774
        %v3780 = vld [vmem:[%s63] sm:$0xf]
        %v3781 = vld [vmem:[%s63 + $0x4] sm:$0xf]
        %v3782 = vld [vmem:[%s63 + $0x8] sm:$0xf]
        %v3783 = vld [vmem:[%s63 + $0xc] sm:$0xf]
        %v3784 = vld [vmem:[%s65] sm:$0x1]
        %v3786 = vlaneseq
        %v3787 = vshrl.u32 %v3786, 7
        %v3788 = vsub.s32 0, %v3787
        %v3789 = vrot.slane %v3784, %v3788
        %v3795 = vunpack.c.l.b16 %v3780
        %v3796 = vunpack.c.l.b16 %v3781
        %v3797 = vunpack.c.l.b16 %v3782
        %v3798 = vunpack.c.l.b16 %v3783
        %v3799 = vpack.c.b16 %v3796, %v3795
        %v3800 = vpack.c.b16 %v3798, %v3797
        %v3804 = vsel %vm1529, %v3776, 0
        %v3807 = vsel %vm1529, %v3777, 0
        %v3810 = vsel %vm1529, %v3778, 0
        %v3813 = vsel %vm1529, %v3779, 0
        %3815 = vmatprep.subr.bf16.mxu0 0
        %3816 = vmatpush1.bf16.msra.mxu0 0
        %3817 = vmatprep.subr.bf16.mxu0 0
        %3818 = vmatpush1.bf16.msra.mxu0 0
        %3819 = vmatprep.subr.bf16.mxu0 0
        %3820 = vmatpush1.bf16.msra.mxu0 0
        %3821 = vmatprep.subr.bf16.mxu0 0
        %3822 = vmatpush1.bf16.msra.mxu0 0
        %3823 = vmatprep.subr.bf16.mxu0 0
        %3824 = vmatpush1.bf16.msra.mxu0 0
        %3825 = vmatprep.subr.bf16.mxu0 0
        %3826 = vmatpush1.bf16.msra.mxu0 0
        %3827 = vmatprep.subr.bf16.mxu0 0
        %3828 = vmatpush1.bf16.msra.mxu0 %v3800
        %3829 = vmatprep.subr.bf16.mxu0 0
        %3830 = vmatpush1.bf16.msra.mxu0 %v3799
        %3831 = vmatprep.subr.bf16.mxu0 0
        %3832 = vmatpush2.bf16.msra.mxu0 0
        %3833 = vmatprep.subr.bf16.mxu0 0
        %3834 = vmatpush2.bf16.msra.mxu0 0
        %3835 = vmatprep.subr.bf16.mxu0 0
        %3836 = vmatpush2.bf16.msra.mxu0 0
        %3837 = vmatprep.subr.bf16.mxu0 0
        %3838 = vmatpush2.bf16.msra.mxu0 0
        %3839 = vmatprep.subr.bf16.mxu0 0
        %3840 = vmatpush2.bf16.msra.mxu0 0
        %3841 = vmatprep.subr.bf16.mxu0 0
        %3842 = vmatpush2.bf16.msra.mxu0 0
        %3843 = vmatprep.subr.bf16.mxu0 0
        %3844 = vmatpush2.bf16.msra.mxu0 0
        %3845 = vmatprep.subr.bf16.mxu0 0
        %3846 = vmatpush2.bf16.msra.mxu0 0
        %3847 = vmatprep.mubr.bf16.mxu0 0
        %3848 = vmatmul.mubr.bf16.gmra.mxu0 %v3804
        %v3849 = vpop.f32.mrf.mxu0
        %v3850 = vadd.f32 %v3789, %v3849
        %v3851 = vpop.f32.mrf.mxu0
        %v3852 = vpop.f32.mrf.mxu0
        %v3853 = vadd.f32 %v3789, %v3852
        %v3854 = vpop.f32.mrf.mxu0
        %3855 = vmatprep.mubr.bf16.mxu0 0
        %3856 = vmatmul.mubr.bf16.gmra.mxu0 %v3807
        %v3857 = vpop.f32.mrf.mxu0
        %v3858 = vadd.f32 %v3789, %v3857
        %v3859 = vpop.f32.mrf.mxu0
        %v3860 = vpop.f32.mrf.mxu0
        %v3861 = vadd.f32 %v3789, %v3860
        %v3862 = vpop.f32.mrf.mxu0
        %3863 = vmatprep.mubr.bf16.mxu0 0
        %3864 = vmatmul.mubr.bf16.gmra.mxu0 %v3810
        %v3865 = vpop.f32.mrf.mxu0
        %v3866 = vadd.f32 %v3789, %v3865
        %v3867 = vpop.f32.mrf.mxu0
        %v3868 = vpop.f32.mrf.mxu0
        %v3869 = vadd.f32 %v3789, %v3868
        %v3870 = vpop.f32.mrf.mxu0
        %3871 = vmatprep.mubr.bf16.mxu0 0
        %3872 = vmatmul.mubr.bf16.gmra.mxu0 %v3813
        %v3873 = vpop.f32.mrf.mxu0
        %v3874 = vadd.f32 %v3789, %v3873
        %v3875 = vpop.f32.mrf.mxu0
        %v3876 = vpop.f32.mrf.mxu0
        %v3877 = vadd.f32 %v3789, %v3876
        %v3878 = vpop.f32.mrf.mxu0
        %3879 = vdwg.mxu0
        %vm3880 = vcmp.ge.f32.partialorder %v3850, 0.0
        %vm3881 = vcmp.ge.f32.partialorder %v3853, 0.0
        %vm3882 = vcmp.ge.f32.partialorder %v3858, 0.0
        %vm3883 = vcmp.ge.f32.partialorder %v3861, 0.0
        %vm3884 = vcmp.ge.f32.partialorder %v3866, 0.0
        %vm3885 = vcmp.ge.f32.partialorder %v3869, 0.0
        %vm3886 = vcmp.ge.f32.partialorder %v3874, 0.0
        %vm3887 = vcmp.ge.f32.partialorder %v3877, 0.0
        %v3888 = vmul.f32 %v3850, 0.01
        %v3889 = vmul.f32 %v3853, 0.01
        %v3890 = vmul.f32 %v3858, 0.01
        %v3891 = vmul.f32 %v3861, 0.01
        %v3892 = vmul.f32 %v3866, 0.01
        %v3893 = vmul.f32 %v3869, 0.01
        %v3894 = vmul.f32 %v3874, 0.01
        %v3895 = vmul.f32 %v3877, 0.01
        %v3896 = vsel %vm3880, %v3850, %v3888
        %v3897 = vsel %vm3881, %v3853, %v3889
        %v3898 = vsel %vm3882, %v3858, %v3890
        %v3899 = vsel %vm3883, %v3861, %v3891
        %v3900 = vsel %vm3884, %v3866, %v3892
        %v3901 = vsel %vm3885, %v3869, %v3893
        %v3902 = vsel %vm3886, %v3874, %v3894
        %v3903 = vsel %vm3887, %v3877, %v3895
        %v3904 = vpack.c.bf16 %v3897, %v3896
        %v3905 = vpack.c.bf16 %v3899, %v3898
        %v3906 = vpack.c.bf16 %v3901, %v3900
        %v3907 = vpack.c.bf16 %v3903, %v3902
        %v3908 = vld [vmem:[%s67] sm:$0xf]
        %v3909 = vld [vmem:[%s67 + $0x4] sm:$0xf]
        %v3910 = vld [vmem:[%s69] sm:$0x1]
        %v3912 = vlaneseq
        %v3913 = vshrl.u32 %v3912, 7
        %v3914 = vsub.s32 0, %v3913
        %v3915 = vrot.slane %v3910, %v3914
        %v3919 = vunpack.c.l.b16 %v3908
        %v3920 = vunpack.c.l.b16 %v3909
        %v3921 = vpack.c.b16 %v3920, %v3919
        %v3924 = vsel %vm1400, %v3904, 0
        %v3927 = vsel %vm1400, %v3905, 0
        %v3930 = vsel %vm1400, %v3906, 0
        %v3933 = vsel %vm1400, %v3907, 0
        %3935 = vmatprep.subr.bf16.mxu0 0
        %3936 = vmatpush1.bf16.msra.mxu0 0
        %3937 = vmatprep.subr.bf16.mxu0 0
        %3938 = vmatpush1.bf16.msra.mxu0 0
        %3939 = vmatprep.subr.bf16.mxu0 0
        %3940 = vmatpush1.bf16.msra.mxu0 0
        %3941 = vmatprep.subr.bf16.mxu0 0
        %3942 = vmatpush1.bf16.msra.mxu0 0
        %3943 = vmatprep.subr.bf16.mxu0 0
        %3944 = vmatpush1.bf16.msra.mxu0 0
        %3945 = vmatprep.subr.bf16.mxu0 0
        %3946 = vmatpush1.bf16.msra.mxu0 0
        %3947 = vmatprep.subr.bf16.mxu0 0
        %3948 = vmatpush1.bf16.msra.mxu0 0
        %3949 = vmatprep.subr.bf16.mxu0 0
        %3950 = vmatpush1.bf16.msra.mxu0 %v3921
        %3951 = vmatprep.subr.bf16.mxu0 0
        %3952 = vmatpush2.bf16.msra.mxu0 0
        %3953 = vmatprep.subr.bf16.mxu0 0
        %3954 = vmatpush2.bf16.msra.mxu0 0
        %3955 = vmatprep.subr.bf16.mxu0 0
        %3956 = vmatpush2.bf16.msra.mxu0 0
        %3957 = vmatprep.subr.bf16.mxu0 0
        %3958 = vmatpush2.bf16.msra.mxu0 0
        %3959 = vmatprep.subr.bf16.mxu0 0
        %3960 = vmatpush2.bf16.msra.mxu0 0
        %3961 = vmatprep.subr.bf16.mxu0 0
        %3962 = vmatpush2.bf16.msra.mxu0 0
        %3963 = vmatprep.subr.bf16.mxu0 0
        %3964 = vmatpush2.bf16.msra.mxu0 0
        %3965 = vmatprep.subr.bf16.mxu0 0
        %3966 = vmatpush2.bf16.msra.mxu0 0
        %3967 = vmatprep.mubr.bf16.mxu0 0
        %3968 = vmatmul.mubr.bf16.gmra.mxu0 %v3924
        %v3969 = vpop.f32.mrf.mxu0
        %v3970 = vadd.f32 %v3915, %v3969
        %v3971 = vpop.f32.mrf.mxu0
        %v3972 = vpop.f32.mrf.mxu0
        %v3973 = vadd.f32 %v3915, %v3972
        %v3974 = vpop.f32.mrf.mxu0
        %3975 = vmatprep.mubr.bf16.mxu0 0
        %3976 = vmatmul.mubr.bf16.gmra.mxu0 %v3927
        %v3977 = vpop.f32.mrf.mxu0
        %v3978 = vadd.f32 %v3915, %v3977
        %v3979 = vpop.f32.mrf.mxu0
        %v3980 = vpop.f32.mrf.mxu0
        %v3981 = vadd.f32 %v3915, %v3980
        %v3982 = vpop.f32.mrf.mxu0
        %3983 = vmatprep.mubr.bf16.mxu0 0
        %3984 = vmatmul.mubr.bf16.gmra.mxu0 %v3930
        %v3985 = vpop.f32.mrf.mxu0
        %v3986 = vadd.f32 %v3915, %v3985
        %v3987 = vpop.f32.mrf.mxu0
        %v3988 = vpop.f32.mrf.mxu0
        %v3989 = vadd.f32 %v3915, %v3988
        %v3990 = vpop.f32.mrf.mxu0
        %3991 = vmatprep.mubr.bf16.mxu0 0
        %3992 = vmatmul.mubr.bf16.gmra.mxu0 %v3933
        %v3993 = vpop.f32.mrf.mxu0
        %v3994 = vadd.f32 %v3915, %v3993
        %v3995 = vpop.f32.mrf.mxu0
        %v3996 = vpop.f32.mrf.mxu0
        %v3997 = vadd.f32 %v3915, %v3996
        %v3998 = vpop.f32.mrf.mxu0
        %3999 = vdwg.mxu0
        %vm4000 = vcmp.ge.f32.partialorder %v3970, 0.0
        %vm4001 = vcmp.ge.f32.partialorder %v3973, 0.0
        %vm4002 = vcmp.ge.f32.partialorder %v3978, 0.0
        %vm4003 = vcmp.ge.f32.partialorder %v3981, 0.0
        %vm4004 = vcmp.ge.f32.partialorder %v3986, 0.0
        %vm4005 = vcmp.ge.f32.partialorder %v3989, 0.0
        %vm4006 = vcmp.ge.f32.partialorder %v3994, 0.0
        %vm4007 = vcmp.ge.f32.partialorder %v3997, 0.0
        %v4008 = vmul.f32 %v3970, 0.01
        %v4009 = vmul.f32 %v3973, 0.01
        %v4010 = vmul.f32 %v3978, 0.01
        %v4011 = vmul.f32 %v3981, 0.01
        %v4012 = vmul.f32 %v3986, 0.01
        %v4013 = vmul.f32 %v3989, 0.01
        %v4014 = vmul.f32 %v3994, 0.01
        %v4015 = vmul.f32 %v3997, 0.01
        %v4016 = vsel %vm4000, %v3970, %v4008
        %v4017 = vsel %vm4001, %v3973, %v4009
        %v4018 = vsel %vm4002, %v3978, %v4010
        %v4019 = vsel %vm4003, %v3981, %v4011
        %v4020 = vsel %vm4004, %v3986, %v4012
        %v4021 = vsel %vm4005, %v3989, %v4013
        %v4022 = vsel %vm4006, %v3994, %v4014
        %v4023 = vsel %vm4007, %v3997, %v4015
        %v4024 = vpack.c.bf16 %v4017, %v4016
        %v4025 = vpack.c.bf16 %v4019, %v4018
        %v4026 = vpack.c.bf16 %v4021, %v4020
        %v4027 = vpack.c.bf16 %v4023, %v4022
        %v4028 = vunpack.c.l.bf16 %v4024
        %v4029 = vunpack.c.h.bf16 %v4024
        %v4030 = vunpack.c.l.bf16 %v4025
        %v4031 = vunpack.c.h.bf16 %v4025
        %v4032 = vunpack.c.l.bf16 %v4026
        %v4033 = vunpack.c.h.bf16 %v4026
        %v4034 = vunpack.c.l.bf16 %v4027
        %v4035 = vunpack.c.h.bf16 %v4027
        %v4036 = vld [vmem:[%s71] sm:$0x1]
        %v4038 = vlaneseq
        %v4039 = vshrl.u32 %v4038, 7
        %v4040 = vsub.s32 0, %v4039
        %v4041 = vrot.slane %v4036, %v4040
        %v4043 = vmul.f32 %v4028, %v4041
        %v4044 = vmul.f32 %v4029, %v4041
        %v4045 = vmul.f32 %v4030, %v4041
        %v4046 = vmul.f32 %v4031, %v4041
        %v4047 = vmul.f32 %v4032, %v4041
        %v4048 = vmul.f32 %v4033, %v4041
        %v4049 = vmul.f32 %v4034, %v4041
        %v4050 = vmul.f32 %v4035, %v4041
        %v4051 = vsel %vm1400, %v4043, 0.0
        %4052 = vadd.xlane.f32.xlu0 %v4051
        %v4053 = vpop.xlane.xlu0 %4052
        %v4054 = vsel %vm1400, %v4044, 0.0
        %4055 = vadd.xlane.f32.xlu0 %v4054
        %v4056 = vpop.xlane.xlu0 %4055
        %v4057 = vsel %vm1400, %v4045, 0.0
        %4058 = vadd.xlane.f32.xlu0 %v4057
        %v4059 = vpop.xlane.xlu0 %4058
        %v4060 = vsel %vm1400, %v4046, 0.0
        %4061 = vadd.xlane.f32.xlu0 %v4060
        %v4062 = vpop.xlane.xlu0 %4061
        %v4063 = vsel %vm1400, %v4047, 0.0
        %4064 = vadd.xlane.f32.xlu0 %v4063
        %v4065 = vpop.xlane.xlu0 %4064
        %v4066 = vsel %vm1400, %v4048, 0.0
        %4067 = vadd.xlane.f32.xlu0 %v4066
        %v4068 = vpop.xlane.xlu0 %4067
        %v4069 = vsel %vm1400, %v4049, 0.0
        %4070 = vadd.xlane.f32.xlu0 %v4069
        %v4071 = vpop.xlane.xlu0 %4070
        %v4072 = vsel %vm1400, %v4050, 0.0
        %4073 = vadd.xlane.f32.xlu0 %v4072
        %v4074 = vpop.xlane.xlu0 %4073
        %v4075 = vld [vmem:[#allocation4] sm:$0x1]
        %v4077 = vlaneseq
        %v4078 = vshrl.u32 %v4077, 7
        %v4079 = vsub.s32 0, %v4078
        %v4080 = vrot.slane %v4075, %v4079
        %v4082 = vadd.f32 %v4053, %v4080
        %v4083 = vadd.f32 %v4056, %v4080
        %v4084 = vadd.f32 %v4059, %v4080
        %v4085 = vadd.f32 %v4062, %v4080
        %v4086 = vadd.f32 %v4065, %v4080
        %v4087 = vadd.f32 %v4068, %v4080
        %v4088 = vadd.f32 %v4071, %v4080
        %v4089 = vadd.f32 %v4074, %v4080
        %v4090 = vsub.f32 %v4082, 1e+08
        %v4091 = vsub.f32 %v4083, 1e+08
        %v4092 = vsub.f32 %v4084, 1e+08
        %v4093 = vsub.f32 %v4085, 1e+08
        %v4094 = vsub.f32 %v4086, 1e+08
        %v4095 = vsub.f32 %v4087, 1e+08
        %v4096 = vsub.f32 %v4088, 1e+08
        %v4097 = vsub.f32 %v4089, 1e+08
        %4106 = vset.pattern.permute.xlu0 0
        %4107 = vperm.xlu0 %4106, %v4090
        %v4108 = vpop.permute.xlu0 %4107
        %4109 = vset.pattern.permute.xlu0 0
        %4110 = vperm.xlu0 %4109, %v4091
        %v4111 = vpop.permute.xlu0 %4110
        %4112 = vset.pattern.permute.xlu0 0
        %4113 = vperm.xlu0 %4112, %v4092
        %v4114 = vpop.permute.xlu0 %4113
        %4115 = vset.pattern.permute.xlu0 0
        %4116 = vperm.xlu0 %4115, %v4093
        %v4117 = vpop.permute.xlu0 %4116
        %4118 = vset.pattern.permute.xlu0 0
        %4119 = vperm.xlu0 %4118, %v4094
        %v4120 = vpop.permute.xlu0 %4119
        %4121 = vset.pattern.permute.xlu0 0
        %4122 = vperm.xlu0 %4121, %v4095
        %v4123 = vpop.permute.xlu0 %4122
        %4124 = vset.pattern.permute.xlu0 0
        %4125 = vperm.xlu0 %4124, %v4096
        %v4126 = vpop.permute.xlu0 %4125
        %4127 = vset.pattern.permute.xlu0 0
        %4128 = vperm.xlu0 %4127, %v4097
        %v4129 = vpop.permute.xlu0 %4128
        %v4130 = vlaneseq
        %v4131 = vshrl.u32 %v4130, 7
        %v4132 = vsub.s32 %v1217, %v4131
        %v4133 = vrot.slane %v4108, %v4132
        %v4134 = vlaneseq
        %v4135 = vshrl.u32 %v4134, 7
        %v4136 = vsub.s32 %v1217, %v4135
        %v4137 = vrot.slane %v4111, %v4136
        %v4138 = vlaneseq
        %v4139 = vshrl.u32 %v4138, 7
        %v4140 = vsub.s32 %v1217, %v4139
        %v4141 = vrot.slane %v4114, %v4140
        %v4142 = vlaneseq
        %v4143 = vshrl.u32 %v4142, 7
        %v4144 = vsub.s32 %v1217, %v4143
        %v4145 = vrot.slane %v4117, %v4144
        %v4146 = vlaneseq
        %v4147 = vshrl.u32 %v4146, 7
        %v4148 = vsub.s32 %v1217, %v4147
        %v4149 = vrot.slane %v4120, %v4148
        %v4150 = vlaneseq
        %v4151 = vshrl.u32 %v4150, 7
        %v4152 = vsub.s32 %v1217, %v4151
        %v4153 = vrot.slane %v4123, %v4152
        %v4154 = vlaneseq
        %v4155 = vshrl.u32 %v4154, 7
        %v4156 = vsub.s32 %v1217, %v4155
        %v4157 = vrot.slane %v4126, %v4156
        %v4158 = vlaneseq
        %v4159 = vshrl.u32 %v4158, 7
        %v4160 = vsub.s32 %v1217, %v4159
        %v4161 = vrot.slane %v4129, %v4160
        %v4162 = vsel %vm2017, %v4137, %v4133
        %v4163 = vsel %vm2019, %v4141, %v4162
        %v4164 = vsel %vm2021, %v4145, %v4163
        %v4165 = vsel %vm2023, %v4149, %v4164
        %v4166 = vsel %vm2025, %v4153, %v4165
        %v4167 = vsel %vm2027, %v4157, %v4166
        %v4168 = vsel %vm2029, %v4161, %v4167
        %4178 = vset.pattern.permute.xlu0 0
        %4179 = vperm.xlu0 %4178, %v4082
        %v4180 = vpop.permute.xlu0 %4179
        %4181 = vset.pattern.permute.xlu0 0
        %4182 = vperm.xlu0 %4181, %v4083
        %v4183 = vpop.permute.xlu0 %4182
        %4184 = vset.pattern.permute.xlu0 0
        %4185 = vperm.xlu0 %4184, %v4084
        %v4186 = vpop.permute.xlu0 %4185
        %4187 = vset.pattern.permute.xlu0 0
        %4188 = vperm.xlu0 %4187, %v4085
        %v4189 = vpop.permute.xlu0 %4188
        %4190 = vset.pattern.permute.xlu0 0
        %4191 = vperm.xlu0 %4190, %v4086
        %v4192 = vpop.permute.xlu0 %4191
        %4193 = vset.pattern.permute.xlu0 0
        %4194 = vperm.xlu0 %4193, %v4087
        %v4195 = vpop.permute.xlu0 %4194
        %4196 = vset.pattern.permute.xlu0 0
        %4197 = vperm.xlu0 %4196, %v4088
        %v4198 = vpop.permute.xlu0 %4197
        %4199 = vset.pattern.permute.xlu0 0
        %4200 = vperm.xlu0 %4199, %v4089
        %v4201 = vpop.permute.xlu0 %4200
        %v4202 = vlaneseq
        %v4203 = vshrl.u32 %v4202, 7
        %v4204 = vsub.s32 %v1217, %v4203
        %v4205 = vrot.slane %v4180, %v4204
        %v4206 = vlaneseq
        %v4207 = vshrl.u32 %v4206, 7
        %v4208 = vsub.s32 %v1217, %v4207
        %v4209 = vrot.slane %v4183, %v4208
        %v4210 = vlaneseq
        %v4211 = vshrl.u32 %v4210, 7
        %v4212 = vsub.s32 %v1217, %v4211
        %v4213 = vrot.slane %v4186, %v4212
        %v4214 = vlaneseq
        %v4215 = vshrl.u32 %v4214, 7
        %v4216 = vsub.s32 %v1217, %v4215
        %v4217 = vrot.slane %v4189, %v4216
        %v4218 = vlaneseq
        %v4219 = vshrl.u32 %v4218, 7
        %v4220 = vsub.s32 %v1217, %v4219
        %v4221 = vrot.slane %v4192, %v4220
        %v4222 = vlaneseq
        %v4223 = vshrl.u32 %v4222, 7
        %v4224 = vsub.s32 %v1217, %v4223
        %v4225 = vrot.slane %v4195, %v4224
        %v4226 = vlaneseq
        %v4227 = vshrl.u32 %v4226, 7
        %v4228 = vsub.s32 %v1217, %v4227
        %v4229 = vrot.slane %v4198, %v4228
        %v4230 = vlaneseq
        %v4231 = vshrl.u32 %v4230, 7
        %v4232 = vsub.s32 %v1217, %v4231
        %v4233 = vrot.slane %v4201, %v4232
        %v4234 = vsel %vm2017, %v4209, %v4205
        %v4235 = vsel %vm2019, %v4213, %v4234
        %v4236 = vsel %vm2021, %v4217, %v4235
        %v4237 = vsel %vm2023, %v4221, %v4236
        %v4238 = vsel %vm2025, %v4225, %v4237
        %v4239 = vsel %vm2027, %v4229, %v4238
        %v4240 = vsel %vm2029, %v4233, %v4239
        %v4242 = vsel %vm1218, %v4168, %v4240
        %v4243 = vsel %vm2105, %v4242, -inf
        %4244 = vmax.xlane.f32.xlu0 %v4243
        %v4245 = vpop.xlane.xlu0 %4244
        %v4246 = vsub.f32 %v4242, %v4245
        %v4247 = vmul.f32 %v4246, 1.442695
        %v4248 = vpow.pop %v4247
        %v4249 = vsel %vm2105, %v4248, 0.0
        %4250 = vadd.xlane.f32.xlu0 %v4249
        %v4251 = vpop.xlane.xlu0 %4250
        %v4252 = vrcp.pop %v4251
        %v4253 = vmul.f32 %v4248, %v4252
        %v4254 = vpack.c.bf16 %v4253, %v4253
        %v4256 = vsel %vm2105, %v4254, 0
        %v4259 = vsel %vm2121, %v3358, 0
        %4261 = vmatprep.subr.bf16.mxu0 0
        %4262 = vmatpush1.bf16.msra.mxu0 0
        %4263 = vmatprep.subr.bf16.mxu0 0
        %4264 = vmatpush1.bf16.msra.mxu0 0
        %4265 = vmatprep.subr.bf16.mxu0 0
        %4266 = vmatpush1.bf16.msra.mxu0 0
        %4267 = vmatprep.subr.bf16.mxu0 0
        %4268 = vmatpush1.bf16.msra.mxu0 0
        %4269 = vmatprep.subr.bf16.mxu0 0
        %4270 = vmatpush1.bf16.msra.mxu0 0
        %4271 = vmatprep.subr.bf16.mxu0 0
        %4272 = vmatpush1.bf16.msra.mxu0 0
        %4273 = vmatprep.subr.bf16.mxu0 0
        %4274 = vmatpush1.bf16.msra.mxu0 0
        %4275 = vmatprep.subr.bf16.mxu0 0
        %4276 = vmatpush1.bf16.msra.mxu0 %v4259
        %4277 = vmatprep.subr.bf16.mxu0 0
        %4278 = vmatpush2.bf16.msra.mxu0 0
        %4279 = vmatprep.subr.bf16.mxu0 0
        %4280 = vmatpush2.bf16.msra.mxu0 0
        %4281 = vmatprep.subr.bf16.mxu0 0
        %4282 = vmatpush2.bf16.msra.mxu0 0
        %4283 = vmatprep.subr.bf16.mxu0 0
        %4284 = vmatpush2.bf16.msra.mxu0 0
        %4285 = vmatprep.subr.bf16.mxu0 0
        %4286 = vmatpush2.bf16.msra.mxu0 0
        %4287 = vmatprep.subr.bf16.mxu0 0
        %4288 = vmatpush2.bf16.msra.mxu0 0
        %4289 = vmatprep.subr.bf16.mxu0 0
        %4290 = vmatpush2.bf16.msra.mxu0 0
        %4291 = vmatprep.subr.bf16.mxu0 0
        %4292 = vmatpush2.bf16.msra.mxu0 0
        %4293 = vmatprep.mubr.bf16.mxu0 0
        %4294 = vmatmul.mubr.bf16.gmra.mxu0 %v4256
        %v4295 = vpop.f32.mrf.mxu0
        %v4296 = vadd.f32 0.0, %v4295
        %v4297 = vpop.f32.mrf.mxu0
        %v4298 = vpop.f32.mrf.mxu0
        %v4299 = vpop.f32.mrf.mxu0
        %4300 = vdwg.mxu0
        %v4301 = vld [vmem:[%s75] sm:$0xf]
        %v4302 = vld [vmem:[%s75 + $0x4] sm:$0xf]
        %v4303 = vld [vmem:[%s75 + $0x8] sm:$0xf]
        %v4304 = vld [vmem:[%s75 + $0xc] sm:$0xf]
        %v4305 = vpack.c.bf16 %v4296, %v4296
        %v4306 = vld [vmem:[%s77] sm:$0xf]
        %v4307 = vld [vmem:[%s77 + $0x4] sm:$0xf]
        %v4308 = vld [vmem:[%s77 + $0x8] sm:$0xf]
        %v4309 = vld [vmem:[%s77 + $0xc] sm:$0xf]
        %v4314 = vunpack.c.l.b16 %v4306
        %v4315 = vunpack.c.l.b16 %v4307
        %v4316 = vunpack.c.l.b16 %v4308
        %v4317 = vunpack.c.l.b16 %v4309
        %v4318 = vpack.c.b16 %v4315, %v4314
        %v4319 = vpack.c.b16 %v4317, %v4316
        %v4323 = vsel %vm1529, %v4305, 0
        %4325 = vmatprep.subr.bf16.mxu0 0
        %4326 = vmatpush1.bf16.msra.mxu0 0
        %4327 = vmatprep.subr.bf16.mxu0 0
        %4328 = vmatpush1.bf16.msra.mxu0 0
        %4329 = vmatprep.subr.bf16.mxu0 0
        %4330 = vmatpush1.bf16.msra.mxu0 0
        %4331 = vmatprep.subr.bf16.mxu0 0
        %4332 = vmatpush1.bf16.msra.mxu0 0
        %4333 = vmatprep.subr.bf16.mxu0 0
        %4334 = vmatpush1.bf16.msra.mxu0 0
        %4335 = vmatprep.subr.bf16.mxu0 0
        %4336 = vmatpush1.bf16.msra.mxu0 0
        %4337 = vmatprep.subr.bf16.mxu0 0
        %4338 = vmatpush1.bf16.msra.mxu0 %v4319
        %4339 = vmatprep.subr.bf16.mxu0 0
        %4340 = vmatpush1.bf16.msra.mxu0 %v4318
        %4341 = vmatprep.subr.bf16.mxu0 0
        %4342 = vmatpush2.bf16.msra.mxu0 0
        %4343 = vmatprep.subr.bf16.mxu0 0
        %4344 = vmatpush2.bf16.msra.mxu0 0
        %4345 = vmatprep.subr.bf16.mxu0 0
        %4346 = vmatpush2.bf16.msra.mxu0 0
        %4347 = vmatprep.subr.bf16.mxu0 0
        %4348 = vmatpush2.bf16.msra.mxu0 0
        %4349 = vmatprep.subr.bf16.mxu0 0
        %4350 = vmatpush2.bf16.msra.mxu0 0
        %4351 = vmatprep.subr.bf16.mxu0 0
        %4352 = vmatpush2.bf16.msra.mxu0 0
        %4353 = vmatprep.subr.bf16.mxu0 0
        %4354 = vmatpush2.bf16.msra.mxu0 0
        %4355 = vmatprep.subr.bf16.mxu0 0
        %4356 = vmatpush2.bf16.msra.mxu0 0
        %4357 = vmatprep.mubr.bf16.mxu0 0
        %4358 = vmatmul.mubr.bf16.gmra.mxu0 %v4323
        %v4359 = vpop.f32.mrf.mxu0
        %v4360 = vadd.f32 0.0, %v4359
        %v4361 = vpop.f32.mrf.mxu0
        %v4362 = vpop.f32.mrf.mxu0
        %v4363 = vpop.f32.mrf.mxu0
        %4364 = vdwg.mxu0
        %v4369 = vunpack.c.l.b16 %v4301
        %v4370 = vunpack.c.l.b16 %v4302
        %v4371 = vunpack.c.l.b16 %v4303
        %v4372 = vunpack.c.l.b16 %v4304
        %v4373 = vpack.c.b16 %v4370, %v4369
        %v4374 = vpack.c.b16 %v4372, %v4371
        %v4377 = vsel %vm1529, %v3358, 0
        %4379 = vmatprep.subr.bf16.mxu0 0
        %4380 = vmatpush1.bf16.msra.mxu0 0
        %4381 = vmatprep.subr.bf16.mxu0 0
        %4382 = vmatpush1.bf16.msra.mxu0 0
        %4383 = vmatprep.subr.bf16.mxu0 0
        %4384 = vmatpush1.bf16.msra.mxu0 0
        %4385 = vmatprep.subr.bf16.mxu0 0
        %4386 = vmatpush1.bf16.msra.mxu0 0
        %4387 = vmatprep.subr.bf16.mxu0 0
        %4388 = vmatpush1.bf16.msra.mxu0 0
        %4389 = vmatprep.subr.bf16.mxu0 0
        %4390 = vmatpush1.bf16.msra.mxu0 0
        %4391 = vmatprep.subr.bf16.mxu0 0
        %4392 = vmatpush1.bf16.msra.mxu0 %v4374
        %4393 = vmatprep.subr.bf16.mxu0 0
        %4394 = vmatpush1.bf16.msra.mxu0 %v4373
        %4395 = vmatprep.subr.bf16.mxu0 0
        %4396 = vmatpush2.bf16.msra.mxu0 0
        %4397 = vmatprep.subr.bf16.mxu0 0
        %4398 = vmatpush2.bf16.msra.mxu0 0
        %4399 = vmatprep.subr.bf16.mxu0 0
        %4400 = vmatpush2.bf16.msra.mxu0 0
        %4401 = vmatprep.subr.bf16.mxu0 0
        %4402 = vmatpush2.bf16.msra.mxu0 0
        %4403 = vmatprep.subr.bf16.mxu0 0
        %4404 = vmatpush2.bf16.msra.mxu0 0
        %4405 = vmatprep.subr.bf16.mxu0 0
        %4406 = vmatpush2.bf16.msra.mxu0 0
        %4407 = vmatprep.subr.bf16.mxu0 0
        %4408 = vmatpush2.bf16.msra.mxu0 0
        %4409 = vmatprep.subr.bf16.mxu0 0
        %4410 = vmatpush2.bf16.msra.mxu0 0
        %4411 = vmatprep.mubr.bf16.mxu0 0
        %4412 = vmatmul.mubr.bf16.gmra.mxu0 %v4377
        %v4413 = vpop.f32.mrf.mxu0
        %v4414 = vadd.f32 %v4360, %v4413
        %v4415 = vpop.f32.mrf.mxu0
        %v4416 = vpop.f32.mrf.mxu0
        %v4417 = vpop.f32.mrf.mxu0
        %4418 = vdwg.mxu0
        %v4419 = vld [vmem:[%s79] sm:$0x1]
        %v4421 = vlaneseq
        %v4422 = vshrl.u32 %v4421, 7
        %v4423 = vsub.s32 0, %v4422
        %v4424 = vrot.slane %v4419, %v4423
        %v4426 = vadd.f32 %v4414, %v4424
        %4427 = vst.msk [vmem:[%s1207] sm:$0xff] %vm1400, %v4426
        %s4428 = sand.u32 %s954, 1
        %s4429 = scalar_lea.sflag [#allocation6], %s4428
        %s4430 = sand.u32 %s954, 1
        %s4431 = smul.addr %s4430, 8
        %s4432 = scalar_lea.vmem [#allocation5], %s4431
        // Predicated region
        $region181: #{gnn_nl_forward.1} parent=179 // pred_check
          %p4433 = pneg %p964
        $region182: #{gnn_nl_forward.1} parent=179 // pred_check_branch
          %4435 = sbr.rel (%p4433) target = $region184
        $region183: #{gnn_nl_forward.1} parent=179 // pred_region
          %s4437 = ssub.s32 128, 128
          %4438 = vsyncadd %s4429, %s4437
          %s4439 = smul.addr %s101, 128
          %s4440 = scalar_lea.hbm %s81, %s4439
          %s4442 = sshll.u32 %s4432, 4
          %s4443 = int_to_ptr.vmem [resolvable:$true] %s4442
          %4445 = dma.vmem_to_hbm [thread:$0]  %s4443, 128, %s4440, %s4429
        $region184: #{gnn_nl_forward.1} parent=179 // pred_fallthru
          _
      $region180: #{gnn_nl_forward.1} parent=5 // pred_fallthru
        _
      %p4446 = scmp.le.s32.totalorder 2, %s96
      // Predicated region
      $region185: #{gnn_nl_forward.1} parent=5 // pred_check
        %p4447 = pneg %p4446
      $region186: #{gnn_nl_forward.1} parent=5 // pred_check_branch
        %4449 = sbr.rel (%p4447) target = $region188
      $region187: #{gnn_nl_forward.1} parent=5 // pred_region
        %s4450 = ssub.s32 %s96, 2
        // Predicated region
        $region189: #{gnn_nl_forward.1} parent=187 // pred_check
          %p4451 = pneg %p970
        $region190: #{gnn_nl_forward.1} parent=187 // pred_check_branch
          %4453 = sbr.rel (%p4451) target = $region192
        $region191: #{gnn_nl_forward.1} parent=187 // pred_region
          %s4454 = sand.u32 %s955, 1
          %s4455 = scalar_lea.sflag [#allocation6], %s4454
          %s4456 = sand.u32 %s955, 1
          %s4457 = smul.addr %s4456, 8
          %s4458 = scalar_lea.vmem [#allocation5], %s4457
          %4459 = dma.done %s4455, 128
        $region192: #{gnn_nl_forward.1} parent=187 // pred_fallthru
          _
      $region188: #{gnn_nl_forward.1} parent=5 // pred_fallthru
        _
    $region6: #{gnn_nl_forward.1} parent=1 // loop_footer
      %s100 = sadd.s32 1, %s96
    $region7: #{gnn_nl_forward.1} parent=1 // loop_footer_branch
      %95 = sbr.rel target = $region3
    $region8: #{gnn_nl_forward.1} parent=1 // loop_exit
      _
    %4460 = vsyncpa [#allocation6], 1
    %s4461 = scalar_lea.sflag [#allocation6], 1
    %4462 = vsyncpa %s4461, 1

</llo_original>
